<compile_context>
chip_gen: v7x
topology: tpu7x:2x2x1
jax: 0.10.0
libtpu: 0.0.40
codegen_flags: <defaults>
</compile_context>

<pallas_src>
import math
from functools import partial

import jax
import jax.numpy as jnp
from jax import lax
from jax.experimental import pallas as pl
from jax.experimental.pallas import tpu as pltpu

_SQRT2_INV = 1.0 / math.sqrt(2.0)
# Abramowitz & Stegun 7.1.26 erf polynomial (|err| < 1.5e-7, f32 round-off level).
_ERF_P = 0.3275911
_ERF_A1 = 0.254829592
_ERF_A2 = -0.284496736
_ERF_A3 = 1.421413741
_ERF_A4 = -1.453152027
_ERF_A5 = 1.061405429


def _gelu(x):
    # exact (erf-based) GELU matching torch.nn.GELU(approximate='none') to ~1e-7.
    # The 1/(1+p*a) divide is an EUP approx reciprocal + one Newton step.
    a = jnp.abs(x) * _SQRT2_INV
    den = 1.0 + _ERF_P * a
    t = pl.reciprocal(den, approx=True)
    t = t * (2.0 - den * t)  # Newton refine -> full f32 accuracy
    poly = t * (_ERF_A1 + t * (_ERF_A2 + t * (_ERF_A3 + t * (_ERF_A4 + t * _ERF_A5))))
    erf_a = 1.0 - poly * jnp.exp(-a * a)
    erf_x = jnp.where(x < 0.0, -erf_a, erf_a)
    return 0.5 * x * (1.0 + erf_x)


def _conv3d_up_kernel(x_ref, w1b_ref, w2b_ref, red_ref, redt_ref,
                      o_act_ref, o_crow_ref, *,
                      n_total, n_const_rows, eps, out_dtype):
    # x_ref:   (1, ROWS, G*W*Cin) bf16   ROWS = D*H/G, lanes = g*(W*Cin) + w*Cin + ci
    # w1b_ref: (G*W*Cin, G*W*Co)  bf16   block-diag banded transposed-conv weights
    # w2b_ref: (G*W*Co,  G*W*Co)  bf16   block-diag banded conv weights
    # red_ref: (G*W*Co, Co) f32   0/1 matrix: fused lanes -> per-channel sums
    # redt:    (Co, G*W*Co) f32   0/1 matrix: per-channel -> fused-lane broadcast
    x = x_ref[0]
    rows = x.shape[0]
    red = red_ref[...]
    redt = redt_ref[...]
    inv_n = 1.0 / float(n_total)
    ones = jnp.ones((1, rows), jnp.float32)

    # ---- stage 1: ConvTranspose3d (bias cancelled by the following InstanceNorm).
    u0 = jnp.dot(x, w1b_ref[...], preferred_element_type=jnp.float32)   # (ROWS, GWCo) f32

    # InstanceNorm stats over the full (2D,2H,W) volume; constant (odd-parity)
    # positions are exactly the dropped bias -> contribute 0 to centered sums.
    lane_s1 = jnp.dot(ones, u0, preferred_element_type=jnp.float32)          # (1, GWCo)
    lane_q1 = jnp.dot(ones, u0 * u0, preferred_element_type=jnp.float32)     # (1, GWCo)
    m1 = jnp.dot(lane_s1, red, preferred_element_type=jnp.float32) * inv_n   # (1, Co)
    q1 = jnp.dot(lane_q1, red, preferred_element_type=jnp.float32) * inv_n
    var1 = jnp.maximum(q1 - m1 * m1, 0.0)
    rs1 = lax.rsqrt(var1 + eps)

    m1_d = jnp.dot(m1, redt, preferred_element_type=jnp.float32)    # (1, GWCo) lane bcast
    rs1_d = jnp.dot(rs1, redt, preferred_element_type=jnp.float32)
    y = _gelu((u0 - m1_d) * rs1_d)                                   # (ROWS, GWCo) active
    yc_d = _gelu(-m1_d * rs1_d)                                      # (1, GWCo) constant rows

    # ---- stage 2: Conv3d k=(1,1,3) -> InstanceNorm -> GELU, + identity residual.
    v0 = jnp.dot(y.astype(jnp.bfloat16), w2b_ref[...],
                 preferred_element_type=jnp.float32)                 # (ROWS, GWCo)
    vc0 = jnp.dot(yc_d.astype(jnp.bfloat16), w2b_ref[...],
                  preferred_element_type=jnp.float32)                # (1, GWCo)

    lane_s2 = jnp.dot(ones, v0, preferred_element_type=jnp.float32) + n_const_rows * vc0
    lane_q2 = (jnp.dot(ones, v0 * v0, preferred_element_type=jnp.float32)
               + n_const_rows * (vc0 * vc0))
    m2 = jnp.dot(lane_s2, red, preferred_element_type=jnp.float32) * inv_n
    q2 = jnp.dot(lane_q2, red, preferred_element_type=jnp.float32) * inv_n
    var2 = jnp.maximum(q2 - m2 * m2, 0.0)
    rs2 = lax.rsqrt(var2 + eps)

    m2_d = jnp.dot(m2, redt, preferred_element_type=jnp.float32)
    rs2_d = jnp.dot(rs2, redt, preferred_element_type=jnp.float32)

    # Compressed output: only the even-d/even-h plane plus ONE constant row.
    o_act_ref[0] = (_gelu((v0 - m2_d) * rs2_d) + y).astype(out_dtype)
    o_crow_ref[0] = (_gelu((vc0 - m2_d) * rs2_d) + yc_d).astype(out_dtype)


def _band_matrix(taps, w):
    # taps: (3, Cin, Cout).  Returns B of shape (W*Cin, W*Cout) with
    #   B[wi*Cin+ci, wo*Cout+co] = taps[wo-wi+1, ci, co]  if |wo-wi| <= 1 else 0
    # so a 3-tap conv along W (with zero padding) becomes a single matmul.
    _, cin, cout = taps.shape
    wi = jnp.arange(w)[:, None]
    wo = jnp.arange(w)[None, :]
    k = wo - wi + 1
    valid = (k >= 0) & (k <= 2)
    blocks = jnp.where(valid[:, :, None, None], taps[jnp.clip(k, 0, 2)], 0.0)  # (W,W,Cin,Cout)
    return jnp.transpose(blocks, (0, 2, 1, 3)).reshape(w * cin, w * cout)


def conv3d_up_forward(x_ncdhw, wt, bt, w2, b2, *, eps=1e-5, out_dtype=jnp.float32):
    # bt / b2 accepted for parameter parity with the PyTorch module; both conv biases
    # are mathematically cancelled by the InstanceNorm(affine=False) that immediately
    # follows each conv, so they are not used in the compute (exact, not approximate).
    del bt, b2
    n, ci, d, h, w = x_ncdhw.shape
    co = wt.shape[1]
    wco = w * co

    # Row-group factor: fold G consecutive (d,h) rows onto the lane axis so the
    # compute/store lane width G*W*Co is a multiple of 128 (dense stores, full vregs).
    g = 128 // math.gcd(wco, 128)
    if (d * h) % g != 0:
        g = 1                                   # fallback: still correct, lane-masked
    rows = (d * h) // g
    gwci = g * w * ci
    gwco = g * w * co

    # channels-last; W and C fused on the lane axis; G rows folded per lane group.
    x_flat = jnp.transpose(x_ncdhw, (0, 2, 3, 4, 1)).reshape(n, rows, gwci)
    x_bf16 = x_flat.astype(jnp.bfloat16)        # MXU operand; accumulation stays f32

    # Fold the 3 W-taps (+ zero padding) into banded weight matrices, then
    # block-diagonalize over the folded row groups (the conv never mixes rows).
    #  - transposed conv: weight used for input wi -> output wo is Wt[..., wo-wi+1]
    taps1 = jnp.transpose(wt[:, :, 0, 0, :], (2, 0, 1)).astype(jnp.float32)      # (3,Cin,Co)
    #  - regular conv (cross-correlation): weight for wi -> wo is W2[..., wi-wo+1]
    taps2 = jnp.transpose(w2[:, :, 0, 0, ::-1], (2, 1, 0)).astype(jnp.float32)   # (3,Co,Co)
    eye_g = jnp.eye(g, dtype=jnp.float32)
    w1b = jnp.kron(eye_g, _band_matrix(taps1, w)).astype(jnp.bfloat16)  # (GWCin, GWCo)
    w2b = jnp.kron(eye_g, _band_matrix(taps2, w)).astype(jnp.bfloat16)  # (GWCo,  GWCo)

    # 0/1 matrices: `red` reduces fused lanes -> per-channel sums, `redt` broadcasts
    # per-channel stats -> fused lanes; both run on the (otherwise idle) MXU.
    red = jnp.tile(jnp.eye(co, dtype=jnp.float32), (g * w, 1))          # (GWCo, Co)
    redt = jnp.transpose(red)                                           # (Co, GWCo)

    kern = partial(_conv3d_up_kernel,
                   n_total=float(4 * d * h * w),          # positions per channel
                   n_const_rows=float(3 * d * h) / float(g),
                   eps=eps, out_dtype=out_dtype)

    out_act, out_crow = pl.pallas_call(
        kern,
        out_shape=(jax.ShapeDtypeStruct((n, rows, gwco), out_dtype),
                   jax.ShapeDtypeStruct((n, 1, gwco), out_dtype)),
        grid_spec=pltpu.PrefetchScalarGridSpec(
            num_scalar_prefetch=0,
            grid=(n,),
            in_specs=[
                pl.BlockSpec((1, rows, gwci), lambda b: (b, 0, 0)),
                pl.BlockSpec((gwci, gwco), lambda b: (0, 0)),
                pl.BlockSpec((gwco, gwco), lambda b: (0, 0)),
                pl.BlockSpec((gwco, co), lambda b: (0, 0)),
                pl.BlockSpec((co, gwco), lambda b: (0, 0)),
            ],
            out_specs=[
                pl.BlockSpec((1, rows, gwco), lambda b: (b, 0, 0)),
                pl.BlockSpec((1, 1, gwco), lambda b: (b, 0, 0)),
            ],
        ),
        compiler_params=pltpu.CompilerParams(
            dimension_semantics=("parallel",),
        ),
    )(x_bf16, w1b, w2b, red, redt)

    # Reconstruct NCDHW in XLA: only the even-d/even-h plane was computed; the other
    # 3 parity planes are the broadcast constant row (kernel wrote 1/4 of the volume).
    act = out_act.reshape(n, d, h, w, co)
    crow = out_crow.reshape(n, g, w, co)[:, 0]                          # (n, W, Co)
    crow_b = jnp.broadcast_to(crow[:, None, None], (n, d, h, w, co))
    pd0 = jnp.stack([act, crow_b], axis=3)                              # (n,d,h,ph,w,co)
    pd1 = jnp.stack([crow_b, crow_b], axis=3)
    full = jnp.stack([pd0, pd1], axis=2)                                # (n,d,pd,h,ph,w,co)
    out = jnp.transpose(full, (0, 6, 1, 2, 3, 4, 5))                    # (n,co,d,pd,h,ph,w)
    return out.reshape(n, co, 2 * d, 2 * h, w)


def init_params(key, in_size, out_size):
    # Deterministic synthetic params (PyTorch-like uniform fan-in init; not a checkpoint).
    k1, k2, k3, k4 = jax.random.split(key, 4)
    bnd_t = 1.0 / math.sqrt(in_size * 3)
    wt = jax.random.uniform(k1, (in_size, out_size, 1, 1, 3), jnp.float32, -bnd_t, bnd_t)
    bt = jax.random.uniform(k2, (out_size,), jnp.float32, -bnd_t, bnd_t)
    bnd_2 = 1.0 / math.sqrt(out_size * 3)
    w2 = jax.random.uniform(k3, (out_size, out_size, 1, 1, 3), jnp.float32, -bnd_2, bnd_2)
    b2 = jax.random.uniform(k4, (out_size,), jnp.float32, -bnd_2, bnd_2)
    return dict(wt=wt, bt=bt, w2=w2, b2=b2)


if __name__ == "__main__":
    key = jax.random.PRNGKey(0)
    kx, kp = jax.random.split(key)

    N, Cin, Cout, D, H, W = 2, 4, 8, 8, 8, 8
    x = jax.random.normal(kx, (N, Cin, D, H, W), jnp.float32)   # PyTorch NCDHW
    p = init_params(kp, Cin, Cout)

    fwd = jax.jit(conv3d_up_forward)
    out = jax.block_until_ready(fwd(x, p["wt"], p["bt"], p["w2"], p["b2"]))

    assert out.shape == (N, Cout, 2 * D, 2 * H, W), out.shape
    assert bool(jnp.all(jnp.isfinite(out)))
    print("KERNEL_OK")
</pallas_src>

<mosaic_0001>
module attributes {stable_mosaic.version = 11 : i64} {
  func.func @_conv3d_up_kernel(%arg0: i32, %arg1: memref<1x32x64xbf16, #tpu.memory_space<vmem>>, %arg2: memref<64x128xbf16, #tpu.memory_space<vmem>>, %arg3: memref<128x128xbf16, #tpu.memory_space<vmem>>, %arg4: memref<128x8xf32, #tpu.memory_space<vmem>>, %arg5: memref<8x128xf32, #tpu.memory_space<vmem>>, %arg6: memref<1x32x128xf32, #tpu.memory_space<vmem>>, %arg7: memref<1x1x128xf32, #tpu.memory_space<vmem>>) attributes {dimension_semantics = [#tpu.dimension_semantics<parallel>], iteration_bounds = array<i64: 2>, scalar_prefetch = 0 : i64, scratch_operands = 0 : i64, tpu.core_type = #tpu.core_type<tc>, window_params = [{transform_indices = @transform_0, window_bounds = array<i64: 1, 32, 64>}, {pipeline_mode = #tpu.pipeline_mode<synchronous>, transform_indices = @transform_1, window_bounds = array<i64: 64, 128>}, {pipeline_mode = #tpu.pipeline_mode<synchronous>, transform_indices = @transform_2, window_bounds = array<i64: 128, 128>}, {pipeline_mode = #tpu.pipeline_mode<synchronous>, transform_indices = @transform_3, window_bounds = array<i64: 128, 8>}, {pipeline_mode = #tpu.pipeline_mode<synchronous>, transform_indices = @transform_4, window_bounds = array<i64: 8, 128>}, {transform_indices = @transform_5, window_bounds = array<i64: 1, 32, 128>}, {transform_indices = @transform_6, window_bounds = array<i64: 1, 1, 128>}]} {
    %c0 = arith.constant 0 : index
    %c0_0 = arith.constant 0 : index
    %c0_1 = arith.constant 0 : index
    %0 = vector.load %arg1[%c0, %c0_0, %c0_1] : memref<1x32x64xbf16, #tpu.memory_space<vmem>>, vector<1x32x64xbf16>
    %1 = vector.shape_cast %0 : vector<1x32x64xbf16> to vector<32x64xbf16>
    %c0_2 = arith.constant 0 : index
    %c0_3 = arith.constant 0 : index
    %2 = vector.load %arg4[%c0_2, %c0_3] : memref<128x8xf32, #tpu.memory_space<vmem>>, vector<128x8xf32>
    %c0_4 = arith.constant 0 : index
    %c0_5 = arith.constant 0 : index
    %3 = vector.load %arg5[%c0_4, %c0_5] : memref<8x128xf32, #tpu.memory_space<vmem>>, vector<8x128xf32>
    %cst = arith.constant 1.000000e+00 : f32
    %4 = vector.broadcast %cst : f32 to vector<1x32xf32>
    %c0_6 = arith.constant 0 : index
    %c0_7 = arith.constant 0 : index
    %5 = vector.load %arg2[%c0_6, %c0_7] : memref<64x128xbf16, #tpu.memory_space<vmem>>, vector<64x128xbf16>
    %cst_8 = arith.constant dense<0.000000e+00> : vector<32x128xf32>
    %6 = tpu.matmul %1, %5, %cst_8 {dimension_numbers = #tpu.dot_dimension_numbers<[1], [0], [0], [1], [0, 0, 1, 1], [], []>} : vector<32x64xbf16>, vector<64x128xbf16>, vector<32x128xf32> -> vector<32x128xf32>
    %cst_9 = arith.constant dense<0.000000e+00> : vector<1x128xf32>
    %7 = tpu.matmul %4, %6, %cst_9 {dimension_numbers = #tpu.dot_dimension_numbers<[1], [0], [0], [1], [0, 0, 1, 1], [], []>} : vector<1x32xf32>, vector<32x128xf32>, vector<1x128xf32> -> vector<1x128xf32>
    %8 = arith.mulf %6, %6 : vector<32x128xf32>
    %cst_10 = arith.constant dense<0.000000e+00> : vector<1x128xf32>
    %9 = tpu.matmul %4, %8, %cst_10 {dimension_numbers = #tpu.dot_dimension_numbers<[1], [0], [0], [1], [0, 0, 1, 1], [], []>} : vector<1x32xf32>, vector<32x128xf32>, vector<1x128xf32> -> vector<1x128xf32>
    %cst_11 = arith.constant dense<0.000000e+00> : vector<1x8xf32>
    %10 = tpu.matmul %7, %2, %cst_11 {dimension_numbers = #tpu.dot_dimension_numbers<[1], [0], [0], [1], [0, 0, 1, 1], [], []>} : vector<1x128xf32>, vector<128x8xf32>, vector<1x8xf32> -> vector<1x8xf32>
    %cst_12 = arith.constant 4.8828125E-4 : f32
    %11 = vector.broadcast %cst_12 : f32 to vector<1x8xf32>
    %12 = arith.mulf %10, %11 : vector<1x8xf32>
    %cst_13 = arith.constant dense<0.000000e+00> : vector<1x8xf32>
    %13 = tpu.matmul %9, %2, %cst_13 {dimension_numbers = #tpu.dot_dimension_numbers<[1], [0], [0], [1], [0, 0, 1, 1], [], []>} : vector<1x128xf32>, vector<128x8xf32>, vector<1x8xf32> -> vector<1x8xf32>
    %cst_14 = arith.constant 4.8828125E-4 : f32
    %14 = vector.broadcast %cst_14 : f32 to vector<1x8xf32>
    %15 = arith.mulf %13, %14 : vector<1x8xf32>
    %16 = arith.mulf %12, %12 : vector<1x8xf32>
    %17 = arith.subf %15, %16 : vector<1x8xf32>
    %cst_15 = arith.constant 0.000000e+00 : f32
    %18 = vector.broadcast %cst_15 : f32 to vector<1x8xf32>
    %19 = arith.maximumf %17, %18 : vector<1x8xf32>
    %cst_16 = arith.constant 9.99999974E-6 : f32
    %20 = vector.broadcast %cst_16 : f32 to vector<1x8xf32>
    %21 = arith.addf %19, %20 : vector<1x8xf32>
    %22 = math.rsqrt %21 : vector<1x8xf32>
    %cst_17 = arith.constant dense<0.000000e+00> : vector<1x128xf32>
    %23 = tpu.matmul %12, %3, %cst_17 {dimension_numbers = #tpu.dot_dimension_numbers<[1], [0], [0], [1], [0, 0, 1, 1], [], []>} : vector<1x8xf32>, vector<8x128xf32>, vector<1x128xf32> -> vector<1x128xf32>
    %cst_18 = arith.constant dense<0.000000e+00> : vector<1x128xf32>
    %24 = tpu.matmul %22, %3, %cst_18 {dimension_numbers = #tpu.dot_dimension_numbers<[1], [0], [0], [1], [0, 0, 1, 1], [], []>} : vector<1x8xf32>, vector<8x128xf32>, vector<1x128xf32> -> vector<1x128xf32>
    %25 = vector.broadcast %23 : vector<1x128xf32> to vector<32x128xf32>
    %26 = arith.subf %6, %25 : vector<32x128xf32>
    %27 = vector.broadcast %24 : vector<1x128xf32> to vector<32x128xf32>
    %28 = arith.mulf %26, %27 : vector<32x128xf32>
    %29 = math.absf %28 : vector<32x128xf32>
    %cst_19 = arith.constant 0.707106769 : f32
    %30 = vector.broadcast %cst_19 : f32 to vector<32x128xf32>
    %31 = arith.mulf %29, %30 : vector<32x128xf32>
    %cst_20 = arith.constant 0.327591091 : f32
    %32 = vector.broadcast %cst_20 : f32 to vector<32x128xf32>
    %33 = arith.mulf %32, %31 : vector<32x128xf32>
    %cst_21 = arith.constant 1.000000e+00 : f32
    %34 = vector.broadcast %cst_21 : f32 to vector<32x128xf32>
    %35 = arith.addf %34, %33 : vector<32x128xf32>
    %36 = tpu.reciprocal %35 {approx = true} : vector<32x128xf32> -> vector<32x128xf32>
    %37 = arith.mulf %35, %36 : vector<32x128xf32>
    %cst_22 = arith.constant 2.000000e+00 : f32
    %38 = vector.broadcast %cst_22 : f32 to vector<32x128xf32>
    %39 = arith.subf %38, %37 : vector<32x128xf32>
    %40 = arith.mulf %36, %39 : vector<32x128xf32>
    %cst_23 = arith.constant 1.06140542 : f32
    %41 = vector.broadcast %cst_23 : f32 to vector<32x128xf32>
    %42 = arith.mulf %40, %41 : vector<32x128xf32>
    %cst_24 = arith.constant -1.45315206 : f32
    %43 = vector.broadcast %cst_24 : f32 to vector<32x128xf32>
    %44 = arith.addf %43, %42 : vector<32x128xf32>
    %45 = arith.mulf %40, %44 : vector<32x128xf32>
    %cst_25 = arith.constant 1.42141378 : f32
    %46 = vector.broadcast %cst_25 : f32 to vector<32x128xf32>
    %47 = arith.addf %46, %45 : vector<32x128xf32>
    %48 = arith.mulf %40, %47 : vector<32x128xf32>
    %cst_26 = arith.constant -0.284496725 : f32
    %49 = vector.broadcast %cst_26 : f32 to vector<32x128xf32>
    %50 = arith.addf %49, %48 : vector<32x128xf32>
    %51 = arith.mulf %40, %50 : vector<32x128xf32>
    %cst_27 = arith.constant 0.254829586 : f32
    %52 = vector.broadcast %cst_27 : f32 to vector<32x128xf32>
    %53 = arith.addf %52, %51 : vector<32x128xf32>
    %54 = arith.mulf %40, %53 : vector<32x128xf32>
    %cst_28 = arith.constant 0.000000e+00 : f32
    %55 = vector.broadcast %cst_28 : f32 to vector<32x128xf32>
    %56 = arith.subf %55, %31 : vector<32x128xf32>
    %57 = arith.mulf %56, %31 : vector<32x128xf32>
    %58 = math.exp %57 : vector<32x128xf32>
    %59 = arith.mulf %54, %58 : vector<32x128xf32>
    %cst_29 = arith.constant 1.000000e+00 : f32
    %60 = vector.broadcast %cst_29 : f32 to vector<32x128xf32>
    %61 = arith.subf %60, %59 : vector<32x128xf32>
    %cst_30 = arith.constant 0.000000e+00 : f32
    %62 = vector.broadcast %cst_30 : f32 to vector<32x128xf32>
    %63 = arith.cmpf olt, %28, %62 : vector<32x128xf32>
    %cst_31 = arith.constant 0.000000e+00 : f32
    %64 = vector.broadcast %cst_31 : f32 to vector<32x128xf32>
    %65 = arith.subf %64, %61 : vector<32x128xf32>
    %66 = arith.select %63, %65, %61 : vector<32x128xi1>, vector<32x128xf32>
    %cst_32 = arith.constant 5.000000e-01 : f32
    %67 = vector.broadcast %cst_32 : f32 to vector<32x128xf32>
    %68 = arith.mulf %67, %28 : vector<32x128xf32>
    %cst_33 = arith.constant 1.000000e+00 : f32
    %69 = vector.broadcast %cst_33 : f32 to vector<32x128xf32>
    %70 = arith.addf %69, %66 : vector<32x128xf32>
    %71 = arith.mulf %68, %70 : vector<32x128xf32>
    %cst_34 = arith.constant 0.000000e+00 : f32
    %72 = vector.broadcast %cst_34 : f32 to vector<1x128xf32>
    %73 = arith.subf %72, %23 : vector<1x128xf32>
    %74 = arith.mulf %73, %24 : vector<1x128xf32>
    %75 = math.absf %74 : vector<1x128xf32>
    %cst_35 = arith.constant 0.707106769 : f32
    %76 = vector.broadcast %cst_35 : f32 to vector<1x128xf32>
    %77 = arith.mulf %75, %76 : vector<1x128xf32>
    %cst_36 = arith.constant 0.327591091 : f32
    %78 = vector.broadcast %cst_36 : f32 to vector<1x128xf32>
    %79 = arith.mulf %78, %77 : vector<1x128xf32>
    %cst_37 = arith.constant 1.000000e+00 : f32
    %80 = vector.broadcast %cst_37 : f32 to vector<1x128xf32>
    %81 = arith.addf %80, %79 : vector<1x128xf32>
    %82 = tpu.reciprocal %81 {approx = true} : vector<1x128xf32> -> vector<1x128xf32>
    %83 = arith.mulf %81, %82 : vector<1x128xf32>
    %cst_38 = arith.constant 2.000000e+00 : f32
    %84 = vector.broadcast %cst_38 : f32 to vector<1x128xf32>
    %85 = arith.subf %84, %83 : vector<1x128xf32>
    %86 = arith.mulf %82, %85 : vector<1x128xf32>
    %cst_39 = arith.constant 1.06140542 : f32
    %87 = vector.broadcast %cst_39 : f32 to vector<1x128xf32>
    %88 = arith.mulf %86, %87 : vector<1x128xf32>
    %cst_40 = arith.constant -1.45315206 : f32
    %89 = vector.broadcast %cst_40 : f32 to vector<1x128xf32>
    %90 = arith.addf %89, %88 : vector<1x128xf32>
    %91 = arith.mulf %86, %90 : vector<1x128xf32>
    %cst_41 = arith.constant 1.42141378 : f32
    %92 = vector.broadcast %cst_41 : f32 to vector<1x128xf32>
    %93 = arith.addf %92, %91 : vector<1x128xf32>
    %94 = arith.mulf %86, %93 : vector<1x128xf32>
    %cst_42 = arith.constant -0.284496725 : f32
    %95 = vector.broadcast %cst_42 : f32 to vector<1x128xf32>
    %96 = arith.addf %95, %94 : vector<1x128xf32>
    %97 = arith.mulf %86, %96 : vector<1x128xf32>
    %cst_43 = arith.constant 0.254829586 : f32
    %98 = vector.broadcast %cst_43 : f32 to vector<1x128xf32>
    %99 = arith.addf %98, %97 : vector<1x128xf32>
    %100 = arith.mulf %86, %99 : vector<1x128xf32>
    %cst_44 = arith.constant 0.000000e+00 : f32
    %101 = vector.broadcast %cst_44 : f32 to vector<1x128xf32>
    %102 = arith.subf %101, %77 : vector<1x128xf32>
    %103 = arith.mulf %102, %77 : vector<1x128xf32>
    %104 = math.exp %103 : vector<1x128xf32>
    %105 = arith.mulf %100, %104 : vector<1x128xf32>
    %cst_45 = arith.constant 1.000000e+00 : f32
    %106 = vector.broadcast %cst_45 : f32 to vector<1x128xf32>
    %107 = arith.subf %106, %105 : vector<1x128xf32>
    %cst_46 = arith.constant 0.000000e+00 : f32
    %108 = vector.broadcast %cst_46 : f32 to vector<1x128xf32>
    %109 = arith.cmpf olt, %74, %108 : vector<1x128xf32>
    %cst_47 = arith.constant 0.000000e+00 : f32
    %110 = vector.broadcast %cst_47 : f32 to vector<1x128xf32>
    %111 = arith.subf %110, %107 : vector<1x128xf32>
    %112 = arith.select %109, %111, %107 : vector<1x128xi1>, vector<1x128xf32>
    %cst_48 = arith.constant 5.000000e-01 : f32
    %113 = vector.broadcast %cst_48 : f32 to vector<1x128xf32>
    %114 = arith.mulf %113, %74 : vector<1x128xf32>
    %cst_49 = arith.constant 1.000000e+00 : f32
    %115 = vector.broadcast %cst_49 : f32 to vector<1x128xf32>
    %116 = arith.addf %115, %112 : vector<1x128xf32>
    %117 = arith.mulf %114, %116 : vector<1x128xf32>
    %118 = arith.truncf %71 : vector<32x128xf32> to vector<32x128xbf16>
    %c0_50 = arith.constant 0 : index
    %c0_51 = arith.constant 0 : index
    %119 = vector.load %arg3[%c0_50, %c0_51] : memref<128x128xbf16, #tpu.memory_space<vmem>>, vector<128x128xbf16>
    %cst_52 = arith.constant dense<0.000000e+00> : vector<32x128xf32>
    %120 = tpu.matmul %118, %119, %cst_52 {dimension_numbers = #tpu.dot_dimension_numbers<[1], [0], [0], [1], [0, 0, 1, 1], [], []>} : vector<32x128xbf16>, vector<128x128xbf16>, vector<32x128xf32> -> vector<32x128xf32>
    %121 = arith.truncf %117 : vector<1x128xf32> to vector<1x128xbf16>
    %c0_53 = arith.constant 0 : index
    %c0_54 = arith.constant 0 : index
    %122 = vector.load %arg3[%c0_53, %c0_54] : memref<128x128xbf16, #tpu.memory_space<vmem>>, vector<128x128xbf16>
    %cst_55 = arith.constant dense<0.000000e+00> : vector<1x128xf32>
    %123 = tpu.matmul %121, %122, %cst_55 {dimension_numbers = #tpu.dot_dimension_numbers<[1], [0], [0], [1], [0, 0, 1, 1], [], []>} : vector<1x128xbf16>, vector<128x128xbf16>, vector<1x128xf32> -> vector<1x128xf32>
    %cst_56 = arith.constant dense<0.000000e+00> : vector<1x128xf32>
    %124 = tpu.matmul %4, %120, %cst_56 {dimension_numbers = #tpu.dot_dimension_numbers<[1], [0], [0], [1], [0, 0, 1, 1], [], []>} : vector<1x32xf32>, vector<32x128xf32>, vector<1x128xf32> -> vector<1x128xf32>
    %cst_57 = arith.constant 9.600000e+01 : f32
    %125 = vector.broadcast %cst_57 : f32 to vector<1x128xf32>
    %126 = arith.mulf %125, %123 : vector<1x128xf32>
    %127 = arith.addf %124, %126 : vector<1x128xf32>
    %128 = arith.mulf %120, %120 : vector<32x128xf32>
    %cst_58 = arith.constant dense<0.000000e+00> : vector<1x128xf32>
    %129 = tpu.matmul %4, %128, %cst_58 {dimension_numbers = #tpu.dot_dimension_numbers<[1], [0], [0], [1], [0, 0, 1, 1], [], []>} : vector<1x32xf32>, vector<32x128xf32>, vector<1x128xf32> -> vector<1x128xf32>
    %130 = arith.mulf %123, %123 : vector<1x128xf32>
    %cst_59 = arith.constant 9.600000e+01 : f32
    %131 = vector.broadcast %cst_59 : f32 to vector<1x128xf32>
    %132 = arith.mulf %131, %130 : vector<1x128xf32>
    %133 = arith.addf %129, %132 : vector<1x128xf32>
    %cst_60 = arith.constant dense<0.000000e+00> : vector<1x8xf32>
    %134 = tpu.matmul %127, %2, %cst_60 {dimension_numbers = #tpu.dot_dimension_numbers<[1], [0], [0], [1], [0, 0, 1, 1], [], []>} : vector<1x128xf32>, vector<128x8xf32>, vector<1x8xf32> -> vector<1x8xf32>
    %cst_61 = arith.constant 4.8828125E-4 : f32
    %135 = vector.broadcast %cst_61 : f32 to vector<1x8xf32>
    %136 = arith.mulf %134, %135 : vector<1x8xf32>
    %cst_62 = arith.constant dense<0.000000e+00> : vector<1x8xf32>
    %137 = tpu.matmul %133, %2, %cst_62 {dimension_numbers = #tpu.dot_dimension_numbers<[1], [0], [0], [1], [0, 0, 1, 1], [], []>} : vector<1x128xf32>, vector<128x8xf32>, vector<1x8xf32> -> vector<1x8xf32>
    %cst_63 = arith.constant 4.8828125E-4 : f32
    %138 = vector.broadcast %cst_63 : f32 to vector<1x8xf32>
    %139 = arith.mulf %137, %138 : vector<1x8xf32>
    %140 = arith.mulf %136, %136 : vector<1x8xf32>
    %141 = arith.subf %139, %140 : vector<1x8xf32>
    %cst_64 = arith.constant 0.000000e+00 : f32
    %142 = vector.broadcast %cst_64 : f32 to vector<1x8xf32>
    %143 = arith.maximumf %141, %142 : vector<1x8xf32>
    %cst_65 = arith.constant 9.99999974E-6 : f32
    %144 = vector.broadcast %cst_65 : f32 to vector<1x8xf32>
    %145 = arith.addf %143, %144 : vector<1x8xf32>
    %146 = math.rsqrt %145 : vector<1x8xf32>
    %cst_66 = arith.constant dense<0.000000e+00> : vector<1x128xf32>
    %147 = tpu.matmul %136, %3, %cst_66 {dimension_numbers = #tpu.dot_dimension_numbers<[1], [0], [0], [1], [0, 0, 1, 1], [], []>} : vector<1x8xf32>, vector<8x128xf32>, vector<1x128xf32> -> vector<1x128xf32>
    %cst_67 = arith.constant dense<0.000000e+00> : vector<1x128xf32>
    %148 = tpu.matmul %146, %3, %cst_67 {dimension_numbers = #tpu.dot_dimension_numbers<[1], [0], [0], [1], [0, 0, 1, 1], [], []>} : vector<1x8xf32>, vector<8x128xf32>, vector<1x128xf32> -> vector<1x128xf32>
    %149 = vector.broadcast %147 : vector<1x128xf32> to vector<32x128xf32>
    %150 = arith.subf %120, %149 : vector<32x128xf32>
    %151 = vector.broadcast %148 : vector<1x128xf32> to vector<32x128xf32>
    %152 = arith.mulf %150, %151 : vector<32x128xf32>
    %153 = math.absf %152 : vector<32x128xf32>
    %cst_68 = arith.constant 0.707106769 : f32
    %154 = vector.broadcast %cst_68 : f32 to vector<32x128xf32>
    %155 = arith.mulf %153, %154 : vector<32x128xf32>
    %cst_69 = arith.constant 0.327591091 : f32
    %156 = vector.broadcast %cst_69 : f32 to vector<32x128xf32>
    %157 = arith.mulf %156, %155 : vector<32x128xf32>
    %cst_70 = arith.constant 1.000000e+00 : f32
    %158 = vector.broadcast %cst_70 : f32 to vector<32x128xf32>
    %159 = arith.addf %158, %157 : vector<32x128xf32>
    %160 = tpu.reciprocal %159 {approx = true} : vector<32x128xf32> -> vector<32x128xf32>
    %161 = arith.mulf %159, %160 : vector<32x128xf32>
    %cst_71 = arith.constant 2.000000e+00 : f32
    %162 = vector.broadcast %cst_71 : f32 to vector<32x128xf32>
    %163 = arith.subf %162, %161 : vector<32x128xf32>
    %164 = arith.mulf %160, %163 : vector<32x128xf32>
    %cst_72 = arith.constant 1.06140542 : f32
    %165 = vector.broadcast %cst_72 : f32 to vector<32x128xf32>
    %166 = arith.mulf %164, %165 : vector<32x128xf32>
    %cst_73 = arith.constant -1.45315206 : f32
    %167 = vector.broadcast %cst_73 : f32 to vector<32x128xf32>
    %168 = arith.addf %167, %166 : vector<32x128xf32>
    %169 = arith.mulf %164, %168 : vector<32x128xf32>
    %cst_74 = arith.constant 1.42141378 : f32
    %170 = vector.broadcast %cst_74 : f32 to vector<32x128xf32>
    %171 = arith.addf %170, %169 : vector<32x128xf32>
    %172 = arith.mulf %164, %171 : vector<32x128xf32>
    %cst_75 = arith.constant -0.284496725 : f32
    %173 = vector.broadcast %cst_75 : f32 to vector<32x128xf32>
    %174 = arith.addf %173, %172 : vector<32x128xf32>
    %175 = arith.mulf %164, %174 : vector<32x128xf32>
    %cst_76 = arith.constant 0.254829586 : f32
    %176 = vector.broadcast %cst_76 : f32 to vector<32x128xf32>
    %177 = arith.addf %176, %175 : vector<32x128xf32>
    %178 = arith.mulf %164, %177 : vector<32x128xf32>
    %cst_77 = arith.constant 0.000000e+00 : f32
    %179 = vector.broadcast %cst_77 : f32 to vector<32x128xf32>
    %180 = arith.subf %179, %155 : vector<32x128xf32>
    %181 = arith.mulf %180, %155 : vector<32x128xf32>
    %182 = math.exp %181 : vector<32x128xf32>
    %183 = arith.mulf %178, %182 : vector<32x128xf32>
    %cst_78 = arith.constant 1.000000e+00 : f32
    %184 = vector.broadcast %cst_78 : f32 to vector<32x128xf32>
    %185 = arith.subf %184, %183 : vector<32x128xf32>
    %cst_79 = arith.constant 0.000000e+00 : f32
    %186 = vector.broadcast %cst_79 : f32 to vector<32x128xf32>
    %187 = arith.cmpf olt, %152, %186 : vector<32x128xf32>
    %cst_80 = arith.constant 0.000000e+00 : f32
    %188 = vector.broadcast %cst_80 : f32 to vector<32x128xf32>
    %189 = arith.subf %188, %185 : vector<32x128xf32>
    %190 = arith.select %187, %189, %185 : vector<32x128xi1>, vector<32x128xf32>
    %cst_81 = arith.constant 5.000000e-01 : f32
    %191 = vector.broadcast %cst_81 : f32 to vector<32x128xf32>
    %192 = arith.mulf %191, %152 : vector<32x128xf32>
    %cst_82 = arith.constant 1.000000e+00 : f32
    %193 = vector.broadcast %cst_82 : f32 to vector<32x128xf32>
    %194 = arith.addf %193, %190 : vector<32x128xf32>
    %195 = arith.mulf %192, %194 : vector<32x128xf32>
    %196 = arith.addf %195, %71 : vector<32x128xf32>
    %c0_83 = arith.constant 0 : index
    %c0_84 = arith.constant 0 : index
    %c0_85 = arith.constant 0 : index
    %197 = vector.load %arg6[%c0_83, %c0_84, %c0_85] : memref<1x32x128xf32, #tpu.memory_space<vmem>>, vector<1x32x128xf32>
    %198 = vector.shape_cast %197 : vector<1x32x128xf32> to vector<32x128xf32>
    %199 = vector.shape_cast %196 : vector<32x128xf32> to vector<1x32x128xf32>
    tpu.vector_store %arg6[%c0_83, %c0_84, %c0_85], %199 {strides = array<i32>} : memref<1x32x128xf32, #tpu.memory_space<vmem>>, vector<1x32x128xf32>,
    %200 = arith.subf %123, %147 : vector<1x128xf32>
    %201 = arith.mulf %200, %148 : vector<1x128xf32>
    %202 = math.absf %201 : vector<1x128xf32>
    %cst_86 = arith.constant 0.707106769 : f32
    %203 = vector.broadcast %cst_86 : f32 to vector<1x128xf32>
    %204 = arith.mulf %202, %203 : vector<1x128xf32>
    %cst_87 = arith.constant 0.327591091 : f32
    %205 = vector.broadcast %cst_87 : f32 to vector<1x128xf32>
    %206 = arith.mulf %205, %204 : vector<1x128xf32>
    %cst_88 = arith.constant 1.000000e+00 : f32
    %207 = vector.broadcast %cst_88 : f32 to vector<1x128xf32>
    %208 = arith.addf %207, %206 : vector<1x128xf32>
    %209 = tpu.reciprocal %208 {approx = true} : vector<1x128xf32> -> vector<1x128xf32>
    %210 = arith.mulf %208, %209 : vector<1x128xf32>
    %cst_89 = arith.constant 2.000000e+00 : f32
    %211 = vector.broadcast %cst_89 : f32 to vector<1x128xf32>
    %212 = arith.subf %211, %210 : vector<1x128xf32>
    %213 = arith.mulf %209, %212 : vector<1x128xf32>
    %cst_90 = arith.constant 1.06140542 : f32
    %214 = vector.broadcast %cst_90 : f32 to vector<1x128xf32>
    %215 = arith.mulf %213, %214 : vector<1x128xf32>
    %cst_91 = arith.constant -1.45315206 : f32
    %216 = vector.broadcast %cst_91 : f32 to vector<1x128xf32>
    %217 = arith.addf %216, %215 : vector<1x128xf32>
    %218 = arith.mulf %213, %217 : vector<1x128xf32>
    %cst_92 = arith.constant 1.42141378 : f32
    %219 = vector.broadcast %cst_92 : f32 to vector<1x128xf32>
    %220 = arith.addf %219, %218 : vector<1x128xf32>
    %221 = arith.mulf %213, %220 : vector<1x128xf32>
    %cst_93 = arith.constant -0.284496725 : f32
    %222 = vector.broadcast %cst_93 : f32 to vector<1x128xf32>
    %223 = arith.addf %222, %221 : vector<1x128xf32>
    %224 = arith.mulf %213, %223 : vector<1x128xf32>
    %cst_94 = arith.constant 0.254829586 : f32
    %225 = vector.broadcast %cst_94 : f32 to vector<1x128xf32>
    %226 = arith.addf %225, %224 : vector<1x128xf32>
    %227 = arith.mulf %213, %226 : vector<1x128xf32>
    %cst_95 = arith.constant 0.000000e+00 : f32
    %228 = vector.broadcast %cst_95 : f32 to vector<1x128xf32>
    %229 = arith.subf %228, %204 : vector<1x128xf32>
    %230 = arith.mulf %229, %204 : vector<1x128xf32>
    %231 = math.exp %230 : vector<1x128xf32>
    %232 = arith.mulf %227, %231 : vector<1x128xf32>
    %cst_96 = arith.constant 1.000000e+00 : f32
    %233 = vector.broadcast %cst_96 : f32 to vector<1x128xf32>
    %234 = arith.subf %233, %232 : vector<1x128xf32>
    %cst_97 = arith.constant 0.000000e+00 : f32
    %235 = vector.broadcast %cst_97 : f32 to vector<1x128xf32>
    %236 = arith.cmpf olt, %201, %235 : vector<1x128xf32>
    %cst_98 = arith.constant 0.000000e+00 : f32
    %237 = vector.broadcast %cst_98 : f32 to vector<1x128xf32>
    %238 = arith.subf %237, %234 : vector<1x128xf32>
    %239 = arith.select %236, %238, %234 : vector<1x128xi1>, vector<1x128xf32>
    %cst_99 = arith.constant 5.000000e-01 : f32
    %240 = vector.broadcast %cst_99 : f32 to vector<1x128xf32>
    %241 = arith.mulf %240, %201 : vector<1x128xf32>
    %cst_100 = arith.constant 1.000000e+00 : f32
    %242 = vector.broadcast %cst_100 : f32 to vector<1x128xf32>
    %243 = arith.addf %242, %239 : vector<1x128xf32>
    %244 = arith.mulf %241, %243 : vector<1x128xf32>
    %245 = arith.addf %244, %117 : vector<1x128xf32>
    %c0_101 = arith.constant 0 : index
    %c0_102 = arith.constant 0 : index
    %c0_103 = arith.constant 0 : index
    %246 = vector.load %arg7[%c0_101, %c0_102, %c0_103] : memref<1x1x128xf32, #tpu.memory_space<vmem>>, vector<1x1x128xf32>
    %247 = vector.shape_cast %246 : vector<1x1x128xf32> to vector<1x128xf32>
    %248 = vector.shape_cast %245 : vector<1x128xf32> to vector<1x1x128xf32>
    tpu.vector_store %arg7[%c0_101, %c0_102, %c0_103], %248 {strides = array<i32>} : memref<1x1x128xf32, #tpu.memory_space<vmem>>, vector<1x1x128xf32>,
    return
  }
  func.func @transform_0(%arg0: i32) -> (i32, i32, i32) {
    %c0_i32 = arith.constant 0 : i32
    %c0_i32_0 = arith.constant 0 : i32
    %c0_i32_1 = arith.constant 0 : i32
    return %arg0, %c0_i32, %c0_i32_0 : i32, i32, i32
  }
  func.func @transform_1(%arg0: i32) -> (i32, i32) {
    %c0_i32 = arith.constant 0 : i32
    %c0_i32_0 = arith.constant 0 : i32
    %c0_i32_1 = arith.constant 0 : i32
    return %c0_i32, %c0_i32_0 : i32, i32
  }
  func.func @transform_2(%arg0: i32) -> (i32, i32) {
    %c0_i32 = arith.constant 0 : i32
    %c0_i32_0 = arith.constant 0 : i32
    %c0_i32_1 = arith.constant 0 : i32
    return %c0_i32, %c0_i32_0 : i32, i32
  }
  func.func @transform_3(%arg0: i32) -> (i32, i32) {
    %c0_i32 = arith.constant 0 : i32
    %c0_i32_0 = arith.constant 0 : i32
    %c0_i32_1 = arith.constant 0 : i32
    return %c0_i32, %c0_i32_0 : i32, i32
  }
  func.func @transform_4(%arg0: i32) -> (i32, i32) {
    %c0_i32 = arith.constant 0 : i32
    %c0_i32_0 = arith.constant 0 : i32
    %c0_i32_1 = arith.constant 0 : i32
    return %c0_i32, %c0_i32_0 : i32, i32
  }
  func.func @transform_5(%arg0: i32) -> (i32, i32, i32) {
    %c0_i32 = arith.constant 0 : i32
    %c0_i32_0 = arith.constant 0 : i32
    %c0_i32_1 = arith.constant 0 : i32
    return %arg0, %c0_i32, %c0_i32_0 : i32, i32, i32
  }
  func.func @transform_6(%arg0: i32) -> (i32, i32, i32) {
    %c0_i32 = arith.constant 0 : i32
    %c0_i32_0 = arith.constant 0 : i32
    %c0_i32_1 = arith.constant 0 : i32
    return %arg0, %c0_i32, %c0_i32_0 : i32, i32, i32
  }
}

</mosaic_0001>

<llo_original>
// kernel: tile.9
$region0: #{tile.9}
  %s0 = inlined_call_operand.vmem [shape: f32[16,8,8], index: 0, kind: input, shape index: {}]
  %s1 = inlined_call_operand.vmem [shape: f32[128,8], index: 1, kind: output, shape index: {}]
  %s2 = smov 3
  %v3 = vld [vmem:[%s0] ss:$16 sm:%s2]
  %s4 = smov 12
  %v5 = vld [vmem:[%s0] ss:$16 sm:%s4]
  %vm6 = vcmask 1043458
  %v7 = vsel %vm6, %v5, %v3
  %s8 = smov 48
  %v9 = vld [vmem:[%s0] ss:$16 sm:%s8]
  %vm10 = vcmask 1045508
  %v11 = vsel %vm10, %v9, %v7
  %s12 = smov 192
  %v13 = vld [vmem:[%s0] ss:$16 sm:%s12]
  %vm14 = vcmask 1047558
  %v15 = vsel %vm14, %v13, %v11
  %vm16 = vcmask 64512
  %17 = vst.msk [vmem:[%s1] sm:$0xff] %vm16, %v15
  %s18 = scalar_lea.vmem %s0, 15
  %s19 = smov 3
  %v20 = vld [vmem:[%s18] ss:$16 sm:%s19]
  %s21 = scalar_lea.vmem %s0, 15
  %s22 = smov 12
  %v23 = vld [vmem:[%s21] ss:$16 sm:%s22]
  %vm24 = vcmask 1043458
  %v25 = vsel %vm24, %v23, %v20
  %s26 = scalar_lea.vmem %s0, 15
  %s27 = smov 48
  %v28 = vld [vmem:[%s26] ss:$16 sm:%s27]
  %vm29 = vcmask 1045508
  %v30 = vsel %vm29, %v28, %v25
  %s31 = scalar_lea.vmem %s0, 15
  %s32 = smov 192
  %v33 = vld [vmem:[%s31] ss:$16 sm:%s32]
  %vm34 = vcmask 1047558
  %v35 = vsel %vm34, %v33, %v30
  %36 = vrot.lane.b32.xlu0 %v35, 120
  %v37 = vpop.permute.xlu0 %36
  %vm38 = vcmask 1048512
  %39 = vst.msk [vmem:[%s1] sm:$0xff] %vm38, %v37
  %s40 = scalar_lea.vmem %s0, 14
  %s41 = smov 3
  %v42 = vld [vmem:[%s40] ss:$16 sm:%s41]
  %s43 = scalar_lea.vmem %s0, 14
  %s44 = smov 12
  %v45 = vld [vmem:[%s43] ss:$16 sm:%s44]
  %vm46 = vcmask 1043458
  %v47 = vsel %vm46, %v45, %v42
  %s48 = scalar_lea.vmem %s0, 14
  %s49 = smov 48
  %v50 = vld [vmem:[%s48] ss:$16 sm:%s49]
  %vm51 = vcmask 1045508
  %v52 = vsel %vm51, %v50, %v47
  %s53 = scalar_lea.vmem %s0, 14
  %s54 = smov 192
  %v55 = vld [vmem:[%s53] ss:$16 sm:%s54]
  %vm56 = vcmask 1047558
  %v57 = vsel %vm56, %v55, %v52
  %58 = vrot.lane.b32.xlu0 %v57, 112
  %v59 = vpop.permute.xlu0 %58
  %vm60 = vcmask 982912
  %61 = vst.msk [vmem:[%s1] sm:$0xff] %vm60, %v59
  %s62 = scalar_lea.vmem %s0, 13
  %s63 = smov 3
  %v64 = vld [vmem:[%s62] ss:$16 sm:%s63]
  %s65 = scalar_lea.vmem %s0, 13
  %s66 = smov 12
  %v67 = vld [vmem:[%s65] ss:$16 sm:%s66]
  %vm68 = vcmask 1043458
  %v69 = vsel %vm68, %v67, %v64
  %s70 = scalar_lea.vmem %s0, 13
  %s71 = smov 48
  %v72 = vld [vmem:[%s70] ss:$16 sm:%s71]
  %vm73 = vcmask 1045508
  %v74 = vsel %vm73, %v72, %v69
  %s75 = scalar_lea.vmem %s0, 13
  %s76 = smov 192
  %v77 = vld [vmem:[%s75] ss:$16 sm:%s76]
  %vm78 = vcmask 1047558
  %v79 = vsel %vm78, %v77, %v74
  %80 = vrot.lane.b32.xlu0 %v79, 104
  %v81 = vpop.permute.xlu0 %80
  %vm82 = vcmask 917312
  %83 = vst.msk [vmem:[%s1] sm:$0xff] %vm82, %v81
  %s84 = scalar_lea.vmem %s0, 12
  %s85 = smov 3
  %v86 = vld [vmem:[%s84] ss:$16 sm:%s85]
  %s87 = scalar_lea.vmem %s0, 12
  %s88 = smov 12
  %v89 = vld [vmem:[%s87] ss:$16 sm:%s88]
  %vm90 = vcmask 1043458
  %v91 = vsel %vm90, %v89, %v86
  %s92 = scalar_lea.vmem %s0, 12
  %s93 = smov 48
  %v94 = vld [vmem:[%s92] ss:$16 sm:%s93]
  %vm95 = vcmask 1045508
  %v96 = vsel %vm95, %v94, %v91
  %s97 = scalar_lea.vmem %s0, 12
  %s98 = smov 192
  %v99 = vld [vmem:[%s97] ss:$16 sm:%s98]
  %vm100 = vcmask 1047558
  %v101 = vsel %vm100, %v99, %v96
  %102 = vrot.lane.b32.xlu0 %v101, 96
  %v103 = vpop.permute.xlu0 %102
  %vm104 = vcmask 851712
  %105 = vst.msk [vmem:[%s1] sm:$0xff] %vm104, %v103
  %s106 = scalar_lea.vmem %s0, 11
  %s107 = smov 3
  %v108 = vld [vmem:[%s106] ss:$16 sm:%s107]
  %s109 = scalar_lea.vmem %s0, 11
  %s110 = smov 12
  %v111 = vld [vmem:[%s109] ss:$16 sm:%s110]
  %vm112 = vcmask 1043458
  %v113 = vsel %vm112, %v111, %v108
  %s114 = scalar_lea.vmem %s0, 11
  %s115 = smov 48
  %v116 = vld [vmem:[%s114] ss:$16 sm:%s115]
  %vm117 = vcmask 1045508
  %v118 = vsel %vm117, %v116, %v113
  %s119 = scalar_lea.vmem %s0, 11
  %s120 = smov 192
  %v121 = vld [vmem:[%s119] ss:$16 sm:%s120]
  %vm122 = vcmask 1047558
  %v123 = vsel %vm122, %v121, %v118
  %124 = vrot.lane.b32.xlu0 %v123, 88
  %v125 = vpop.permute.xlu0 %124
  %vm126 = vcmask 786112
  %127 = vst.msk [vmem:[%s1] sm:$0xff] %vm126, %v125
  %s128 = scalar_lea.vmem %s0, 10
  %s129 = smov 3
  %v130 = vld [vmem:[%s128] ss:$16 sm:%s129]
  %s131 = scalar_lea.vmem %s0, 10
  %s132 = smov 12
  %v133 = vld [vmem:[%s131] ss:$16 sm:%s132]
  %vm134 = vcmask 1043458
  %v135 = vsel %vm134, %v133, %v130
  %s136 = scalar_lea.vmem %s0, 10
  %s137 = smov 48
  %v138 = vld [vmem:[%s136] ss:$16 sm:%s137]
  %vm139 = vcmask 1045508
  %v140 = vsel %vm139, %v138, %v135
  %s141 = scalar_lea.vmem %s0, 10
  %s142 = smov 192
  %v143 = vld [vmem:[%s141] ss:$16 sm:%s142]
  %vm144 = vcmask 1047558
  %v145 = vsel %vm144, %v143, %v140
  %146 = vrot.lane.b32.xlu0 %v145, 80
  %v147 = vpop.permute.xlu0 %146
  %vm148 = vcmask 720512
  %149 = vst.msk [vmem:[%s1] sm:$0xff] %vm148, %v147
  %s150 = scalar_lea.vmem %s0, 9
  %s151 = smov 3
  %v152 = vld [vmem:[%s150] ss:$16 sm:%s151]
  %s153 = scalar_lea.vmem %s0, 9
  %s154 = smov 12
  %v155 = vld [vmem:[%s153] ss:$16 sm:%s154]
  %vm156 = vcmask 1043458
  %v157 = vsel %vm156, %v155, %v152
  %s158 = scalar_lea.vmem %s0, 9
  %s159 = smov 48
  %v160 = vld [vmem:[%s158] ss:$16 sm:%s159]
  %vm161 = vcmask 1045508
  %v162 = vsel %vm161, %v160, %v157
  %s163 = scalar_lea.vmem %s0, 9
  %s164 = smov 192
  %v165 = vld [vmem:[%s163] ss:$16 sm:%s164]
  %vm166 = vcmask 1047558
  %v167 = vsel %vm166, %v165, %v162
  %168 = vrot.lane.b32.xlu0 %v167, 72
  %v169 = vpop.permute.xlu0 %168
  %vm170 = vcmask 654912
  %171 = vst.msk [vmem:[%s1] sm:$0xff] %vm170, %v169
  %s172 = scalar_lea.vmem %s0, 8
  %s173 = smov 3
  %v174 = vld [vmem:[%s172] ss:$16 sm:%s173]
  %s175 = scalar_lea.vmem %s0, 8
  %s176 = smov 12
  %v177 = vld [vmem:[%s175] ss:$16 sm:%s176]
  %vm178 = vcmask 1043458
  %v179 = vsel %vm178, %v177, %v174
  %s180 = scalar_lea.vmem %s0, 8
  %s181 = smov 48
  %v182 = vld [vmem:[%s180] ss:$16 sm:%s181]
  %vm183 = vcmask 1045508
  %v184 = vsel %vm183, %v182, %v179
  %s185 = scalar_lea.vmem %s0, 8
  %s186 = smov 192
  %v187 = vld [vmem:[%s185] ss:$16 sm:%s186]
  %vm188 = vcmask 1047558
  %v189 = vsel %vm188, %v187, %v184
  %190 = vrot.lane.b32.xlu0 %v189, 64
  %v191 = vpop.permute.xlu0 %190
  %vm192 = vcmask 589312
  %193 = vst.msk [vmem:[%s1] sm:$0xff] %vm192, %v191
  %s194 = scalar_lea.vmem %s0, 7
  %s195 = smov 3
  %v196 = vld [vmem:[%s194] ss:$16 sm:%s195]
  %s197 = scalar_lea.vmem %s0, 7
  %s198 = smov 12
  %v199 = vld [vmem:[%s197] ss:$16 sm:%s198]
  %vm200 = vcmask 1043458
  %v201 = vsel %vm200, %v199, %v196
  %s202 = scalar_lea.vmem %s0, 7
  %s203 = smov 48
  %v204 = vld [vmem:[%s202] ss:$16 sm:%s203]
  %vm205 = vcmask 1045508
  %v206 = vsel %vm205, %v204, %v201
  %s207 = scalar_lea.vmem %s0, 7
  %s208 = smov 192
  %v209 = vld [vmem:[%s207] ss:$16 sm:%s208]
  %vm210 = vcmask 1047558
  %v211 = vsel %vm210, %v209, %v206
  %212 = vrot.lane.b32.xlu0 %v211, 56
  %v213 = vpop.permute.xlu0 %212
  %vm214 = vcmask 523712
  %215 = vst.msk [vmem:[%s1] sm:$0xff] %vm214, %v213
  %s216 = scalar_lea.vmem %s0, 6
  %s217 = smov 3
  %v218 = vld [vmem:[%s216] ss:$16 sm:%s217]
  %s219 = scalar_lea.vmem %s0, 6
  %s220 = smov 12
  %v221 = vld [vmem:[%s219] ss:$16 sm:%s220]
  %vm222 = vcmask 1043458
  %v223 = vsel %vm222, %v221, %v218
  %s224 = scalar_lea.vmem %s0, 6
  %s225 = smov 48
  %v226 = vld [vmem:[%s224] ss:$16 sm:%s225]
  %vm227 = vcmask 1045508
  %v228 = vsel %vm227, %v226, %v223
  %s229 = scalar_lea.vmem %s0, 6
  %s230 = smov 192
  %v231 = vld [vmem:[%s229] ss:$16 sm:%s230]
  %vm232 = vcmask 1047558
  %v233 = vsel %vm232, %v231, %v228
  %234 = vrot.lane.b32.xlu0 %v233, 48
  %v235 = vpop.permute.xlu0 %234
  %vm236 = vcmask 458112
  %237 = vst.msk [vmem:[%s1] sm:$0xff] %vm236, %v235
  %s238 = scalar_lea.vmem %s0, 5
  %s239 = smov 3
  %v240 = vld [vmem:[%s238] ss:$16 sm:%s239]
  %s241 = scalar_lea.vmem %s0, 5
  %s242 = smov 12
  %v243 = vld [vmem:[%s241] ss:$16 sm:%s242]
  %vm244 = vcmask 1043458
  %v245 = vsel %vm244, %v243, %v240
  %s246 = scalar_lea.vmem %s0, 5
  %s247 = smov 48
  %v248 = vld [vmem:[%s246] ss:$16 sm:%s247]
  %vm249 = vcmask 1045508
  %v250 = vsel %vm249, %v248, %v245
  %s251 = scalar_lea.vmem %s0, 5
  %s252 = smov 192
  %v253 = vld [vmem:[%s251] ss:$16 sm:%s252]
  %vm254 = vcmask 1047558
  %v255 = vsel %vm254, %v253, %v250
  %256 = vrot.lane.b32.xlu0 %v255, 40
  %v257 = vpop.permute.xlu0 %256
  %vm258 = vcmask 392512
  %259 = vst.msk [vmem:[%s1] sm:$0xff] %vm258, %v257
  %s260 = scalar_lea.vmem %s0, 4
  %s261 = smov 3
  %v262 = vld [vmem:[%s260] ss:$16 sm:%s261]
  %s263 = scalar_lea.vmem %s0, 4
  %s264 = smov 12
  %v265 = vld [vmem:[%s263] ss:$16 sm:%s264]
  %vm266 = vcmask 1043458
  %v267 = vsel %vm266, %v265, %v262
  %s268 = scalar_lea.vmem %s0, 4
  %s269 = smov 48
  %v270 = vld [vmem:[%s268] ss:$16 sm:%s269]
  %vm271 = vcmask 1045508
  %v272 = vsel %vm271, %v270, %v267
  %s273 = scalar_lea.vmem %s0, 4
  %s274 = smov 192
  %v275 = vld [vmem:[%s273] ss:$16 sm:%s274]
  %vm276 = vcmask 1047558
  %v277 = vsel %vm276, %v275, %v272
  %278 = vrot.lane.b32.xlu0 %v277, 32
  %v279 = vpop.permute.xlu0 %278
  %vm280 = vcmask 326912
  %281 = vst.msk [vmem:[%s1] sm:$0xff] %vm280, %v279
  %s282 = scalar_lea.vmem %s0, 3
  %s283 = smov 3
  %v284 = vld [vmem:[%s282] ss:$16 sm:%s283]
  %s285 = scalar_lea.vmem %s0, 3
  %s286 = smov 12
  %v287 = vld [vmem:[%s285] ss:$16 sm:%s286]
  %vm288 = vcmask 1043458
  %v289 = vsel %vm288, %v287, %v284
  %s290 = scalar_lea.vmem %s0, 3
  %s291 = smov 48
  %v292 = vld [vmem:[%s290] ss:$16 sm:%s291]
  %vm293 = vcmask 1045508
  %v294 = vsel %vm293, %v292, %v289
  %s295 = scalar_lea.vmem %s0, 3
  %s296 = smov 192
  %v297 = vld [vmem:[%s295] ss:$16 sm:%s296]
  %vm298 = vcmask 1047558
  %v299 = vsel %vm298, %v297, %v294
  %300 = vrot.lane.b32.xlu0 %v299, 24
  %v301 = vpop.permute.xlu0 %300
  %vm302 = vcmask 261312
  %303 = vst.msk [vmem:[%s1] sm:$0xff] %vm302, %v301
  %s304 = scalar_lea.vmem %s0, 2
  %s305 = smov 3
  %v306 = vld [vmem:[%s304] ss:$16 sm:%s305]
  %s307 = scalar_lea.vmem %s0, 2
  %s308 = smov 12
  %v309 = vld [vmem:[%s307] ss:$16 sm:%s308]
  %vm310 = vcmask 1043458
  %v311 = vsel %vm310, %v309, %v306
  %s312 = scalar_lea.vmem %s0, 2
  %s313 = smov 48
  %v314 = vld [vmem:[%s312] ss:$16 sm:%s313]
  %vm315 = vcmask 1045508
  %v316 = vsel %vm315, %v314, %v311
  %s317 = scalar_lea.vmem %s0, 2
  %s318 = smov 192
  %v319 = vld [vmem:[%s317] ss:$16 sm:%s318]
  %vm320 = vcmask 1047558
  %v321 = vsel %vm320, %v319, %v316
  %322 = vrot.lane.b32.xlu0 %v321, 16
  %v323 = vpop.permute.xlu0 %322
  %vm324 = vcmask 195712
  %325 = vst.msk [vmem:[%s1] sm:$0xff] %vm324, %v323
  %s326 = scalar_lea.vmem %s0, 1
  %s327 = smov 3
  %v328 = vld [vmem:[%s326] ss:$16 sm:%s327]
  %s329 = scalar_lea.vmem %s0, 1
  %s330 = smov 12
  %v331 = vld [vmem:[%s329] ss:$16 sm:%s330]
  %vm332 = vcmask 1043458
  %v333 = vsel %vm332, %v331, %v328
  %s334 = scalar_lea.vmem %s0, 1
  %s335 = smov 48
  %v336 = vld [vmem:[%s334] ss:$16 sm:%s335]
  %vm337 = vcmask 1045508
  %v338 = vsel %vm337, %v336, %v333
  %s339 = scalar_lea.vmem %s0, 1
  %s340 = smov 192
  %v341 = vld [vmem:[%s339] ss:$16 sm:%s340]
  %vm342 = vcmask 1047558
  %v343 = vsel %vm342, %v341, %v338
  %344 = vrot.lane.b32.xlu0 %v343, 8
  %v345 = vpop.permute.xlu0 %344
  %vm346 = vcmask 130112
  %347 = vst.msk [vmem:[%s1] sm:$0xff] %vm346, %v345

// kernel: mul.4
$region0: #{mul.4}
  %s0 = inlined_call_operand.vmem [shape: f32[8,4,8,8], index: 0, kind: input, shape index: {}]
  %s1 = inlined_call_operand.vmem [shape: f32[32,64], index: 1, kind: output, shape index: {}]
  %v2 = vld [vmem:[%s0] ss:$8 sm:$0xf]
  %v3 = vld [vmem:[%s0] ss:$8 sm:$0xf0]
  %vm4 = vcmask 1047556
  %v5 = vsel %vm4, %v3, %v2
  %vm6 = vcmask 64512
  %7 = vst.msk [vmem:[%s1] sm:$0xff] %vm6, %v5
  %s8 = scalar_lea.vmem %s0, 64
  %v9 = vld [vmem:[%s8] ss:$8 sm:$0xf]
  %s10 = scalar_lea.vmem %s0, 64
  %v11 = vld [vmem:[%s10] ss:$8 sm:$0xf0]
  %vm12 = vcmask 1047556
  %v13 = vsel %vm12, %v11, %v9
  %vm14 = vcmask 64512
  %s15 = scalar_lea.vmem %s1, 8
  %16 = vst.msk [vmem:[%s15] sm:$0xff] %vm14, %v13
  %s17 = scalar_lea.vmem %s0, 128
  %v18 = vld [vmem:[%s17] ss:$8 sm:$0xf]
  %s19 = scalar_lea.vmem %s0, 128
  %v20 = vld [vmem:[%s19] ss:$8 sm:$0xf0]
  %vm21 = vcmask 1047556
  %v22 = vsel %vm21, %v20, %v18
  %vm23 = vcmask 64512
  %s24 = scalar_lea.vmem %s1, 16
  %25 = vst.msk [vmem:[%s24] sm:$0xff] %vm23, %v22
  %s26 = scalar_lea.vmem %s0, 192
  %v27 = vld [vmem:[%s26] ss:$8 sm:$0xf]
  %s28 = scalar_lea.vmem %s0, 192
  %v29 = vld [vmem:[%s28] ss:$8 sm:$0xf0]
  %vm30 = vcmask 1047556
  %v31 = vsel %vm30, %v29, %v27
  %vm32 = vcmask 64512
  %s33 = scalar_lea.vmem %s1, 24
  %34 = vst.msk [vmem:[%s33] sm:$0xff] %vm32, %v31
  %s35 = scalar_lea.vmem %s0, 7
  %v36 = vld [vmem:[%s35] ss:$8 sm:$0xf]
  %s37 = scalar_lea.vmem %s0, 7
  %v38 = vld [vmem:[%s37] ss:$8 sm:$0xf0]
  %vm39 = vcmask 1047556
  %v40 = vsel %vm39, %v38, %v36
  %41 = vrot.lane.b32.xlu0 %v40, 56
  %v42 = vpop.permute.xlu0 %41
  %vm43 = vcmask 523712
  %44 = vst.msk [vmem:[%s1] sm:$0xff] %vm43, %v42
  %s45 = scalar_lea.vmem %s0, 71
  %v46 = vld [vmem:[%s45] ss:$8 sm:$0xf]
  %s47 = scalar_lea.vmem %s0, 71
  %v48 = vld [vmem:[%s47] ss:$8 sm:$0xf0]
  %vm49 = vcmask 1047556
  %v50 = vsel %vm49, %v48, %v46
  %51 = vrot.lane.b32.xlu0 %v50, 56
  %v52 = vpop.permute.xlu0 %51
  %vm53 = vcmask 523712
  %s54 = scalar_lea.vmem %s1, 8
  %55 = vst.msk [vmem:[%s54] sm:$0xff] %vm53, %v52
  %s56 = scalar_lea.vmem %s0, 135
  %v57 = vld [vmem:[%s56] ss:$8 sm:$0xf]
  %s58 = scalar_lea.vmem %s0, 135
  %v59 = vld [vmem:[%s58] ss:$8 sm:$0xf0]
  %vm60 = vcmask 1047556
  %v61 = vsel %vm60, %v59, %v57
  %62 = vrot.lane.b32.xlu0 %v61, 56
  %v63 = vpop.permute.xlu0 %62
  %vm64 = vcmask 523712
  %s65 = scalar_lea.vmem %s1, 16
  %66 = vst.msk [vmem:[%s65] sm:$0xff] %vm64, %v63
  %s67 = scalar_lea.vmem %s0, 199
  %v68 = vld [vmem:[%s67] ss:$8 sm:$0xf]
  %s69 = scalar_lea.vmem %s0, 199
  %v70 = vld [vmem:[%s69] ss:$8 sm:$0xf0]
  %vm71 = vcmask 1047556
  %v72 = vsel %vm71, %v70, %v68
  %73 = vrot.lane.b32.xlu0 %v72, 56
  %v74 = vpop.permute.xlu0 %73
  %vm75 = vcmask 523712
  %s76 = scalar_lea.vmem %s1, 24
  %77 = vst.msk [vmem:[%s76] sm:$0xff] %vm75, %v74
  %s78 = scalar_lea.vmem %s0, 6
  %v79 = vld [vmem:[%s78] ss:$8 sm:$0xf]
  %s80 = scalar_lea.vmem %s0, 6
  %v81 = vld [vmem:[%s80] ss:$8 sm:$0xf0]
  %vm82 = vcmask 1047556
  %v83 = vsel %vm82, %v81, %v79
  %84 = vrot.lane.b32.xlu0 %v83, 48
  %v85 = vpop.permute.xlu0 %84
  %vm86 = vcmask 458112
  %87 = vst.msk [vmem:[%s1] sm:$0xff] %vm86, %v85
  %s88 = scalar_lea.vmem %s0, 70
  %v89 = vld [vmem:[%s88] ss:$8 sm:$0xf]
  %s90 = scalar_lea.vmem %s0, 70
  %v91 = vld [vmem:[%s90] ss:$8 sm:$0xf0]
  %vm92 = vcmask 1047556
  %v93 = vsel %vm92, %v91, %v89
  %94 = vrot.lane.b32.xlu0 %v93, 48
  %v95 = vpop.permute.xlu0 %94
  %vm96 = vcmask 458112
  %s97 = scalar_lea.vmem %s1, 8
  %98 = vst.msk [vmem:[%s97] sm:$0xff] %vm96, %v95
  %s99 = scalar_lea.vmem %s0, 134
  %v100 = vld [vmem:[%s99] ss:$8 sm:$0xf]
  %s101 = scalar_lea.vmem %s0, 134
  %v102 = vld [vmem:[%s101] ss:$8 sm:$0xf0]
  %vm103 = vcmask 1047556
  %v104 = vsel %vm103, %v102, %v100
  %105 = vrot.lane.b32.xlu0 %v104, 48
  %v106 = vpop.permute.xlu0 %105
  %vm107 = vcmask 458112
  %s108 = scalar_lea.vmem %s1, 16
  %109 = vst.msk [vmem:[%s108] sm:$0xff] %vm107, %v106
  %s110 = scalar_lea.vmem %s0, 198
  %v111 = vld [vmem:[%s110] ss:$8 sm:$0xf]
  %s112 = scalar_lea.vmem %s0, 198
  %v113 = vld [vmem:[%s112] ss:$8 sm:$0xf0]
  %vm114 = vcmask 1047556
  %v115 = vsel %vm114, %v113, %v111
  %116 = vrot.lane.b32.xlu0 %v115, 48
  %v117 = vpop.permute.xlu0 %116
  %vm118 = vcmask 458112
  %s119 = scalar_lea.vmem %s1, 24
  %120 = vst.msk [vmem:[%s119] sm:$0xff] %vm118, %v117
  %s121 = scalar_lea.vmem %s0, 5
  %v122 = vld [vmem:[%s121] ss:$8 sm:$0xf]
  %s123 = scalar_lea.vmem %s0, 5
  %v124 = vld [vmem:[%s123] ss:$8 sm:$0xf0]
  %vm125 = vcmask 1047556
  %v126 = vsel %vm125, %v124, %v122
  %127 = vrot.lane.b32.xlu0 %v126, 40
  %v128 = vpop.permute.xlu0 %127
  %vm129 = vcmask 392512
  %130 = vst.msk [vmem:[%s1] sm:$0xff] %vm129, %v128
  %s131 = scalar_lea.vmem %s0, 69
  %v132 = vld [vmem:[%s131] ss:$8 sm:$0xf]
  %s133 = scalar_lea.vmem %s0, 69
  %v134 = vld [vmem:[%s133] ss:$8 sm:$0xf0]
  %vm135 = vcmask 1047556
  %v136 = vsel %vm135, %v134, %v132
  %137 = vrot.lane.b32.xlu0 %v136, 40
  %v138 = vpop.permute.xlu0 %137
  %vm139 = vcmask 392512
  %s140 = scalar_lea.vmem %s1, 8
  %141 = vst.msk [vmem:[%s140] sm:$0xff] %vm139, %v138
  %s142 = scalar_lea.vmem %s0, 133
  %v143 = vld [vmem:[%s142] ss:$8 sm:$0xf]
  %s144 = scalar_lea.vmem %s0, 133
  %v145 = vld [vmem:[%s144] ss:$8 sm:$0xf0]
  %vm146 = vcmask 1047556
  %v147 = vsel %vm146, %v145, %v143
  %148 = vrot.lane.b32.xlu0 %v147, 40
  %v149 = vpop.permute.xlu0 %148
  %vm150 = vcmask 392512
  %s151 = scalar_lea.vmem %s1, 16
  %152 = vst.msk [vmem:[%s151] sm:$0xff] %vm150, %v149
  %s153 = scalar_lea.vmem %s0, 197
  %v154 = vld [vmem:[%s153] ss:$8 sm:$0xf]
  %s155 = scalar_lea.vmem %s0, 197
  %v156 = vld [vmem:[%s155] ss:$8 sm:$0xf0]
  %vm157 = vcmask 1047556
  %v158 = vsel %vm157, %v156, %v154
  %159 = vrot.lane.b32.xlu0 %v158, 40
  %v160 = vpop.permute.xlu0 %159
  %vm161 = vcmask 392512
  %s162 = scalar_lea.vmem %s1, 24
  %163 = vst.msk [vmem:[%s162] sm:$0xff] %vm161, %v160
  %s164 = scalar_lea.vmem %s0, 4
  %v165 = vld [vmem:[%s164] ss:$8 sm:$0xf]
  %s166 = scalar_lea.vmem %s0, 4
  %v167 = vld [vmem:[%s166] ss:$8 sm:$0xf0]
  %vm168 = vcmask 1047556
  %v169 = vsel %vm168, %v167, %v165
  %170 = vrot.lane.b32.xlu0 %v169, 32
  %v171 = vpop.permute.xlu0 %170
  %vm172 = vcmask 326912
  %173 = vst.msk [vmem:[%s1] sm:$0xff] %vm172, %v171
  %s174 = scalar_lea.vmem %s0, 68
  %v175 = vld [vmem:[%s174] ss:$8 sm:$0xf]
  %s176 = scalar_lea.vmem %s0, 68
  %v177 = vld [vmem:[%s176] ss:$8 sm:$0xf0]
  %vm178 = vcmask 1047556
  %v179 = vsel %vm178, %v177, %v175
  %180 = vrot.lane.b32.xlu0 %v179, 32
  %v181 = vpop.permute.xlu0 %180
  %vm182 = vcmask 326912
  %s183 = scalar_lea.vmem %s1, 8
  %184 = vst.msk [vmem:[%s183] sm:$0xff] %vm182, %v181
  %s185 = scalar_lea.vmem %s0, 132
  %v186 = vld [vmem:[%s185] ss:$8 sm:$0xf]
  %s187 = scalar_lea.vmem %s0, 132
  %v188 = vld [vmem:[%s187] ss:$8 sm:$0xf0]
  %vm189 = vcmask 1047556
  %v190 = vsel %vm189, %v188, %v186
  %191 = vrot.lane.b32.xlu0 %v190, 32
  %v192 = vpop.permute.xlu0 %191
  %vm193 = vcmask 326912
  %s194 = scalar_lea.vmem %s1, 16
  %195 = vst.msk [vmem:[%s194] sm:$0xff] %vm193, %v192
  %s196 = scalar_lea.vmem %s0, 196
  %v197 = vld [vmem:[%s196] ss:$8 sm:$0xf]
  %s198 = scalar_lea.vmem %s0, 196
  %v199 = vld [vmem:[%s198] ss:$8 sm:$0xf0]
  %vm200 = vcmask 1047556
  %v201 = vsel %vm200, %v199, %v197
  %202 = vrot.lane.b32.xlu0 %v201, 32
  %v203 = vpop.permute.xlu0 %202
  %vm204 = vcmask 326912
  %s205 = scalar_lea.vmem %s1, 24
  %206 = vst.msk [vmem:[%s205] sm:$0xff] %vm204, %v203
  %s207 = scalar_lea.vmem %s0, 3
  %v208 = vld [vmem:[%s207] ss:$8 sm:$0xf]
  %s209 = scalar_lea.vmem %s0, 3
  %v210 = vld [vmem:[%s209] ss:$8 sm:$0xf0]
  %vm211 = vcmask 1047556
  %v212 = vsel %vm211, %v210, %v208
  %213 = vrot.lane.b32.xlu0 %v212, 24
  %v214 = vpop.permute.xlu0 %213
  %vm215 = vcmask 261312
  %216 = vst.msk [vmem:[%s1] sm:$0xff] %vm215, %v214
  %s217 = scalar_lea.vmem %s0, 67
  %v218 = vld [vmem:[%s217] ss:$8 sm:$0xf]
  %s219 = scalar_lea.vmem %s0, 67
  %v220 = vld [vmem:[%s219] ss:$8 sm:$0xf0]
  %vm221 = vcmask 1047556
  %v222 = vsel %vm221, %v220, %v218
  %223 = vrot.lane.b32.xlu0 %v222, 24
  %v224 = vpop.permute.xlu0 %223
  %vm225 = vcmask 261312
  %s226 = scalar_lea.vmem %s1, 8
  %227 = vst.msk [vmem:[%s226] sm:$0xff] %vm225, %v224
  %s228 = scalar_lea.vmem %s0, 131
  %v229 = vld [vmem:[%s228] ss:$8 sm:$0xf]
  %s230 = scalar_lea.vmem %s0, 131
  %v231 = vld [vmem:[%s230] ss:$8 sm:$0xf0]
  %vm232 = vcmask 1047556
  %v233 = vsel %vm232, %v231, %v229
  %234 = vrot.lane.b32.xlu0 %v233, 24
  %v235 = vpop.permute.xlu0 %234
  %vm236 = vcmask 261312
  %s237 = scalar_lea.vmem %s1, 16
  %238 = vst.msk [vmem:[%s237] sm:$0xff] %vm236, %v235
  %s239 = scalar_lea.vmem %s0, 195
  %v240 = vld [vmem:[%s239] ss:$8 sm:$0xf]
  %s241 = scalar_lea.vmem %s0, 195
  %v242 = vld [vmem:[%s241] ss:$8 sm:$0xf0]
  %vm243 = vcmask 1047556
  %v244 = vsel %vm243, %v242, %v240
  %245 = vrot.lane.b32.xlu0 %v244, 24
  %v246 = vpop.permute.xlu0 %245
  %vm247 = vcmask 261312
  %s248 = scalar_lea.vmem %s1, 24
  %249 = vst.msk [vmem:[%s248] sm:$0xff] %vm247, %v246
  %s250 = scalar_lea.vmem %s0, 2
  %v251 = vld [vmem:[%s250] ss:$8 sm:$0xf]
  %s252 = scalar_lea.vmem %s0, 2
  %v253 = vld [vmem:[%s252] ss:$8 sm:$0xf0]
  %vm254 = vcmask 1047556
  %v255 = vsel %vm254, %v253, %v251
  %256 = vrot.lane.b32.xlu0 %v255, 16
  %v257 = vpop.permute.xlu0 %256
  %vm258 = vcmask 195712
  %259 = vst.msk [vmem:[%s1] sm:$0xff] %vm258, %v257
  %s260 = scalar_lea.vmem %s0, 66
  %v261 = vld [vmem:[%s260] ss:$8 sm:$0xf]
  %s262 = scalar_lea.vmem %s0, 66
  %v263 = vld [vmem:[%s262] ss:$8 sm:$0xf0]
  %vm264 = vcmask 1047556
  %v265 = vsel %vm264, %v263, %v261
  %266 = vrot.lane.b32.xlu0 %v265, 16
  %v267 = vpop.permute.xlu0 %266
  %vm268 = vcmask 195712
  %s269 = scalar_lea.vmem %s1, 8
  %270 = vst.msk [vmem:[%s269] sm:$0xff] %vm268, %v267
  %s271 = scalar_lea.vmem %s0, 130
  %v272 = vld [vmem:[%s271] ss:$8 sm:$0xf]
  %s273 = scalar_lea.vmem %s0, 130
  %v274 = vld [vmem:[%s273] ss:$8 sm:$0xf0]
  %vm275 = vcmask 1047556
  %v276 = vsel %vm275, %v274, %v272
  %277 = vrot.lane.b32.xlu0 %v276, 16
  %v278 = vpop.permute.xlu0 %277
  %vm279 = vcmask 195712
  %s280 = scalar_lea.vmem %s1, 16
  %281 = vst.msk [vmem:[%s280] sm:$0xff] %vm279, %v278
  %s282 = scalar_lea.vmem %s0, 194
  %v283 = vld [vmem:[%s282] ss:$8 sm:$0xf]
  %s284 = scalar_lea.vmem %s0, 194
  %v285 = vld [vmem:[%s284] ss:$8 sm:$0xf0]
  %vm286 = vcmask 1047556
  %v287 = vsel %vm286, %v285, %v283
  %288 = vrot.lane.b32.xlu0 %v287, 16
  %v289 = vpop.permute.xlu0 %288
  %vm290 = vcmask 195712
  %s291 = scalar_lea.vmem %s1, 24
  %292 = vst.msk [vmem:[%s291] sm:$0xff] %vm290, %v289
  %s293 = scalar_lea.vmem %s0, 1
  %v294 = vld [vmem:[%s293] ss:$8 sm:$0xf]
  %s295 = scalar_lea.vmem %s0, 1
  %v296 = vld [vmem:[%s295] ss:$8 sm:$0xf0]
  %vm297 = vcmask 1047556
  %v298 = vsel %vm297, %v296, %v294
  %299 = vrot.lane.b32.xlu0 %v298, 8
  %v300 = vpop.permute.xlu0 %299
  %vm301 = vcmask 130112
  %302 = vst.msk [vmem:[%s1] sm:$0xff] %vm301, %v300
  %s303 = scalar_lea.vmem %s0, 65
  %v304 = vld [vmem:[%s303] ss:$8 sm:$0xf]
  %s305 = scalar_lea.vmem %s0, 65
  %v306 = vld [vmem:[%s305] ss:$8 sm:$0xf0]
  %vm307 = vcmask 1047556
  %v308 = vsel %vm307, %v306, %v304
  %309 = vrot.lane.b32.xlu0 %v308, 8
  %v310 = vpop.permute.xlu0 %309
  %vm311 = vcmask 130112
  %s312 = scalar_lea.vmem %s1, 8
  %313 = vst.msk [vmem:[%s312] sm:$0xff] %vm311, %v310
  %s314 = scalar_lea.vmem %s0, 129
  %v315 = vld [vmem:[%s314] ss:$8 sm:$0xf]
  %s316 = scalar_lea.vmem %s0, 129
  %v317 = vld [vmem:[%s316] ss:$8 sm:$0xf0]
  %vm318 = vcmask 1047556
  %v319 = vsel %vm318, %v317, %v315
  %320 = vrot.lane.b32.xlu0 %v319, 8
  %v321 = vpop.permute.xlu0 %320
  %vm322 = vcmask 130112
  %s323 = scalar_lea.vmem %s1, 16
  %324 = vst.msk [vmem:[%s323] sm:$0xff] %vm322, %v321
  %s325 = scalar_lea.vmem %s0, 193
  %v326 = vld [vmem:[%s325] ss:$8 sm:$0xf]
  %s327 = scalar_lea.vmem %s0, 193
  %v328 = vld [vmem:[%s327] ss:$8 sm:$0xf0]
  %vm329 = vcmask 1047556
  %v330 = vsel %vm329, %v328, %v326
  %331 = vrot.lane.b32.xlu0 %v330, 8
  %v332 = vpop.permute.xlu0 %331
  %vm333 = vcmask 130112
  %s334 = scalar_lea.vmem %s1, 24
  %335 = vst.msk [vmem:[%s334] sm:$0xff] %vm333, %v332

// kernel: mul.18
$region0: #{mul.18}
  %s0 = inlined_call_operand.vmem [shape: f32[8,8,8,8], index: 0, kind: input, shape index: {}]
  %s1 = inlined_call_operand.vmem [shape: f32[64,64], index: 1, kind: output, shape index: {}]
  %v2 = vld [vmem:[%s0] ss:$8 sm:$0xf]
  %v3 = vld [vmem:[%s0] ss:$8 sm:$0xf0]
  %vm4 = vcmask 1047556
  %v5 = vsel %vm4, %v3, %v2
  %vm6 = vcmask 64512
  %7 = vst.msk [vmem:[%s1] sm:$0xff] %vm6, %v5
  %s8 = scalar_lea.vmem %s0, 64
  %v9 = vld [vmem:[%s8] ss:$8 sm:$0xf]
  %s10 = scalar_lea.vmem %s0, 64
  %v11 = vld [vmem:[%s10] ss:$8 sm:$0xf0]
  %vm12 = vcmask 1047556
  %v13 = vsel %vm12, %v11, %v9
  %vm14 = vcmask 64512
  %s15 = scalar_lea.vmem %s1, 8
  %16 = vst.msk [vmem:[%s15] sm:$0xff] %vm14, %v13
  %s17 = scalar_lea.vmem %s0, 128
  %v18 = vld [vmem:[%s17] ss:$8 sm:$0xf]
  %s19 = scalar_lea.vmem %s0, 128
  %v20 = vld [vmem:[%s19] ss:$8 sm:$0xf0]
  %vm21 = vcmask 1047556
  %v22 = vsel %vm21, %v20, %v18
  %vm23 = vcmask 64512
  %s24 = scalar_lea.vmem %s1, 16
  %25 = vst.msk [vmem:[%s24] sm:$0xff] %vm23, %v22
  %s26 = scalar_lea.vmem %s0, 192
  %v27 = vld [vmem:[%s26] ss:$8 sm:$0xf]
  %s28 = scalar_lea.vmem %s0, 192
  %v29 = vld [vmem:[%s28] ss:$8 sm:$0xf0]
  %vm30 = vcmask 1047556
  %v31 = vsel %vm30, %v29, %v27
  %vm32 = vcmask 64512
  %s33 = scalar_lea.vmem %s1, 24
  %34 = vst.msk [vmem:[%s33] sm:$0xff] %vm32, %v31
  %s35 = scalar_lea.vmem %s0, 256
  %v36 = vld [vmem:[%s35] ss:$8 sm:$0xf]
  %s37 = scalar_lea.vmem %s0, 256
  %v38 = vld [vmem:[%s37] ss:$8 sm:$0xf0]
  %vm39 = vcmask 1047556
  %v40 = vsel %vm39, %v38, %v36
  %vm41 = vcmask 64512
  %s42 = scalar_lea.vmem %s1, 32
  %43 = vst.msk [vmem:[%s42] sm:$0xff] %vm41, %v40
  %s44 = scalar_lea.vmem %s0, 320
  %v45 = vld [vmem:[%s44] ss:$8 sm:$0xf]
  %s46 = scalar_lea.vmem %s0, 320
  %v47 = vld [vmem:[%s46] ss:$8 sm:$0xf0]
  %vm48 = vcmask 1047556
  %v49 = vsel %vm48, %v47, %v45
  %vm50 = vcmask 64512
  %s51 = scalar_lea.vmem %s1, 40
  %52 = vst.msk [vmem:[%s51] sm:$0xff] %vm50, %v49
  %s53 = scalar_lea.vmem %s0, 384
  %v54 = vld [vmem:[%s53] ss:$8 sm:$0xf]
  %s55 = scalar_lea.vmem %s0, 384
  %v56 = vld [vmem:[%s55] ss:$8 sm:$0xf0]
  %vm57 = vcmask 1047556
  %v58 = vsel %vm57, %v56, %v54
  %vm59 = vcmask 64512
  %s60 = scalar_lea.vmem %s1, 48
  %61 = vst.msk [vmem:[%s60] sm:$0xff] %vm59, %v58
  %s62 = scalar_lea.vmem %s0, 448
  %v63 = vld [vmem:[%s62] ss:$8 sm:$0xf]
  %s64 = scalar_lea.vmem %s0, 448
  %v65 = vld [vmem:[%s64] ss:$8 sm:$0xf0]
  %vm66 = vcmask 1047556
  %v67 = vsel %vm66, %v65, %v63
  %vm68 = vcmask 64512
  %s69 = scalar_lea.vmem %s1, 56
  %70 = vst.msk [vmem:[%s69] sm:$0xff] %vm68, %v67
  %s71 = scalar_lea.vmem %s0, 7
  %v72 = vld [vmem:[%s71] ss:$8 sm:$0xf]
  %s73 = scalar_lea.vmem %s0, 7
  %v74 = vld [vmem:[%s73] ss:$8 sm:$0xf0]
  %vm75 = vcmask 1047556
  %v76 = vsel %vm75, %v74, %v72
  %77 = vrot.lane.b32.xlu0 %v76, 56
  %v78 = vpop.permute.xlu0 %77
  %vm79 = vcmask 523712
  %80 = vst.msk [vmem:[%s1] sm:$0xff] %vm79, %v78
  %s81 = scalar_lea.vmem %s0, 263
  %v82 = vld [vmem:[%s81] ss:$8 sm:$0xf]
  %s83 = scalar_lea.vmem %s0, 263
  %v84 = vld [vmem:[%s83] ss:$8 sm:$0xf0]
  %vm85 = vcmask 1047556
  %v86 = vsel %vm85, %v84, %v82
  %87 = vrot.lane.b32.xlu0 %v86, 56
  %v88 = vpop.permute.xlu0 %87
  %vm89 = vcmask 523712
  %s90 = scalar_lea.vmem %s1, 32
  %91 = vst.msk [vmem:[%s90] sm:$0xff] %vm89, %v88
  %s92 = scalar_lea.vmem %s0, 71
  %v93 = vld [vmem:[%s92] ss:$8 sm:$0xf]
  %s94 = scalar_lea.vmem %s0, 71
  %v95 = vld [vmem:[%s94] ss:$8 sm:$0xf0]
  %vm96 = vcmask 1047556
  %v97 = vsel %vm96, %v95, %v93
  %98 = vrot.lane.b32.xlu0 %v97, 56
  %v99 = vpop.permute.xlu0 %98
  %vm100 = vcmask 523712
  %s101 = scalar_lea.vmem %s1, 8
  %102 = vst.msk [vmem:[%s101] sm:$0xff] %vm100, %v99
  %s103 = scalar_lea.vmem %s0, 327
  %v104 = vld [vmem:[%s103] ss:$8 sm:$0xf]
  %s105 = scalar_lea.vmem %s0, 327
  %v106 = vld [vmem:[%s105] ss:$8 sm:$0xf0]
  %vm107 = vcmask 1047556
  %v108 = vsel %vm107, %v106, %v104
  %109 = vrot.lane.b32.xlu0 %v108, 56
  %v110 = vpop.permute.xlu0 %109
  %vm111 = vcmask 523712
  %s112 = scalar_lea.vmem %s1, 40
  %113 = vst.msk [vmem:[%s112] sm:$0xff] %vm111, %v110
  %s114 = scalar_lea.vmem %s0, 135
  %v115 = vld [vmem:[%s114] ss:$8 sm:$0xf]
  %s116 = scalar_lea.vmem %s0, 135
  %v117 = vld [vmem:[%s116] ss:$8 sm:$0xf0]
  %vm118 = vcmask 1047556
  %v119 = vsel %vm118, %v117, %v115
  %120 = vrot.lane.b32.xlu0 %v119, 56
  %v121 = vpop.permute.xlu0 %120
  %vm122 = vcmask 523712
  %s123 = scalar_lea.vmem %s1, 16
  %124 = vst.msk [vmem:[%s123] sm:$0xff] %vm122, %v121
  %s125 = scalar_lea.vmem %s0, 391
  %v126 = vld [vmem:[%s125] ss:$8 sm:$0xf]
  %s127 = scalar_lea.vmem %s0, 391
  %v128 = vld [vmem:[%s127] ss:$8 sm:$0xf0]
  %vm129 = vcmask 1047556
  %v130 = vsel %vm129, %v128, %v126
  %131 = vrot.lane.b32.xlu0 %v130, 56
  %v132 = vpop.permute.xlu0 %131
  %vm133 = vcmask 523712
  %s134 = scalar_lea.vmem %s1, 48
  %135 = vst.msk [vmem:[%s134] sm:$0xff] %vm133, %v132
  %s136 = scalar_lea.vmem %s0, 199
  %v137 = vld [vmem:[%s136] ss:$8 sm:$0xf]
  %s138 = scalar_lea.vmem %s0, 199
  %v139 = vld [vmem:[%s138] ss:$8 sm:$0xf0]
  %vm140 = vcmask 1047556
  %v141 = vsel %vm140, %v139, %v137
  %142 = vrot.lane.b32.xlu0 %v141, 56
  %v143 = vpop.permute.xlu0 %142
  %vm144 = vcmask 523712
  %s145 = scalar_lea.vmem %s1, 24
  %146 = vst.msk [vmem:[%s145] sm:$0xff] %vm144, %v143
  %s147 = scalar_lea.vmem %s0, 455
  %v148 = vld [vmem:[%s147] ss:$8 sm:$0xf]
  %s149 = scalar_lea.vmem %s0, 455
  %v150 = vld [vmem:[%s149] ss:$8 sm:$0xf0]
  %vm151 = vcmask 1047556
  %v152 = vsel %vm151, %v150, %v148
  %153 = vrot.lane.b32.xlu0 %v152, 56
  %v154 = vpop.permute.xlu0 %153
  %vm155 = vcmask 523712
  %s156 = scalar_lea.vmem %s1, 56
  %157 = vst.msk [vmem:[%s156] sm:$0xff] %vm155, %v154
  %s158 = scalar_lea.vmem %s0, 6
  %v159 = vld [vmem:[%s158] ss:$8 sm:$0xf]
  %s160 = scalar_lea.vmem %s0, 6
  %v161 = vld [vmem:[%s160] ss:$8 sm:$0xf0]
  %vm162 = vcmask 1047556
  %v163 = vsel %vm162, %v161, %v159
  %164 = vrot.lane.b32.xlu0 %v163, 48
  %v165 = vpop.permute.xlu0 %164
  %vm166 = vcmask 458112
  %167 = vst.msk [vmem:[%s1] sm:$0xff] %vm166, %v165
  %s168 = scalar_lea.vmem %s0, 262
  %v169 = vld [vmem:[%s168] ss:$8 sm:$0xf]
  %s170 = scalar_lea.vmem %s0, 262
  %v171 = vld [vmem:[%s170] ss:$8 sm:$0xf0]
  %vm172 = vcmask 1047556
  %v173 = vsel %vm172, %v171, %v169
  %174 = vrot.lane.b32.xlu0 %v173, 48
  %v175 = vpop.permute.xlu0 %174
  %vm176 = vcmask 458112
  %s177 = scalar_lea.vmem %s1, 32
  %178 = vst.msk [vmem:[%s177] sm:$0xff] %vm176, %v175
  %s179 = scalar_lea.vmem %s0, 70
  %v180 = vld [vmem:[%s179] ss:$8 sm:$0xf]
  %s181 = scalar_lea.vmem %s0, 70
  %v182 = vld [vmem:[%s181] ss:$8 sm:$0xf0]
  %vm183 = vcmask 1047556
  %v184 = vsel %vm183, %v182, %v180
  %185 = vrot.lane.b32.xlu0 %v184, 48
  %v186 = vpop.permute.xlu0 %185
  %vm187 = vcmask 458112
  %s188 = scalar_lea.vmem %s1, 8
  %189 = vst.msk [vmem:[%s188] sm:$0xff] %vm187, %v186
  %s190 = scalar_lea.vmem %s0, 326
  %v191 = vld [vmem:[%s190] ss:$8 sm:$0xf]
  %s192 = scalar_lea.vmem %s0, 326
  %v193 = vld [vmem:[%s192] ss:$8 sm:$0xf0]
  %vm194 = vcmask 1047556
  %v195 = vsel %vm194, %v193, %v191
  %196 = vrot.lane.b32.xlu0 %v195, 48
  %v197 = vpop.permute.xlu0 %196
  %vm198 = vcmask 458112
  %s199 = scalar_lea.vmem %s1, 40
  %200 = vst.msk [vmem:[%s199] sm:$0xff] %vm198, %v197
  %s201 = scalar_lea.vmem %s0, 134
  %v202 = vld [vmem:[%s201] ss:$8 sm:$0xf]
  %s203 = scalar_lea.vmem %s0, 134
  %v204 = vld [vmem:[%s203] ss:$8 sm:$0xf0]
  %vm205 = vcmask 1047556
  %v206 = vsel %vm205, %v204, %v202
  %207 = vrot.lane.b32.xlu0 %v206, 48
  %v208 = vpop.permute.xlu0 %207
  %vm209 = vcmask 458112
  %s210 = scalar_lea.vmem %s1, 16
  %211 = vst.msk [vmem:[%s210] sm:$0xff] %vm209, %v208
  %s212 = scalar_lea.vmem %s0, 390
  %v213 = vld [vmem:[%s212] ss:$8 sm:$0xf]
  %s214 = scalar_lea.vmem %s0, 390
  %v215 = vld [vmem:[%s214] ss:$8 sm:$0xf0]
  %vm216 = vcmask 1047556
  %v217 = vsel %vm216, %v215, %v213
  %218 = vrot.lane.b32.xlu0 %v217, 48
  %v219 = vpop.permute.xlu0 %218
  %vm220 = vcmask 458112
  %s221 = scalar_lea.vmem %s1, 48
  %222 = vst.msk [vmem:[%s221] sm:$0xff] %vm220, %v219
  %s223 = scalar_lea.vmem %s0, 198
  %v224 = vld [vmem:[%s223] ss:$8 sm:$0xf]
  %s225 = scalar_lea.vmem %s0, 198
  %v226 = vld [vmem:[%s225] ss:$8 sm:$0xf0]
  %vm227 = vcmask 1047556
  %v228 = vsel %vm227, %v226, %v224
  %229 = vrot.lane.b32.xlu0 %v228, 48
  %v230 = vpop.permute.xlu0 %229
  %vm231 = vcmask 458112
  %s232 = scalar_lea.vmem %s1, 24
  %233 = vst.msk [vmem:[%s232] sm:$0xff] %vm231, %v230
  %s234 = scalar_lea.vmem %s0, 454
  %v235 = vld [vmem:[%s234] ss:$8 sm:$0xf]
  %s236 = scalar_lea.vmem %s0, 454
  %v237 = vld [vmem:[%s236] ss:$8 sm:$0xf0]
  %vm238 = vcmask 1047556
  %v239 = vsel %vm238, %v237, %v235
  %240 = vrot.lane.b32.xlu0 %v239, 48
  %v241 = vpop.permute.xlu0 %240
  %vm242 = vcmask 458112
  %s243 = scalar_lea.vmem %s1, 56
  %244 = vst.msk [vmem:[%s243] sm:$0xff] %vm242, %v241
  %s245 = scalar_lea.vmem %s0, 5
  %v246 = vld [vmem:[%s245] ss:$8 sm:$0xf]
  %s247 = scalar_lea.vmem %s0, 5
  %v248 = vld [vmem:[%s247] ss:$8 sm:$0xf0]
  %vm249 = vcmask 1047556
  %v250 = vsel %vm249, %v248, %v246
  %251 = vrot.lane.b32.xlu0 %v250, 40
  %v252 = vpop.permute.xlu0 %251
  %vm253 = vcmask 392512
  %254 = vst.msk [vmem:[%s1] sm:$0xff] %vm253, %v252
  %s255 = scalar_lea.vmem %s0, 261
  %v256 = vld [vmem:[%s255] ss:$8 sm:$0xf]
  %s257 = scalar_lea.vmem %s0, 261
  %v258 = vld [vmem:[%s257] ss:$8 sm:$0xf0]
  %vm259 = vcmask 1047556
  %v260 = vsel %vm259, %v258, %v256
  %261 = vrot.lane.b32.xlu0 %v260, 40
  %v262 = vpop.permute.xlu0 %261
  %vm263 = vcmask 392512
  %s264 = scalar_lea.vmem %s1, 32
  %265 = vst.msk [vmem:[%s264] sm:$0xff] %vm263, %v262
  %s266 = scalar_lea.vmem %s0, 69
  %v267 = vld [vmem:[%s266] ss:$8 sm:$0xf]
  %s268 = scalar_lea.vmem %s0, 69
  %v269 = vld [vmem:[%s268] ss:$8 sm:$0xf0]
  %vm270 = vcmask 1047556
  %v271 = vsel %vm270, %v269, %v267
  %272 = vrot.lane.b32.xlu0 %v271, 40
  %v273 = vpop.permute.xlu0 %272
  %vm274 = vcmask 392512
  %s275 = scalar_lea.vmem %s1, 8
  %276 = vst.msk [vmem:[%s275] sm:$0xff] %vm274, %v273
  %s277 = scalar_lea.vmem %s0, 325
  %v278 = vld [vmem:[%s277] ss:$8 sm:$0xf]
  %s279 = scalar_lea.vmem %s0, 325
  %v280 = vld [vmem:[%s279] ss:$8 sm:$0xf0]
  %vm281 = vcmask 1047556
  %v282 = vsel %vm281, %v280, %v278
  %283 = vrot.lane.b32.xlu0 %v282, 40
  %v284 = vpop.permute.xlu0 %283
  %vm285 = vcmask 392512
  %s286 = scalar_lea.vmem %s1, 40
  %287 = vst.msk [vmem:[%s286] sm:$0xff] %vm285, %v284
  %s288 = scalar_lea.vmem %s0, 133
  %v289 = vld [vmem:[%s288] ss:$8 sm:$0xf]
  %s290 = scalar_lea.vmem %s0, 133
  %v291 = vld [vmem:[%s290] ss:$8 sm:$0xf0]
  %vm292 = vcmask 1047556
  %v293 = vsel %vm292, %v291, %v289
  %294 = vrot.lane.b32.xlu0 %v293, 40
  %v295 = vpop.permute.xlu0 %294
  %vm296 = vcmask 392512
  %s297 = scalar_lea.vmem %s1, 16
  %298 = vst.msk [vmem:[%s297] sm:$0xff] %vm296, %v295
  %s299 = scalar_lea.vmem %s0, 389
  %v300 = vld [vmem:[%s299] ss:$8 sm:$0xf]
  %s301 = scalar_lea.vmem %s0, 389
  %v302 = vld [vmem:[%s301] ss:$8 sm:$0xf0]
  %vm303 = vcmask 1047556
  %v304 = vsel %vm303, %v302, %v300
  %305 = vrot.lane.b32.xlu0 %v304, 40
  %v306 = vpop.permute.xlu0 %305
  %vm307 = vcmask 392512
  %s308 = scalar_lea.vmem %s1, 48
  %309 = vst.msk [vmem:[%s308] sm:$0xff] %vm307, %v306
  %s310 = scalar_lea.vmem %s0, 197
  %v311 = vld [vmem:[%s310] ss:$8 sm:$0xf]
  %s312 = scalar_lea.vmem %s0, 197
  %v313 = vld [vmem:[%s312] ss:$8 sm:$0xf0]
  %vm314 = vcmask 1047556
  %v315 = vsel %vm314, %v313, %v311
  %316 = vrot.lane.b32.xlu0 %v315, 40
  %v317 = vpop.permute.xlu0 %316
  %vm318 = vcmask 392512
  %s319 = scalar_lea.vmem %s1, 24
  %320 = vst.msk [vmem:[%s319] sm:$0xff] %vm318, %v317
  %s321 = scalar_lea.vmem %s0, 453
  %v322 = vld [vmem:[%s321] ss:$8 sm:$0xf]
  %s323 = scalar_lea.vmem %s0, 453
  %v324 = vld [vmem:[%s323] ss:$8 sm:$0xf0]
  %vm325 = vcmask 1047556
  %v326 = vsel %vm325, %v324, %v322
  %327 = vrot.lane.b32.xlu0 %v326, 40
  %v328 = vpop.permute.xlu0 %327
  %vm329 = vcmask 392512
  %s330 = scalar_lea.vmem %s1, 56
  %331 = vst.msk [vmem:[%s330] sm:$0xff] %vm329, %v328
  %s332 = scalar_lea.vmem %s0, 4
  %v333 = vld [vmem:[%s332] ss:$8 sm:$0xf]
  %s334 = scalar_lea.vmem %s0, 4
  %v335 = vld [vmem:[%s334] ss:$8 sm:$0xf0]
  %vm336 = vcmask 1047556
  %v337 = vsel %vm336, %v335, %v333
  %338 = vrot.lane.b32.xlu0 %v337, 32
  %v339 = vpop.permute.xlu0 %338
  %vm340 = vcmask 326912
  %341 = vst.msk [vmem:[%s1] sm:$0xff] %vm340, %v339
  %s342 = scalar_lea.vmem %s0, 260
  %v343 = vld [vmem:[%s342] ss:$8 sm:$0xf]
  %s344 = scalar_lea.vmem %s0, 260
  %v345 = vld [vmem:[%s344] ss:$8 sm:$0xf0]
  %vm346 = vcmask 1047556
  %v347 = vsel %vm346, %v345, %v343
  %348 = vrot.lane.b32.xlu0 %v347, 32
  %v349 = vpop.permute.xlu0 %348
  %vm350 = vcmask 326912
  %s351 = scalar_lea.vmem %s1, 32
  %352 = vst.msk [vmem:[%s351] sm:$0xff] %vm350, %v349
  %s353 = scalar_lea.vmem %s0, 68
  %v354 = vld [vmem:[%s353] ss:$8 sm:$0xf]
  %s355 = scalar_lea.vmem %s0, 68
  %v356 = vld [vmem:[%s355] ss:$8 sm:$0xf0]
  %vm357 = vcmask 1047556
  %v358 = vsel %vm357, %v356, %v354
  %359 = vrot.lane.b32.xlu0 %v358, 32
  %v360 = vpop.permute.xlu0 %359
  %vm361 = vcmask 326912
  %s362 = scalar_lea.vmem %s1, 8
  %363 = vst.msk [vmem:[%s362] sm:$0xff] %vm361, %v360
  %s364 = scalar_lea.vmem %s0, 324
  %v365 = vld [vmem:[%s364] ss:$8 sm:$0xf]
  %s366 = scalar_lea.vmem %s0, 324
  %v367 = vld [vmem:[%s366] ss:$8 sm:$0xf0]
  %vm368 = vcmask 1047556
  %v369 = vsel %vm368, %v367, %v365
  %370 = vrot.lane.b32.xlu0 %v369, 32
  %v371 = vpop.permute.xlu0 %370
  %vm372 = vcmask 326912
  %s373 = scalar_lea.vmem %s1, 40
  %374 = vst.msk [vmem:[%s373] sm:$0xff] %vm372, %v371
  %s375 = scalar_lea.vmem %s0, 132
  %v376 = vld [vmem:[%s375] ss:$8 sm:$0xf]
  %s377 = scalar_lea.vmem %s0, 132
  %v378 = vld [vmem:[%s377] ss:$8 sm:$0xf0]
  %vm379 = vcmask 1047556
  %v380 = vsel %vm379, %v378, %v376
  %381 = vrot.lane.b32.xlu0 %v380, 32
  %v382 = vpop.permute.xlu0 %381
  %vm383 = vcmask 326912
  %s384 = scalar_lea.vmem %s1, 16
  %385 = vst.msk [vmem:[%s384] sm:$0xff] %vm383, %v382
  %s386 = scalar_lea.vmem %s0, 388
  %v387 = vld [vmem:[%s386] ss:$8 sm:$0xf]
  %s388 = scalar_lea.vmem %s0, 388
  %v389 = vld [vmem:[%s388] ss:$8 sm:$0xf0]
  %vm390 = vcmask 1047556
  %v391 = vsel %vm390, %v389, %v387
  %392 = vrot.lane.b32.xlu0 %v391, 32
  %v393 = vpop.permute.xlu0 %392
  %vm394 = vcmask 326912
  %s395 = scalar_lea.vmem %s1, 48
  %396 = vst.msk [vmem:[%s395] sm:$0xff] %vm394, %v393
  %s397 = scalar_lea.vmem %s0, 196
  %v398 = vld [vmem:[%s397] ss:$8 sm:$0xf]
  %s399 = scalar_lea.vmem %s0, 196
  %v400 = vld [vmem:[%s399] ss:$8 sm:$0xf0]
  %vm401 = vcmask 1047556
  %v402 = vsel %vm401, %v400, %v398
  %403 = vrot.lane.b32.xlu0 %v402, 32
  %v404 = vpop.permute.xlu0 %403
  %vm405 = vcmask 326912
  %s406 = scalar_lea.vmem %s1, 24
  %407 = vst.msk [vmem:[%s406] sm:$0xff] %vm405, %v404
  %s408 = scalar_lea.vmem %s0, 452
  %v409 = vld [vmem:[%s408] ss:$8 sm:$0xf]
  %s410 = scalar_lea.vmem %s0, 452
  %v411 = vld [vmem:[%s410] ss:$8 sm:$0xf0]
  %vm412 = vcmask 1047556
  %v413 = vsel %vm412, %v411, %v409
  %414 = vrot.lane.b32.xlu0 %v413, 32
  %v415 = vpop.permute.xlu0 %414
  %vm416 = vcmask 326912
  %s417 = scalar_lea.vmem %s1, 56
  %418 = vst.msk [vmem:[%s417] sm:$0xff] %vm416, %v415
  %s419 = scalar_lea.vmem %s0, 3
  %v420 = vld [vmem:[%s419] ss:$8 sm:$0xf]
  %s421 = scalar_lea.vmem %s0, 3
  %v422 = vld [vmem:[%s421] ss:$8 sm:$0xf0]
  %vm423 = vcmask 1047556
  %v424 = vsel %vm423, %v422, %v420
  %425 = vrot.lane.b32.xlu0 %v424, 24
  %v426 = vpop.permute.xlu0 %425
  %vm427 = vcmask 261312
  %428 = vst.msk [vmem:[%s1] sm:$0xff] %vm427, %v426
  %s429 = scalar_lea.vmem %s0, 259
  %v430 = vld [vmem:[%s429] ss:$8 sm:$0xf]
  %s431 = scalar_lea.vmem %s0, 259
  %v432 = vld [vmem:[%s431] ss:$8 sm:$0xf0]
  %vm433 = vcmask 1047556
  %v434 = vsel %vm433, %v432, %v430
  %435 = vrot.lane.b32.xlu0 %v434, 24
  %v436 = vpop.permute.xlu0 %435
  %vm437 = vcmask 261312
  %s438 = scalar_lea.vmem %s1, 32
  %439 = vst.msk [vmem:[%s438] sm:$0xff] %vm437, %v436
  %s440 = scalar_lea.vmem %s0, 67
  %v441 = vld [vmem:[%s440] ss:$8 sm:$0xf]
  %s442 = scalar_lea.vmem %s0, 67
  %v443 = vld [vmem:[%s442] ss:$8 sm:$0xf0]
  %vm444 = vcmask 1047556
  %v445 = vsel %vm444, %v443, %v441
  %446 = vrot.lane.b32.xlu0 %v445, 24
  %v447 = vpop.permute.xlu0 %446
  %vm448 = vcmask 261312
  %s449 = scalar_lea.vmem %s1, 8
  %450 = vst.msk [vmem:[%s449] sm:$0xff] %vm448, %v447
  %s451 = scalar_lea.vmem %s0, 323
  %v452 = vld [vmem:[%s451] ss:$8 sm:$0xf]
  %s453 = scalar_lea.vmem %s0, 323
  %v454 = vld [vmem:[%s453] ss:$8 sm:$0xf0]
  %vm455 = vcmask 1047556
  %v456 = vsel %vm455, %v454, %v452
  %457 = vrot.lane.b32.xlu0 %v456, 24
  %v458 = vpop.permute.xlu0 %457
  %vm459 = vcmask 261312
  %s460 = scalar_lea.vmem %s1, 40
  %461 = vst.msk [vmem:[%s460] sm:$0xff] %vm459, %v458
  %s462 = scalar_lea.vmem %s0, 131
  %v463 = vld [vmem:[%s462] ss:$8 sm:$0xf]
  %s464 = scalar_lea.vmem %s0, 131
  %v465 = vld [vmem:[%s464] ss:$8 sm:$0xf0]
  %vm466 = vcmask 1047556
  %v467 = vsel %vm466, %v465, %v463
  %468 = vrot.lane.b32.xlu0 %v467, 24
  %v469 = vpop.permute.xlu0 %468
  %vm470 = vcmask 261312
  %s471 = scalar_lea.vmem %s1, 16
  %472 = vst.msk [vmem:[%s471] sm:$0xff] %vm470, %v469
  %s473 = scalar_lea.vmem %s0, 387
  %v474 = vld [vmem:[%s473] ss:$8 sm:$0xf]
  %s475 = scalar_lea.vmem %s0, 387
  %v476 = vld [vmem:[%s475] ss:$8 sm:$0xf0]
  %vm477 = vcmask 1047556
  %v478 = vsel %vm477, %v476, %v474
  %479 = vrot.lane.b32.xlu0 %v478, 24
  %v480 = vpop.permute.xlu0 %479
  %vm481 = vcmask 261312
  %s482 = scalar_lea.vmem %s1, 48
  %483 = vst.msk [vmem:[%s482] sm:$0xff] %vm481, %v480
  %s484 = scalar_lea.vmem %s0, 195
  %v485 = vld [vmem:[%s484] ss:$8 sm:$0xf]
  %s486 = scalar_lea.vmem %s0, 195
  %v487 = vld [vmem:[%s486] ss:$8 sm:$0xf0]
  %vm488 = vcmask 1047556
  %v489 = vsel %vm488, %v487, %v485
  %490 = vrot.lane.b32.xlu0 %v489, 24
  %v491 = vpop.permute.xlu0 %490
  %vm492 = vcmask 261312
  %s493 = scalar_lea.vmem %s1, 24
  %494 = vst.msk [vmem:[%s493] sm:$0xff] %vm492, %v491
  %s495 = scalar_lea.vmem %s0, 451
  %v496 = vld [vmem:[%s495] ss:$8 sm:$0xf]
  %s497 = scalar_lea.vmem %s0, 451
  %v498 = vld [vmem:[%s497] ss:$8 sm:$0xf0]
  %vm499 = vcmask 1047556
  %v500 = vsel %vm499, %v498, %v496
  %501 = vrot.lane.b32.xlu0 %v500, 24
  %v502 = vpop.permute.xlu0 %501
  %vm503 = vcmask 261312
  %s504 = scalar_lea.vmem %s1, 56
  %505 = vst.msk [vmem:[%s504] sm:$0xff] %vm503, %v502
  %s506 = scalar_lea.vmem %s0, 2
  %v507 = vld [vmem:[%s506] ss:$8 sm:$0xf]
  %s508 = scalar_lea.vmem %s0, 2
  %v509 = vld [vmem:[%s508] ss:$8 sm:$0xf0]
  %vm510 = vcmask 1047556
  %v511 = vsel %vm510, %v509, %v507
  %512 = vrot.lane.b32.xlu0 %v511, 16
  %v513 = vpop.permute.xlu0 %512
  %vm514 = vcmask 195712
  %515 = vst.msk [vmem:[%s1] sm:$0xff] %vm514, %v513
  %s516 = scalar_lea.vmem %s0, 258
  %v517 = vld [vmem:[%s516] ss:$8 sm:$0xf]
  %s518 = scalar_lea.vmem %s0, 258
  %v519 = vld [vmem:[%s518] ss:$8 sm:$0xf0]
  %vm520 = vcmask 1047556
  %v521 = vsel %vm520, %v519, %v517
  %522 = vrot.lane.b32.xlu0 %v521, 16
  %v523 = vpop.permute.xlu0 %522
  %vm524 = vcmask 195712
  %s525 = scalar_lea.vmem %s1, 32
  %526 = vst.msk [vmem:[%s525] sm:$0xff] %vm524, %v523
  %s527 = scalar_lea.vmem %s0, 66
  %v528 = vld [vmem:[%s527] ss:$8 sm:$0xf]
  %s529 = scalar_lea.vmem %s0, 66
  %v530 = vld [vmem:[%s529] ss:$8 sm:$0xf0]
  %vm531 = vcmask 1047556
  %v532 = vsel %vm531, %v530, %v528
  %533 = vrot.lane.b32.xlu0 %v532, 16
  %v534 = vpop.permute.xlu0 %533
  %vm535 = vcmask 195712
  %s536 = scalar_lea.vmem %s1, 8
  %537 = vst.msk [vmem:[%s536] sm:$0xff] %vm535, %v534
  %s538 = scalar_lea.vmem %s0, 322
  %v539 = vld [vmem:[%s538] ss:$8 sm:$0xf]
  %s540 = scalar_lea.vmem %s0, 322
  %v541 = vld [vmem:[%s540] ss:$8 sm:$0xf0]
  %vm542 = vcmask 1047556
  %v543 = vsel %vm542, %v541, %v539
  %544 = vrot.lane.b32.xlu0 %v543, 16
  %v545 = vpop.permute.xlu0 %544
  %vm546 = vcmask 195712
  %s547 = scalar_lea.vmem %s1, 40
  %548 = vst.msk [vmem:[%s547] sm:$0xff] %vm546, %v545
  %s549 = scalar_lea.vmem %s0, 130
  %v550 = vld [vmem:[%s549] ss:$8 sm:$0xf]
  %s551 = scalar_lea.vmem %s0, 130
  %v552 = vld [vmem:[%s551] ss:$8 sm:$0xf0]
  %vm553 = vcmask 1047556
  %v554 = vsel %vm553, %v552, %v550
  %555 = vrot.lane.b32.xlu0 %v554, 16
  %v556 = vpop.permute.xlu0 %555
  %vm557 = vcmask 195712
  %s558 = scalar_lea.vmem %s1, 16
  %559 = vst.msk [vmem:[%s558] sm:$0xff] %vm557, %v556
  %s560 = scalar_lea.vmem %s0, 386
  %v561 = vld [vmem:[%s560] ss:$8 sm:$0xf]
  %s562 = scalar_lea.vmem %s0, 386
  %v563 = vld [vmem:[%s562] ss:$8 sm:$0xf0]
  %vm564 = vcmask 1047556
  %v565 = vsel %vm564, %v563, %v561
  %566 = vrot.lane.b32.xlu0 %v565, 16
  %v567 = vpop.permute.xlu0 %566
  %vm568 = vcmask 195712
  %s569 = scalar_lea.vmem %s1, 48
  %570 = vst.msk [vmem:[%s569] sm:$0xff] %vm568, %v567
  %s571 = scalar_lea.vmem %s0, 194
  %v572 = vld [vmem:[%s571] ss:$8 sm:$0xf]
  %s573 = scalar_lea.vmem %s0, 194
  %v574 = vld [vmem:[%s573] ss:$8 sm:$0xf0]
  %vm575 = vcmask 1047556
  %v576 = vsel %vm575, %v574, %v572
  %577 = vrot.lane.b32.xlu0 %v576, 16
  %v578 = vpop.permute.xlu0 %577
  %vm579 = vcmask 195712
  %s580 = scalar_lea.vmem %s1, 24
  %581 = vst.msk [vmem:[%s580] sm:$0xff] %vm579, %v578
  %s582 = scalar_lea.vmem %s0, 450
  %v583 = vld [vmem:[%s582] ss:$8 sm:$0xf]
  %s584 = scalar_lea.vmem %s0, 450
  %v585 = vld [vmem:[%s584] ss:$8 sm:$0xf0]
  %vm586 = vcmask 1047556
  %v587 = vsel %vm586, %v585, %v583
  %588 = vrot.lane.b32.xlu0 %v587, 16
  %v589 = vpop.permute.xlu0 %588
  %vm590 = vcmask 195712
  %s591 = scalar_lea.vmem %s1, 56
  %592 = vst.msk [vmem:[%s591] sm:$0xff] %vm590, %v589
  %s593 = scalar_lea.vmem %s0, 1
  %v594 = vld [vmem:[%s593] ss:$8 sm:$0xf]
  %s595 = scalar_lea.vmem %s0, 1
  %v596 = vld [vmem:[%s595] ss:$8 sm:$0xf0]
  %vm597 = vcmask 1047556
  %v598 = vsel %vm597, %v596, %v594
  %599 = vrot.lane.b32.xlu0 %v598, 8
  %v600 = vpop.permute.xlu0 %599
  %vm601 = vcmask 130112
  %602 = vst.msk [vmem:[%s1] sm:$0xff] %vm601, %v600
  %s603 = scalar_lea.vmem %s0, 257
  %v604 = vld [vmem:[%s603] ss:$8 sm:$0xf]
  %s605 = scalar_lea.vmem %s0, 257
  %v606 = vld [vmem:[%s605] ss:$8 sm:$0xf0]
  %vm607 = vcmask 1047556
  %v608 = vsel %vm607, %v606, %v604
  %609 = vrot.lane.b32.xlu0 %v608, 8
  %v610 = vpop.permute.xlu0 %609
  %vm611 = vcmask 130112
  %s612 = scalar_lea.vmem %s1, 32
  %613 = vst.msk [vmem:[%s612] sm:$0xff] %vm611, %v610
  %s614 = scalar_lea.vmem %s0, 65
  %v615 = vld [vmem:[%s614] ss:$8 sm:$0xf]
  %s616 = scalar_lea.vmem %s0, 65
  %v617 = vld [vmem:[%s616] ss:$8 sm:$0xf0]
  %vm618 = vcmask 1047556
  %v619 = vsel %vm618, %v617, %v615
  %620 = vrot.lane.b32.xlu0 %v619, 8
  %v621 = vpop.permute.xlu0 %620
  %vm622 = vcmask 130112
  %s623 = scalar_lea.vmem %s1, 8
  %624 = vst.msk [vmem:[%s623] sm:$0xff] %vm622, %v621
  %s625 = scalar_lea.vmem %s0, 321
  %v626 = vld [vmem:[%s625] ss:$8 sm:$0xf]
  %s627 = scalar_lea.vmem %s0, 321
  %v628 = vld [vmem:[%s627] ss:$8 sm:$0xf0]
  %vm629 = vcmask 1047556
  %v630 = vsel %vm629, %v628, %v626
  %631 = vrot.lane.b32.xlu0 %v630, 8
  %v632 = vpop.permute.xlu0 %631
  %vm633 = vcmask 130112
  %s634 = scalar_lea.vmem %s1, 40
  %635 = vst.msk [vmem:[%s634] sm:$0xff] %vm633, %v632
  %s636 = scalar_lea.vmem %s0, 129
  %v637 = vld [vmem:[%s636] ss:$8 sm:$0xf]
  %s638 = scalar_lea.vmem %s0, 129
  %v639 = vld [vmem:[%s638] ss:$8 sm:$0xf0]
  %vm640 = vcmask 1047556
  %v641 = vsel %vm640, %v639, %v637
  %642 = vrot.lane.b32.xlu0 %v641, 8
  %v643 = vpop.permute.xlu0 %642
  %vm644 = vcmask 130112
  %s645 = scalar_lea.vmem %s1, 16
  %646 = vst.msk [vmem:[%s645] sm:$0xff] %vm644, %v643
  %s647 = scalar_lea.vmem %s0, 385
  %v648 = vld [vmem:[%s647] ss:$8 sm:$0xf]
  %s649 = scalar_lea.vmem %s0, 385
  %v650 = vld [vmem:[%s649] ss:$8 sm:$0xf0]
  %vm651 = vcmask 1047556
  %v652 = vsel %vm651, %v650, %v648
  %653 = vrot.lane.b32.xlu0 %v652, 8
  %v654 = vpop.permute.xlu0 %653
  %vm655 = vcmask 130112
  %s656 = scalar_lea.vmem %s1, 48
  %657 = vst.msk [vmem:[%s656] sm:$0xff] %vm655, %v654
  %s658 = scalar_lea.vmem %s0, 193
  %v659 = vld [vmem:[%s658] ss:$8 sm:$0xf]
  %s660 = scalar_lea.vmem %s0, 193
  %v661 = vld [vmem:[%s660] ss:$8 sm:$0xf0]
  %vm662 = vcmask 1047556
  %v663 = vsel %vm662, %v661, %v659
  %664 = vrot.lane.b32.xlu0 %v663, 8
  %v665 = vpop.permute.xlu0 %664
  %vm666 = vcmask 130112
  %s667 = scalar_lea.vmem %s1, 24
  %668 = vst.msk [vmem:[%s667] sm:$0xff] %vm666, %v665
  %s669 = scalar_lea.vmem %s0, 449
  %v670 = vld [vmem:[%s669] ss:$8 sm:$0xf]
  %s671 = scalar_lea.vmem %s0, 449
  %v672 = vld [vmem:[%s671] ss:$8 sm:$0xf0]
  %vm673 = vcmask 1047556
  %v674 = vsel %vm673, %v672, %v670
  %675 = vrot.lane.b32.xlu0 %v674, 8
  %v676 = vpop.permute.xlu0 %675
  %vm677 = vcmask 130112
  %s678 = scalar_lea.vmem %s1, 56
  %679 = vst.msk [vmem:[%s678] sm:$0xff] %vm677, %v676

// kernel: conv3d_up_forward.1
$region0: #{conv3d_up_forward.1}
  #allocation0 [shape = 'u32[]', space=smem, size = 0x4, offset = 0x4, fixed_abs, tag = 'smem constant byte address 0x4 - core index']
  #allocation1 [shape = 'u32[144,128]{1,0:T(1,128)}', space=vmem, size = 0x12000, scoped, tag = 'internal scratch']
  %s0 = inlined_call_operand.vmem [shape: bf16[2,32,64], index: 0, kind: input, shape index: {}]
  %s1 = inlined_call_operand.vmem [shape: bf16[64,128], index: 1, kind: input, shape index: {}]
  %s2 = inlined_call_operand.vmem [shape: bf16[128,128], index: 2, kind: input, shape index: {}]
  %s3 = inlined_call_operand.vmem [shape: f32[128,8], index: 3, kind: input, shape index: {}]
  %s4 = inlined_call_operand.vmem [shape: f32[8,128], index: 4, kind: input, shape index: {}]
  %s5 = inlined_call_operand.vmem [shape: f32[2,32,128], index: 5, kind: output, shape index: {0}]
  %s6 = inlined_call_operand.vmem [shape: f32[2,1,128], index: 6, kind: output, shape index: {1}]
  %7 = xla_tuple %s5, %s6
  %s8 = sld [smem:[#allocation0]]
  $region61: #{conv3d_up_forward.1} parent=0
    _
  %s10 = ssub.s32 1, %s8
  %s11 = scalar_select 0, %s10, %s8
  loop: start=0, step=1, limit=4
  $region2: #{conv3d_up_forward.1} parent=0 // loop_pre_header
    _
  $region3: #{conv3d_up_forward.1} parent=0 // loop_header
    %s13 = sphi 0, %s17
    %p14 = scmp.ge.s32.totalorder %s13, 4
    %s23 = sphi 0, %s25
    %s26 = sphi 0, %s23
    %s27 = sphi 0, %s26
    %s43 = sphi 0, %s27
    %s47 = sphi 0, %s47
    %s49 = sphi 0, %s47
    %s50 = sphi 0, %s49
    %s64 = sphi 0, %s50
    %s68 = sphi 0, %s68
    %s70 = sphi 0, %s68
    %s71 = sphi 0, %s70
    %s85 = sphi 0, %s71
    %s89 = sphi 0, %s89
    %s91 = sphi 0, %s89
    %s92 = sphi 0, %s91
    %s106 = sphi 0, %s92
    %s110 = sphi 0, %s110
    %s112 = sphi 0, %s110
    %s113 = sphi 0, %s112
    %s127 = sphi 0, %s113
    %s133 = sphi 0, %s135
    %s136 = sphi 0, %s133
    %s137 = sphi 0, %s136
    %s153 = sphi 0, %s137
    %s159 = sphi 0, %s161
    %s162 = sphi 0, %s159
    %s163 = sphi 0, %s162
    %s179 = sphi 0, %s163
  $region4: #{conv3d_up_forward.1} parent=0 // loop_header_branch
    %16 = sbr.rel (%p14) target = $region8
  $region5: #{conv3d_up_forward.1} parent=0 // loop_body
    %s18 = ssub.s32 %s13, 1
    %s19 = ssub.s32 %s13, 2
    %s20 = sadd.s32 %s13, 1
    %s21 = ssub.s32 %s13, %s20
    %p22 = scmp.eq.s32.totalorder %s21, 0
    %s24 = sadd.s32 %s23, 1
    %s25 = scalar_select %p22, %s23, %s24
    %p28 = pneg %p22
    %p29 = scmp.eq.s32.totalorder %s13, 1
    %p30 = por %p28, %p29
    %p31 = scmp.ne.s32.totalorder %s23, %s26
    %p32 = scmp.eq.s32.totalorder %s13, 0
    %p33 = por %p31, %p32
    %p34 = scmp.ne.s32.totalorder %s23, %s26
    %p35 = scmp.eq.s32.totalorder %s18, 1
    %p36 = por %p34, %p35
    %p37 = scmp.ne.s32.totalorder %s26, %s27
    %p38 = scmp.eq.s32.totalorder %s18, 0
    %p39 = por %p37, %p38
    %p40 = scmp.ne.s32.totalorder %s26, %s27
    %p41 = scmp.eq.s32.totalorder %s19, 1
    %p42 = por %p40, %p41
    %p44 = scmp.ne.s32.totalorder %s27, %s43
    %p45 = scmp.eq.s32.totalorder %s19, 0
    %p46 = por %p44, %p45
    %s48 = sadd.s32 %s47, 1
    %p51 = scmp.eq.s32.totalorder %s13, 1
    %p52 = scmp.ne.s32.totalorder %s47, %s49
    %p53 = scmp.eq.s32.totalorder %s13, 0
    %p54 = por %p52, %p53
    %p55 = scmp.ne.s32.totalorder %s47, %s49
    %p56 = scmp.eq.s32.totalorder %s18, 1
    %p57 = por %p55, %p56
    %p58 = scmp.ne.s32.totalorder %s49, %s50
    %p59 = scmp.eq.s32.totalorder %s18, 0
    %p60 = por %p58, %p59
    %p61 = scmp.ne.s32.totalorder %s49, %s50
    %p62 = scmp.eq.s32.totalorder %s19, 1
    %p63 = por %p61, %p62
    %p65 = scmp.ne.s32.totalorder %s50, %s64
    %p66 = scmp.eq.s32.totalorder %s19, 0
    %p67 = por %p65, %p66
    %s69 = sadd.s32 %s68, 1
    %p72 = scmp.eq.s32.totalorder %s13, 1
    %p73 = scmp.ne.s32.totalorder %s68, %s70
    %p74 = scmp.eq.s32.totalorder %s13, 0
    %p75 = por %p73, %p74
    %p76 = scmp.ne.s32.totalorder %s68, %s70
    %p77 = scmp.eq.s32.totalorder %s18, 1
    %p78 = por %p76, %p77
    %p79 = scmp.ne.s32.totalorder %s70, %s71
    %p80 = scmp.eq.s32.totalorder %s18, 0
    %p81 = por %p79, %p80
    %p82 = scmp.ne.s32.totalorder %s70, %s71
    %p83 = scmp.eq.s32.totalorder %s19, 1
    %p84 = por %p82, %p83
    %p86 = scmp.ne.s32.totalorder %s71, %s85
    %p87 = scmp.eq.s32.totalorder %s19, 0
    %p88 = por %p86, %p87
    %s90 = sadd.s32 %s89, 1
    %p93 = scmp.eq.s32.totalorder %s13, 1
    %p94 = scmp.ne.s32.totalorder %s89, %s91
    %p95 = scmp.eq.s32.totalorder %s13, 0
    %p96 = por %p94, %p95
    %p97 = scmp.ne.s32.totalorder %s89, %s91
    %p98 = scmp.eq.s32.totalorder %s18, 1
    %p99 = por %p97, %p98
    %p100 = scmp.ne.s32.totalorder %s91, %s92
    %p101 = scmp.eq.s32.totalorder %s18, 0
    %p102 = por %p100, %p101
    %p103 = scmp.ne.s32.totalorder %s91, %s92
    %p104 = scmp.eq.s32.totalorder %s19, 1
    %p105 = por %p103, %p104
    %p107 = scmp.ne.s32.totalorder %s92, %s106
    %p108 = scmp.eq.s32.totalorder %s19, 0
    %p109 = por %p107, %p108
    %s111 = sadd.s32 %s110, 1
    %p114 = scmp.eq.s32.totalorder %s13, 1
    %p115 = scmp.ne.s32.totalorder %s110, %s112
    %p116 = scmp.eq.s32.totalorder %s13, 0
    %p117 = por %p115, %p116
    %p118 = scmp.ne.s32.totalorder %s110, %s112
    %p119 = scmp.eq.s32.totalorder %s18, 1
    %p120 = por %p118, %p119
    %p121 = scmp.ne.s32.totalorder %s112, %s113
    %p122 = scmp.eq.s32.totalorder %s18, 0
    %p123 = por %p121, %p122
    %p124 = scmp.ne.s32.totalorder %s112, %s113
    %p125 = scmp.eq.s32.totalorder %s19, 1
    %p126 = por %p124, %p125
    %p128 = scmp.ne.s32.totalorder %s113, %s127
    %p129 = scmp.eq.s32.totalorder %s19, 0
    %p130 = por %p128, %p129
    %s131 = ssub.s32 %s13, %s20
    %p132 = scmp.eq.s32.totalorder %s131, 0
    %s134 = sadd.s32 %s133, 1
    %s135 = scalar_select %p132, %s133, %s134
    %p138 = pneg %p132
    %p139 = scmp.eq.s32.totalorder %s13, 1
    %p140 = por %p138, %p139
    %p141 = scmp.ne.s32.totalorder %s133, %s136
    %p142 = scmp.eq.s32.totalorder %s13, 0
    %p143 = por %p141, %p142
    %p144 = scmp.ne.s32.totalorder %s133, %s136
    %p145 = scmp.eq.s32.totalorder %s18, 1
    %p146 = por %p144, %p145
    %p147 = scmp.ne.s32.totalorder %s136, %s137
    %p148 = scmp.eq.s32.totalorder %s18, 0
    %p149 = por %p147, %p148
    %p150 = scmp.ne.s32.totalorder %s136, %s137
    %p151 = scmp.eq.s32.totalorder %s19, 1
    %p152 = por %p150, %p151
    %p154 = scmp.ne.s32.totalorder %s137, %s153
    %p155 = scmp.eq.s32.totalorder %s19, 0
    %p156 = por %p154, %p155
    %s157 = ssub.s32 %s13, %s20
    %p158 = scmp.eq.s32.totalorder %s157, 0
    %s160 = sadd.s32 %s159, 1
    %s161 = scalar_select %p158, %s159, %s160
    %p164 = pneg %p158
    %p165 = scmp.eq.s32.totalorder %s13, 1
    %p166 = por %p164, %p165
    %p167 = scmp.ne.s32.totalorder %s159, %s162
    %p168 = scmp.eq.s32.totalorder %s13, 0
    %p169 = por %p167, %p168
    %p170 = scmp.ne.s32.totalorder %s159, %s162
    %p171 = scmp.eq.s32.totalorder %s18, 1
    %p172 = por %p170, %p171
    %p173 = scmp.ne.s32.totalorder %s162, %s163
    %p174 = scmp.eq.s32.totalorder %s18, 0
    %p175 = por %p173, %p174
    %p176 = scmp.ne.s32.totalorder %s162, %s163
    %p177 = scmp.eq.s32.totalorder %s19, 1
    %p178 = por %p176, %p177
    %p180 = scmp.ne.s32.totalorder %s163, %s179
    %p181 = scmp.eq.s32.totalorder %s19, 0
    %p182 = por %p180, %p181
    %p183 = scmp.le.s32.totalorder 1, %s13
    %p184 = scmp.lt.s32.totalorder %s13, 3
    %p185 = pnand %p183, %p184
    %p186 = pneg %p185
    // Predicated region
    $region9: #{conv3d_up_forward.1} parent=5 // pred_check
      _
    $region10: #{conv3d_up_forward.1} parent=5 // pred_check_branch
      %188 = sbr.rel (%p185) target = $region12
    $region11: #{conv3d_up_forward.1} parent=5 // pred_region
      %s189 = ssub.s32 %s13, 1
      // Predicated region
      $region13: #{conv3d_up_forward.1} parent=11 // pred_check
        %p190 = pneg %p60
      $region14: #{conv3d_up_forward.1} parent=11 // pred_check_branch
        %192 = sbr.rel (%p190) target = $region16
      $region15: #{conv3d_up_forward.1} parent=11 // pred_region
        _
      $region16: #{conv3d_up_forward.1} parent=11 // pred_fallthru
        _
      // Predicated region
      $region17: #{conv3d_up_forward.1} parent=11 // pred_check
        %p193 = pneg %p81
      $region18: #{conv3d_up_forward.1} parent=11 // pred_check_branch
        %195 = sbr.rel (%p193) target = $region20
      $region19: #{conv3d_up_forward.1} parent=11 // pred_region
        _
      $region20: #{conv3d_up_forward.1} parent=11 // pred_fallthru
        _
      // Predicated region
      $region21: #{conv3d_up_forward.1} parent=11 // pred_check
        %p196 = pneg %p102
      $region22: #{conv3d_up_forward.1} parent=11 // pred_check_branch
        %198 = sbr.rel (%p196) target = $region24
      $region23: #{conv3d_up_forward.1} parent=11 // pred_region
        _
      $region24: #{conv3d_up_forward.1} parent=11 // pred_fallthru
        _
      // Predicated region
      $region25: #{conv3d_up_forward.1} parent=11 // pred_check
        %p199 = pneg %p123
      $region26: #{conv3d_up_forward.1} parent=11 // pred_check_branch
        %201 = sbr.rel (%p199) target = $region28
      $region27: #{conv3d_up_forward.1} parent=11 // pred_region
        _
      $region28: #{conv3d_up_forward.1} parent=11 // pred_fallthru
        _
    $region12: #{conv3d_up_forward.1} parent=5 // pred_fallthru
      _
    %p202 = scmp.lt.s32.totalorder %s13, 2
    // Predicated region
    $region29: #{conv3d_up_forward.1} parent=5 // pred_check
      %p203 = pneg %p202
    $region30: #{conv3d_up_forward.1} parent=5 // pred_check_branch
      %205 = sbr.rel (%p203) target = $region32
    $region31: #{conv3d_up_forward.1} parent=5 // pred_region
      // Predicated region
      $region33: #{conv3d_up_forward.1} parent=31 // pred_check
        %p206 = pneg %p33
      $region34: #{conv3d_up_forward.1} parent=31 // pred_check_branch
        %208 = sbr.rel (%p206) target = $region36
      $region35: #{conv3d_up_forward.1} parent=31 // pred_region
        %p209 = scmp.lt.s32.totalorder %s13, 1
        %s210 = scalar_select %p209, %s13, 1
        %s211 = smul.addr %s210, 4
        %s212 = smul.addr %s211, 4
        %s213 = scalar_lea.vmem %s0, %s212
      $region36: #{conv3d_up_forward.1} parent=31 // pred_fallthru
        _
    $region32: #{conv3d_up_forward.1} parent=5 // pred_fallthru
      _
    %p214 = scmp.le.s32.totalorder 1, %s13
    %p215 = scmp.lt.s32.totalorder %s13, 3
    %p216 = pnand %p214, %p215
    %p217 = pneg %p216
    // Predicated region
    $region37: #{conv3d_up_forward.1} parent=5 // pred_check
      _
    $region38: #{conv3d_up_forward.1} parent=5 // pred_check_branch
      %219 = sbr.rel (%p216) target = $region40
    $region39: #{conv3d_up_forward.1} parent=5 // pred_region
      %s220 = ssub.s32 %s13, 1
      %p221 = scmp.lt.s32.totalorder %s18, 1
      %s222 = scalar_select %p221, %s18, 1
      %s223 = smul.addr %s222, 4
      %s224 = smul.addr %s223, 4
      %s225 = scalar_lea.vmem %s0, %s224
      %p226 = pneg %p39
      %p227 = pneg %p36
      %p228 = pneg %p60
      %p229 = pneg %p57
      %p230 = pneg %p81
      %p231 = pneg %p78
      %p232 = pneg %p102
      %p233 = pneg %p99
      %p234 = pneg %p123
      %p235 = pneg %p120
      %p236 = pneg %p149
      %p237 = pneg %p146
      %p238 = scmp.lt.s32.totalorder %s18, 1
      %s239 = scalar_select %p238, %s18, 1
      %s240 = smul.addr %s239, 4
      %s241 = smul.addr %s240, 8
      %s242 = scalar_lea.vmem %s5, %s241
      %p243 = pneg %p175
      %p244 = pneg %p172
      %p245 = scmp.lt.s32.totalorder %s18, 1
      %s246 = scalar_select %p245, %s18, 1
      %s247 = scalar_lea.vmem %s6, %s246
      %p248 = scmp.lt.s32.totalorder %s18, 1
      %s249 = scalar_select %p248, %s18, 1
      %s250 = smul.addr %s249, 4
      %s251 = smul.addr %s250, 4
      %s252 = scalar_lea.vmem %s0, %s251
      %p253 = scmp.lt.s32.totalorder %s18, 1
      %s254 = scalar_select %p253, %s18, 1
      %s255 = smul.addr %s254, 4
      %s256 = smul.addr %s255, 8
      %s257 = scalar_lea.vmem %s5, %s256
      %p258 = scmp.lt.s32.totalorder %s18, 1
      %s259 = scalar_select %p258, %s18, 1
      %s260 = scalar_lea.vmem %s6, %s259
      %v262 = vld [vmem:[%s252] sm:$0xf]
      %v263 = vld [vmem:[%s252 + $0x4] sm:$0xf]
      %v264 = vld [vmem:[%s252 + $0x8] sm:$0xf]
      %v265 = vld [vmem:[%s252 + $0xc] sm:$0xf]
      %v266 = vld [vmem:[%s3] sm:$0xff]
      %v267 = vld [vmem:[%s3 + $0x8] sm:$0xff]
      %v268 = vld [vmem:[%s3 + $0x10] sm:$0xff]
      %v269 = vld [vmem:[%s3 + $0x18] sm:$0xff]
      %v270 = vld [vmem:[%s3 + $0x20] sm:$0xff]
      %v271 = vld [vmem:[%s3 + $0x28] sm:$0xff]
      %v272 = vld [vmem:[%s3 + $0x30] sm:$0xff]
      %v273 = vld [vmem:[%s3 + $0x38] sm:$0xff]
      %v274 = vld [vmem:[%s3 + $0x40] sm:$0xff]
      %v275 = vld [vmem:[%s3 + $0x48] sm:$0xff]
      %v276 = vld [vmem:[%s3 + $0x50] sm:$0xff]
      %v277 = vld [vmem:[%s3 + $0x58] sm:$0xff]
      %v278 = vld [vmem:[%s3 + $0x60] sm:$0xff]
      %v279 = vld [vmem:[%s3 + $0x68] sm:$0xff]
      %v280 = vld [vmem:[%s3 + $0x70] sm:$0xff]
      %v281 = vld [vmem:[%s3 + $0x78] sm:$0xff]
      %v282 = vld [vmem:[%s4] sm:$0xff]
      %v283 = vld [vmem:[%s1] sm:$0xf]
      %v284 = vld [vmem:[%s1 + $0x4] sm:$0xf]
      %v285 = vld [vmem:[%s1 + $0x8] sm:$0xf]
      %v286 = vld [vmem:[%s1 + $0xc] sm:$0xf]
      %v287 = vld [vmem:[%s1 + $0x10] sm:$0xf]
      %v288 = vld [vmem:[%s1 + $0x14] sm:$0xf]
      %v289 = vld [vmem:[%s1 + $0x18] sm:$0xf]
      %v290 = vld [vmem:[%s1 + $0x1c] sm:$0xf]
      %v295 = vunpack.c.l.b16 %v262
      %v296 = vunpack.c.l.b16 %v263
      %v297 = vunpack.c.l.b16 %v264
      %v298 = vunpack.c.l.b16 %v265
      %v299 = vpack.c.b16 %v296, %v295
      %v300 = vpack.c.b16 %v298, %v297
      %v309 = vunpack.c.l.b16 %v283
      %v310 = vunpack.c.l.b16 %v284
      %v311 = vunpack.c.l.b16 %v285
      %v312 = vunpack.c.l.b16 %v286
      %v313 = vunpack.c.l.b16 %v287
      %v314 = vunpack.c.l.b16 %v288
      %v315 = vunpack.c.l.b16 %v289
      %v316 = vunpack.c.l.b16 %v290
      %v317 = vpack.c.b16 %v310, %v309
      %v318 = vpack.c.b16 %v312, %v311
      %v319 = vpack.c.b16 %v314, %v313
      %v320 = vpack.c.b16 %v316, %v315
      %vm325 = vcmask 523264
      %v327 = vsel %vm325, %v299, 0
      %v330 = vsel %vm325, %v300, 0
      %332 = vmatprep.subr.bf16.mxu0 0
      %333 = vmatpush1.bf16.msra.mxu0 %v317
      %334 = vmatprep.subr.bf16.mxu0 0
      %335 = vmatpush1.bf16.msra.mxu0 %v318
      %336 = vmatprep.subr.bf16.mxu0 0
      %337 = vmatpush1.bf16.msra.mxu0 %v319
      %338 = vmatprep.subr.bf16.mxu0 0
      %339 = vmatpush1.bf16.msra.mxu0 %v320
      %340 = vmatprep.subr.bf16.mxu0 0
      %341 = vmatpush1.bf16.msra.mxu0 0
      %342 = vmatprep.subr.bf16.mxu0 0
      %343 = vmatpush1.bf16.msra.mxu0 0
      %344 = vmatprep.subr.bf16.mxu0 0
      %345 = vmatpush1.bf16.msra.mxu0 0
      %346 = vmatprep.subr.bf16.mxu0 0
      %347 = vmatpush1.bf16.msra.mxu0 0
      %348 = vmatprep.subr.bf16.mxu0 0
      %349 = vmatpush1.bf16.msra.mxu0 0
      %350 = vmatprep.subr.bf16.mxu0 0
      %351 = vmatpush1.bf16.msra.mxu0 0
      %352 = vmatprep.subr.bf16.mxu0 0
      %353 = vmatpush1.bf16.msra.mxu0 0
      %354 = vmatprep.subr.bf16.mxu0 0
      %355 = vmatpush1.bf16.msra.mxu0 0
      %356 = vmatprep.subr.bf16.mxu0 0
      %357 = vmatpush1.bf16.msra.mxu0 0
      %358 = vmatprep.subr.bf16.mxu0 0
      %359 = vmatpush1.bf16.msra.mxu0 0
      %360 = vmatprep.subr.bf16.mxu0 0
      %361 = vmatpush1.bf16.msra.mxu0 0
      %362 = vmatprep.subr.bf16.mxu0 0
      %363 = vmatpush1.bf16.msra.mxu0 0
      %364 = vmatprep.mubr.bf16.mxu0 0
      %365 = vmatmul.mubr.bf16.gmra.mrb[0].mxu0 %v327
      %v366 = vpop.f32.mrb[0].mxu0
      %v367 = vadd.f32 0.0, %v366
      %v368 = vpop.f32.mrb[0].mxu0
      %v369 = vpop.f32.mrb[0].mxu0
      %v370 = vadd.f32 0.0, %v369
      %v371 = vpop.f32.mrb[0].mxu0
      %372 = vmatprep.mubr.bf16.mxu0 0
      %373 = vmatmul.mubr.bf16.gmra.mrb[0].mxu0 %v330
      %v374 = vpop.f32.mrb[0].mxu0
      %v375 = vadd.f32 0.0, %v374
      %v376 = vpop.f32.mrb[0].mxu0
      %v377 = vpop.f32.mrb[0].mxu0
      %v378 = vadd.f32 0.0, %v377
      %v379 = vpop.f32.mrb[0].mxu0
      %380 = vdwg.mxu0
      %vm381 = vcmask 261120
      %v383 = vsel %vm381, 1.0, 0
      %385 = vmatprep.subr.mxu0 0.0
      %386 = vmatpush1.msra.mxu0 %v367
      %387 = vmatprep.subr.mxu0 0.0
      %388 = vmatpush1.msra.mxu0 %v370
      %389 = vmatprep.subr.mxu0 0.0
      %390 = vmatpush1.msra.mxu0 %v375
      %391 = vmatprep.subr.mxu0 0.0
      %392 = vmatpush1.msra.mxu0 %v378
      %393 = vmatprep.subr.mxu0 0.0
      %394 = vmatpush1.msra.mxu0 0.0
      %395 = vmatprep.subr.mxu0 0.0
      %396 = vmatpush1.msra.mxu0 0.0
      %397 = vmatprep.subr.mxu0 0.0
      %398 = vmatpush1.msra.mxu0 0.0
      %399 = vmatprep.subr.mxu0 0.0
      %400 = vmatpush1.msra.mxu0 0.0
      %401 = vmatprep.subr.mxu0 0.0
      %402 = vmatpush1.msra.mxu0 0.0
      %403 = vmatprep.subr.mxu0 0.0
      %404 = vmatpush1.msra.mxu0 0.0
      %405 = vmatprep.subr.mxu0 0.0
      %406 = vmatpush1.msra.mxu0 0.0
      %407 = vmatprep.subr.mxu0 0.0
      %408 = vmatpush1.msra.mxu0 0.0
      %409 = vmatprep.subr.mxu0 0.0
      %410 = vmatpush1.msra.mxu0 0.0
      %411 = vmatprep.subr.mxu0 0.0
      %412 = vmatpush1.msra.mxu0 0.0
      %413 = vmatprep.subr.mxu0 0.0
      %414 = vmatpush1.msra.mxu0 0.0
      %415 = vmatprep.subr.mxu0 0.0
      %416 = vmatpush1.msra.mxu0 0.0
      %417 = vmatprep.subr.mxu0 0.0
      %418 = vmatpush1.msra.mxu0 0.0
      %419 = vmatprep.subr.mxu0 0.0
      %420 = vmatpush1.msra.mxu0 0.0
      %421 = vmatprep.subr.mxu0 0.0
      %422 = vmatpush1.msra.mxu0 0.0
      %423 = vmatprep.subr.mxu0 0.0
      %424 = vmatpush1.msra.mxu0 0.0
      %425 = vmatprep.subr.mxu0 0.0
      %426 = vmatpush1.msra.mxu0 0.0
      %427 = vmatprep.subr.mxu0 0.0
      %428 = vmatpush1.msra.mxu0 0.0
      %429 = vmatprep.subr.mxu0 0.0
      %430 = vmatpush1.msra.mxu0 0.0
      %431 = vmatprep.subr.mxu0 0.0
      %432 = vmatpush1.msra.mxu0 0.0
      %433 = vmatprep.subr.mxu0 0.0
      %434 = vmatpush1.msra.mxu0 0.0
      %435 = vmatprep.subr.mxu0 0.0
      %436 = vmatpush1.msra.mxu0 0.0
      %437 = vmatprep.subr.mxu0 0.0
      %438 = vmatpush1.msra.mxu0 0.0
      %439 = vmatprep.subr.mxu0 0.0
      %440 = vmatpush1.msra.mxu0 0.0
      %441 = vmatprep.subr.mxu0 0.0
      %442 = vmatpush1.msra.mxu0 0.0
      %443 = vmatprep.subr.mxu0 0.0
      %444 = vmatpush1.msra.mxu0 0.0
      %445 = vmatprep.subr.mxu0 0.0
      %446 = vmatpush1.msra.mxu0 0.0
      %447 = vmatprep.subr.mxu0 0.0
      %448 = vmatpush1.msra.mxu0 0.0
      %449 = vmatprep.mubr.f32.mxu0 0.0
      %450 = vmatmul.mubr.f32.gmra.mrb[0].mxu0 %v383
      %v451 = vpop.f32.mrb[0].mxu0
      %v452 = vadd.f32 0.0, %v451
      %v453 = vpop.f32.mrb[0].mxu0
      %454 = vdwg.mxu0
      %v455 = vmul.f32 %v367, %v367
      %v456 = vmul.f32 %v370, %v370
      %v457 = vmul.f32 %v375, %v375
      %v458 = vmul.f32 %v378, %v378
      %459 = vmatprep.subr.mxu0 0.0
      %460 = vmatpush1.msra.mxu0 %v455
      %461 = vmatprep.subr.mxu0 0.0
      %462 = vmatpush1.msra.mxu0 %v456
      %463 = vmatprep.subr.mxu0 0.0
      %464 = vmatpush1.msra.mxu0 %v457
      %465 = vmatprep.subr.mxu0 0.0
      %466 = vmatpush1.msra.mxu0 %v458
      %467 = vmatprep.subr.mxu0 0.0
      %468 = vmatpush1.msra.mxu0 0.0
      %469 = vmatprep.subr.mxu0 0.0
      %470 = vmatpush1.msra.mxu0 0.0
      %471 = vmatprep.subr.mxu0 0.0
      %472 = vmatpush1.msra.mxu0 0.0
      %473 = vmatprep.subr.mxu0 0.0
      %474 = vmatpush1.msra.mxu0 0.0
      %475 = vmatprep.subr.mxu0 0.0
      %476 = vmatpush1.msra.mxu0 0.0
      %477 = vmatprep.subr.mxu0 0.0
      %478 = vmatpush1.msra.mxu0 0.0
      %479 = vmatprep.subr.mxu0 0.0
      %480 = vmatpush1.msra.mxu0 0.0
      %481 = vmatprep.subr.mxu0 0.0
      %482 = vmatpush1.msra.mxu0 0.0
      %483 = vmatprep.subr.mxu0 0.0
      %484 = vmatpush1.msra.mxu0 0.0
      %485 = vmatprep.subr.mxu0 0.0
      %486 = vmatpush1.msra.mxu0 0.0
      %487 = vmatprep.subr.mxu0 0.0
      %488 = vmatpush1.msra.mxu0 0.0
      %489 = vmatprep.subr.mxu0 0.0
      %490 = vmatpush1.msra.mxu0 0.0
      %491 = vmatprep.subr.mxu0 0.0
      %492 = vmatpush1.msra.mxu0 0.0
      %493 = vmatprep.subr.mxu0 0.0
      %494 = vmatpush1.msra.mxu0 0.0
      %495 = vmatprep.subr.mxu0 0.0
      %496 = vmatpush1.msra.mxu0 0.0
      %497 = vmatprep.subr.mxu0 0.0
      %498 = vmatpush1.msra.mxu0 0.0
      %499 = vmatprep.subr.mxu0 0.0
      %500 = vmatpush1.msra.mxu0 0.0
      %501 = vmatprep.subr.mxu0 0.0
      %502 = vmatpush1.msra.mxu0 0.0
      %503 = vmatprep.subr.mxu0 0.0
      %504 = vmatpush1.msra.mxu0 0.0
      %505 = vmatprep.subr.mxu0 0.0
      %506 = vmatpush1.msra.mxu0 0.0
      %507 = vmatprep.subr.mxu0 0.0
      %508 = vmatpush1.msra.mxu0 0.0
      %509 = vmatprep.subr.mxu0 0.0
      %510 = vmatpush1.msra.mxu0 0.0
      %511 = vmatprep.subr.mxu0 0.0
      %512 = vmatpush1.msra.mxu0 0.0
      %513 = vmatprep.subr.mxu0 0.0
      %514 = vmatpush1.msra.mxu0 0.0
      %515 = vmatprep.subr.mxu0 0.0
      %516 = vmatpush1.msra.mxu0 0.0
      %517 = vmatprep.subr.mxu0 0.0
      %518 = vmatpush1.msra.mxu0 0.0
      %519 = vmatprep.subr.mxu0 0.0
      %520 = vmatpush1.msra.mxu0 0.0
      %521 = vmatprep.subr.mxu0 0.0
      %522 = vmatpush1.msra.mxu0 0.0
      %523 = vmatprep.mubr.f32.mxu0 0.0
      %524 = vmatmul.mubr.f32.gmra.mrb[0].mxu0 %v383
      %v525 = vpop.f32.mrb[0].mxu0
      %v526 = vadd.f32 0.0, %v525
      %v527 = vpop.f32.mrb[0].mxu0
      %528 = vdwg.mxu0
      %529 = vmatprep.subr.mxu0 0.0
      %530 = vmatpush1.msra.mxu0 %v266
      %531 = vmatprep.subr.mxu0 0.0
      %532 = vmatpush1.msra.mxu0 %v267
      %533 = vmatprep.subr.mxu0 0.0
      %534 = vmatpush1.msra.mxu0 %v268
      %535 = vmatprep.subr.mxu0 0.0
      %536 = vmatpush1.msra.mxu0 %v269
      %537 = vmatprep.subr.mxu0 0.0
      %538 = vmatpush1.msra.mxu0 %v270
      %539 = vmatprep.subr.mxu0 0.0
      %540 = vmatpush1.msra.mxu0 %v271
      %541 = vmatprep.subr.mxu0 0.0
      %542 = vmatpush1.msra.mxu0 %v272
      %543 = vmatprep.subr.mxu0 0.0
      %544 = vmatpush1.msra.mxu0 %v273
      %545 = vmatprep.subr.mxu0 0.0
      %546 = vmatpush1.msra.mxu0 %v274
      %547 = vmatprep.subr.mxu0 0.0
      %548 = vmatpush1.msra.mxu0 %v275
      %549 = vmatprep.subr.mxu0 0.0
      %550 = vmatpush1.msra.mxu0 %v276
      %551 = vmatprep.subr.mxu0 0.0
      %552 = vmatpush1.msra.mxu0 %v277
      %553 = vmatprep.subr.mxu0 0.0
      %554 = vmatpush1.msra.mxu0 %v278
      %555 = vmatprep.subr.mxu0 0.0
      %556 = vmatpush1.msra.mxu0 %v279
      %557 = vmatprep.subr.mxu0 0.0
      %558 = vmatpush1.msra.mxu0 %v280
      %559 = vmatprep.subr.mxu0 0.0
      %560 = vmatpush1.msra.mxu0 %v281
      %561 = vmatprep.subr.mxu0 0.0
      %562 = vmatpush1.msra.mxu0 0.0
      %563 = vmatprep.subr.mxu0 0.0
      %564 = vmatpush1.msra.mxu0 0.0
      %565 = vmatprep.subr.mxu0 0.0
      %566 = vmatpush1.msra.mxu0 0.0
      %567 = vmatprep.subr.mxu0 0.0
      %568 = vmatpush1.msra.mxu0 0.0
      %569 = vmatprep.subr.mxu0 0.0
      %570 = vmatpush1.msra.mxu0 0.0
      %571 = vmatprep.subr.mxu0 0.0
      %572 = vmatpush1.msra.mxu0 0.0
      %573 = vmatprep.subr.mxu0 0.0
      %574 = vmatpush1.msra.mxu0 0.0
      %575 = vmatprep.subr.mxu0 0.0
      %576 = vmatpush1.msra.mxu0 0.0
      %577 = vmatprep.subr.mxu0 0.0
      %578 = vmatpush1.msra.mxu0 0.0
      %579 = vmatprep.subr.mxu0 0.0
      %580 = vmatpush1.msra.mxu0 0.0
      %581 = vmatprep.subr.mxu0 0.0
      %582 = vmatpush1.msra.mxu0 0.0
      %583 = vmatprep.subr.mxu0 0.0
      %584 = vmatpush1.msra.mxu0 0.0
      %585 = vmatprep.subr.mxu0 0.0
      %586 = vmatpush1.msra.mxu0 0.0
      %587 = vmatprep.subr.mxu0 0.0
      %588 = vmatpush1.msra.mxu0 0.0
      %589 = vmatprep.subr.mxu0 0.0
      %590 = vmatpush1.msra.mxu0 0.0
      %591 = vmatprep.subr.mxu0 0.0
      %592 = vmatpush1.msra.mxu0 0.0
      %593 = vmatprep.mubr.f32.mxu0 0.0
      %594 = vmatmul.mubr.f32.gmra.mrb[0].mxu0 %v452
      %v595 = vpop.f32.mrb[0].mxu0
      %v596 = vadd.f32 0.0, %v595
      %v597 = vpop.f32.mrb[0].mxu0
      %598 = vdwg.mxu0
      %v599 = vmul.f32 %v596, 0.00048828125
      %600 = vmatprep.subr.mxu0 0.0
      %601 = vmatpush1.msra.mxu0 %v266
      %602 = vmatprep.subr.mxu0 0.0
      %603 = vmatpush1.msra.mxu0 %v267
      %604 = vmatprep.subr.mxu0 0.0
      %605 = vmatpush1.msra.mxu0 %v268
      %606 = vmatprep.subr.mxu0 0.0
      %607 = vmatpush1.msra.mxu0 %v269
      %608 = vmatprep.subr.mxu0 0.0
      %609 = vmatpush1.msra.mxu0 %v270
      %610 = vmatprep.subr.mxu0 0.0
      %611 = vmatpush1.msra.mxu0 %v271
      %612 = vmatprep.subr.mxu0 0.0
      %613 = vmatpush1.msra.mxu0 %v272
      %614 = vmatprep.subr.mxu0 0.0
      %615 = vmatpush1.msra.mxu0 %v273
      %616 = vmatprep.subr.mxu0 0.0
      %617 = vmatpush1.msra.mxu0 %v274
      %618 = vmatprep.subr.mxu0 0.0
      %619 = vmatpush1.msra.mxu0 %v275
      %620 = vmatprep.subr.mxu0 0.0
      %621 = vmatpush1.msra.mxu0 %v276
      %622 = vmatprep.subr.mxu0 0.0
      %623 = vmatpush1.msra.mxu0 %v277
      %624 = vmatprep.subr.mxu0 0.0
      %625 = vmatpush1.msra.mxu0 %v278
      %626 = vmatprep.subr.mxu0 0.0
      %627 = vmatpush1.msra.mxu0 %v279
      %628 = vmatprep.subr.mxu0 0.0
      %629 = vmatpush1.msra.mxu0 %v280
      %630 = vmatprep.subr.mxu0 0.0
      %631 = vmatpush1.msra.mxu0 %v281
      %632 = vmatprep.subr.mxu0 0.0
      %633 = vmatpush1.msra.mxu0 0.0
      %634 = vmatprep.subr.mxu0 0.0
      %635 = vmatpush1.msra.mxu0 0.0
      %636 = vmatprep.subr.mxu0 0.0
      %637 = vmatpush1.msra.mxu0 0.0
      %638 = vmatprep.subr.mxu0 0.0
      %639 = vmatpush1.msra.mxu0 0.0
      %640 = vmatprep.subr.mxu0 0.0
      %641 = vmatpush1.msra.mxu0 0.0
      %642 = vmatprep.subr.mxu0 0.0
      %643 = vmatpush1.msra.mxu0 0.0
      %644 = vmatprep.subr.mxu0 0.0
      %645 = vmatpush1.msra.mxu0 0.0
      %646 = vmatprep.subr.mxu0 0.0
      %647 = vmatpush1.msra.mxu0 0.0
      %648 = vmatprep.subr.mxu0 0.0
      %649 = vmatpush1.msra.mxu0 0.0
      %650 = vmatprep.subr.mxu0 0.0
      %651 = vmatpush1.msra.mxu0 0.0
      %652 = vmatprep.subr.mxu0 0.0
      %653 = vmatpush1.msra.mxu0 0.0
      %654 = vmatprep.subr.mxu0 0.0
      %655 = vmatpush1.msra.mxu0 0.0
      %656 = vmatprep.subr.mxu0 0.0
      %657 = vmatpush1.msra.mxu0 0.0
      %658 = vmatprep.subr.mxu0 0.0
      %659 = vmatpush1.msra.mxu0 0.0
      %660 = vmatprep.subr.mxu0 0.0
      %661 = vmatpush1.msra.mxu0 0.0
      %662 = vmatprep.subr.mxu0 0.0
      %663 = vmatpush1.msra.mxu0 0.0
      %664 = vmatprep.mubr.f32.mxu0 0.0
      %665 = vmatmul.mubr.f32.gmra.mrb[0].mxu0 %v526
      %v666 = vpop.f32.mrb[0].mxu0
      %v667 = vadd.f32 0.0, %v666
      %v668 = vpop.f32.mrb[0].mxu0
      %669 = vdwg.mxu0
      %v670 = vmul.f32 %v667, 0.00048828125
      %v671 = vmul.f32 %v599, %v599
      %v672 = vsub.f32 %v670, %v671
      %v673 = vmax.f32 %v672, 0.0
      %v674 = vadd.f32 %v673, 1e-05
      %v675 = vrsqrt.pop %v674
      %vm676 = vcmask 64512
      %v678 = vsel %vm676, %v599, 0
      %680 = vmatprep.subr.mxu0 0.0
      %681 = vmatpush1.msra.mxu0 %v282
      %682 = vmatprep.subr.mxu0 0.0
      %683 = vmatpush1.msra.mxu0 0.0
      %684 = vmatprep.subr.mxu0 0.0
      %685 = vmatpush1.msra.mxu0 0.0
      %686 = vmatprep.subr.mxu0 0.0
      %687 = vmatpush1.msra.mxu0 0.0
      %688 = vmatprep.subr.mxu0 0.0
      %689 = vmatpush1.msra.mxu0 0.0
      %690 = vmatprep.subr.mxu0 0.0
      %691 = vmatpush1.msra.mxu0 0.0
      %692 = vmatprep.subr.mxu0 0.0
      %693 = vmatpush1.msra.mxu0 0.0
      %694 = vmatprep.subr.mxu0 0.0
      %695 = vmatpush1.msra.mxu0 0.0
      %696 = vmatprep.subr.mxu0 0.0
      %697 = vmatpush1.msra.mxu0 0.0
      %698 = vmatprep.subr.mxu0 0.0
      %699 = vmatpush1.msra.mxu0 0.0
      %700 = vmatprep.subr.mxu0 0.0
      %701 = vmatpush1.msra.mxu0 0.0
      %702 = vmatprep.subr.mxu0 0.0
      %703 = vmatpush1.msra.mxu0 0.0
      %704 = vmatprep.subr.mxu0 0.0
      %705 = vmatpush1.msra.mxu0 0.0
      %706 = vmatprep.subr.mxu0 0.0
      %707 = vmatpush1.msra.mxu0 0.0
      %708 = vmatprep.subr.mxu0 0.0
      %709 = vmatpush1.msra.mxu0 0.0
      %710 = vmatprep.subr.mxu0 0.0
      %711 = vmatpush1.msra.mxu0 0.0
      %712 = vmatprep.subr.mxu0 0.0
      %713 = vmatpush1.msra.mxu0 0.0
      %714 = vmatprep.subr.mxu0 0.0
      %715 = vmatpush1.msra.mxu0 0.0
      %716 = vmatprep.subr.mxu0 0.0
      %717 = vmatpush1.msra.mxu0 0.0
      %718 = vmatprep.subr.mxu0 0.0
      %719 = vmatpush1.msra.mxu0 0.0
      %720 = vmatprep.subr.mxu0 0.0
      %721 = vmatpush1.msra.mxu0 0.0
      %722 = vmatprep.subr.mxu0 0.0
      %723 = vmatpush1.msra.mxu0 0.0
      %724 = vmatprep.subr.mxu0 0.0
      %725 = vmatpush1.msra.mxu0 0.0
      %726 = vmatprep.subr.mxu0 0.0
      %727 = vmatpush1.msra.mxu0 0.0
      %728 = vmatprep.subr.mxu0 0.0
      %729 = vmatpush1.msra.mxu0 0.0
      %730 = vmatprep.subr.mxu0 0.0
      %731 = vmatpush1.msra.mxu0 0.0
      %732 = vmatprep.subr.mxu0 0.0
      %733 = vmatpush1.msra.mxu0 0.0
      %734 = vmatprep.subr.mxu0 0.0
      %735 = vmatpush1.msra.mxu0 0.0
      %736 = vmatprep.subr.mxu0 0.0
      %737 = vmatpush1.msra.mxu0 0.0
      %738 = vmatprep.subr.mxu0 0.0
      %739 = vmatpush1.msra.mxu0 0.0
      %740 = vmatprep.subr.mxu0 0.0
      %741 = vmatpush1.msra.mxu0 0.0
      %742 = vmatprep.subr.mxu0 0.0
      %743 = vmatpush1.msra.mxu0 0.0
      %744 = vmatprep.mubr.f32.mxu0 0.0
      %745 = vmatmul.mubr.f32.gmra.mrb[0].mxu0 %v678
      %v746 = vpop.f32.mrb[0].mxu0
      %v747 = vadd.f32 0.0, %v746
      %v748 = vpop.f32.mrb[0].mxu0
      %749 = vdwg.mxu0
      %v751 = vsel %vm676, %v675, 0
      %753 = vmatprep.subr.mxu0 0.0
      %754 = vmatpush1.msra.mxu0 %v282
      %755 = vmatprep.subr.mxu0 0.0
      %756 = vmatpush1.msra.mxu0 0.0
      %757 = vmatprep.subr.mxu0 0.0
      %758 = vmatpush1.msra.mxu0 0.0
      %759 = vmatprep.subr.mxu0 0.0
      %760 = vmatpush1.msra.mxu0 0.0
      %761 = vmatprep.subr.mxu0 0.0
      %762 = vmatpush1.msra.mxu0 0.0
      %763 = vmatprep.subr.mxu0 0.0
      %764 = vmatpush1.msra.mxu0 0.0
      %765 = vmatprep.subr.mxu0 0.0
      %766 = vmatpush1.msra.mxu0 0.0
      %767 = vmatprep.subr.mxu0 0.0
      %768 = vmatpush1.msra.mxu0 0.0
      %769 = vmatprep.subr.mxu0 0.0
      %770 = vmatpush1.msra.mxu0 0.0
      %771 = vmatprep.subr.mxu0 0.0
      %772 = vmatpush1.msra.mxu0 0.0
      %773 = vmatprep.subr.mxu0 0.0
      %774 = vmatpush1.msra.mxu0 0.0
      %775 = vmatprep.subr.mxu0 0.0
      %776 = vmatpush1.msra.mxu0 0.0
      %777 = vmatprep.subr.mxu0 0.0
      %778 = vmatpush1.msra.mxu0 0.0
      %779 = vmatprep.subr.mxu0 0.0
      %780 = vmatpush1.msra.mxu0 0.0
      %781 = vmatprep.subr.mxu0 0.0
      %782 = vmatpush1.msra.mxu0 0.0
      %783 = vmatprep.subr.mxu0 0.0
      %784 = vmatpush1.msra.mxu0 0.0
      %785 = vmatprep.subr.mxu0 0.0
      %786 = vmatpush1.msra.mxu0 0.0
      %787 = vmatprep.subr.mxu0 0.0
      %788 = vmatpush1.msra.mxu0 0.0
      %789 = vmatprep.subr.mxu0 0.0
      %790 = vmatpush1.msra.mxu0 0.0
      %791 = vmatprep.subr.mxu0 0.0
      %792 = vmatpush1.msra.mxu0 0.0
      %793 = vmatprep.subr.mxu0 0.0
      %794 = vmatpush1.msra.mxu0 0.0
      %795 = vmatprep.subr.mxu0 0.0
      %796 = vmatpush1.msra.mxu0 0.0
      %797 = vmatprep.subr.mxu0 0.0
      %798 = vmatpush1.msra.mxu0 0.0
      %799 = vmatprep.subr.mxu0 0.0
      %800 = vmatpush1.msra.mxu0 0.0
      %801 = vmatprep.subr.mxu0 0.0
      %802 = vmatpush1.msra.mxu0 0.0
      %803 = vmatprep.subr.mxu0 0.0
      %804 = vmatpush1.msra.mxu0 0.0
      %805 = vmatprep.subr.mxu0 0.0
      %806 = vmatpush1.msra.mxu0 0.0
      %807 = vmatprep.subr.mxu0 0.0
      %808 = vmatpush1.msra.mxu0 0.0
      %809 = vmatprep.subr.mxu0 0.0
      %810 = vmatpush1.msra.mxu0 0.0
      %811 = vmatprep.subr.mxu0 0.0
      %812 = vmatpush1.msra.mxu0 0.0
      %813 = vmatprep.subr.mxu0 0.0
      %814 = vmatpush1.msra.mxu0 0.0
      %815 = vmatprep.subr.mxu0 0.0
      %816 = vmatpush1.msra.mxu0 0.0
      %817 = vmatprep.mubr.f32.mxu0 0.0
      %818 = vmatmul.mubr.f32.gmra.mrb[0].mxu0 %v751
      %v819 = vpop.f32.mrb[0].mxu0
      %v820 = vadd.f32 0.0, %v819
      %v821 = vpop.f32.mrb[0].mxu0
      %822 = vdwg.mxu0
      %v823 = vlaneseq
      %v824 = vshrl.u32 %v823, 7
      %v825 = vsub.s32 0, %v824
      %v826 = vrot.slane %v747, %v825
      %v827 = vsub.f32 %v367, %v826
      %v828 = vsub.f32 %v370, %v826
      %v829 = vsub.f32 %v375, %v826
      %v830 = vsub.f32 %v378, %v826
      %v831 = vlaneseq
      %v832 = vshrl.u32 %v831, 7
      %v833 = vsub.s32 0, %v832
      %v834 = vrot.slane %v820, %v833
      %v835 = vmul.f32 %v827, %v834
      %v836 = vmul.f32 %v828, %v834
      %v837 = vmul.f32 %v829, %v834
      %v838 = vmul.f32 %v830, %v834
      %v839 = vand.u32 2147483647, %v835
      %v840 = vand.u32 2147483647, %v836
      %v841 = vand.u32 2147483647, %v837
      %v842 = vand.u32 2147483647, %v838
      %v843 = vmul.f32 %v839, 0.70710677
      %v844 = vmul.f32 %v840, 0.70710677
      %v845 = vmul.f32 %v841, 0.70710677
      %v846 = vmul.f32 %v842, 0.70710677
      %v847 = vmul.f32 %v843, 0.3275911
      %v848 = vmul.f32 %v844, 0.3275911
      %v849 = vmul.f32 %v845, 0.3275911
      %v850 = vmul.f32 %v846, 0.3275911
      %v851 = vadd.f32 %v847, 1.0
      %v852 = vadd.f32 %v848, 1.0
      %v853 = vadd.f32 %v849, 1.0
      %v854 = vadd.f32 %v850, 1.0
      %v855 = vrcp.pop %v851
      %v856 = vrcp.pop %v852
      %v857 = vrcp.pop %v853
      %v858 = vrcp.pop %v854
      %v859 = vmul.f32 %v851, %v855
      %v860 = vmul.f32 %v852, %v856
      %v861 = vmul.f32 %v853, %v857
      %v862 = vmul.f32 %v854, %v858
      %v863 = vsub.f32 2.0, %v859
      %v864 = vsub.f32 2.0, %v860
      %v865 = vsub.f32 2.0, %v861
      %v866 = vsub.f32 2.0, %v862
      %v867 = vmul.f32 %v855, %v863
      %v868 = vmul.f32 %v856, %v864
      %v869 = vmul.f32 %v857, %v865
      %v870 = vmul.f32 %v858, %v866
      %v871 = vmul.f32 %v867, 1.0614054
      %v872 = vmul.f32 %v868, 1.0614054
      %v873 = vmul.f32 %v869, 1.0614054
      %v874 = vmul.f32 %v870, 1.0614054
      %v875 = vadd.f32 %v871, -1.4531521
      %v876 = vadd.f32 %v872, -1.4531521
      %v877 = vadd.f32 %v873, -1.4531521
      %v878 = vadd.f32 %v874, -1.4531521
      %v879 = vmul.f32 %v867, %v875
      %v880 = vmul.f32 %v868, %v876
      %v881 = vmul.f32 %v869, %v877
      %v882 = vmul.f32 %v870, %v878
      %v883 = vadd.f32 %v879, 1.4214138
      %v884 = vadd.f32 %v880, 1.4214138
      %v885 = vadd.f32 %v881, 1.4214138
      %v886 = vadd.f32 %v882, 1.4214138
      %v887 = vmul.f32 %v867, %v883
      %v888 = vmul.f32 %v868, %v884
      %v889 = vmul.f32 %v869, %v885
      %v890 = vmul.f32 %v870, %v886
      %v891 = vadd.f32 %v887, -0.28449672
      %v892 = vadd.f32 %v888, -0.28449672
      %v893 = vadd.f32 %v889, -0.28449672
      %v894 = vadd.f32 %v890, -0.28449672
      %v895 = vmul.f32 %v867, %v891
      %v896 = vmul.f32 %v868, %v892
      %v897 = vmul.f32 %v869, %v893
      %v898 = vmul.f32 %v870, %v894
      %v899 = vadd.f32 %v895, 0.2548296
      %v900 = vadd.f32 %v896, 0.2548296
      %v901 = vadd.f32 %v897, 0.2548296
      %v902 = vadd.f32 %v898, 0.2548296
      %v903 = vmul.f32 %v867, %v899
      %v904 = vmul.f32 %v868, %v900
      %v905 = vmul.f32 %v869, %v901
      %v906 = vmul.f32 %v870, %v902
      %v907 = vsub.f32 0.0, %v843
      %v908 = vsub.f32 0.0, %v844
      %v909 = vsub.f32 0.0, %v845
      %v910 = vsub.f32 0.0, %v846
      %v911 = vmul.f32 %v907, %v843
      %v912 = vmul.f32 %v908, %v844
      %v913 = vmul.f32 %v909, %v845
      %v914 = vmul.f32 %v910, %v846
      %v915 = vmul.f32 %v911, 1.442695
      %v916 = vpow.pop %v915
      %v917 = vmul.f32 %v912, 1.442695
      %v918 = vpow.pop %v917
      %v919 = vmul.f32 %v913, 1.442695
      %v920 = vpow.pop %v919
      %v921 = vmul.f32 %v914, 1.442695
      %v922 = vpow.pop %v921
      %v923 = vmul.f32 %v903, %v916
      %v924 = vmul.f32 %v904, %v918
      %v925 = vmul.f32 %v905, %v920
      %v926 = vmul.f32 %v906, %v922
      %v927 = vsub.f32 1.0, %v923
      %v928 = vsub.f32 1.0, %v924
      %v929 = vsub.f32 1.0, %v925
      %v930 = vsub.f32 1.0, %v926
      %vm931 = vcmp.lt.f32.partialorder %v835, 0.0
      %vm932 = vcmp.lt.f32.partialorder %v836, 0.0
      %vm933 = vcmp.lt.f32.partialorder %v837, 0.0
      %vm934 = vcmp.lt.f32.partialorder %v838, 0.0
      %v935 = vsub.f32 0.0, %v927
      %v936 = vsub.f32 0.0, %v928
      %v937 = vsub.f32 0.0, %v929
      %v938 = vsub.f32 0.0, %v930
      %v939 = vsel %vm931, %v935, %v927
      %v940 = vsel %vm932, %v936, %v928
      %v941 = vsel %vm933, %v937, %v929
      %v942 = vsel %vm934, %v938, %v930
      %v943 = vmul.f32 %v835, 0.5
      %v944 = vmul.f32 %v836, 0.5
      %v945 = vmul.f32 %v837, 0.5
      %v946 = vmul.f32 %v838, 0.5
      %v947 = vadd.f32 %v939, 1.0
      %v948 = vadd.f32 %v940, 1.0
      %v949 = vadd.f32 %v941, 1.0
      %v950 = vadd.f32 %v942, 1.0
      %v951 = vmul.f32 %v943, %v947
      %v952 = vmul.f32 %v944, %v948
      %v953 = vmul.f32 %v945, %v949
      %v954 = vmul.f32 %v946, %v950
      %v955 = vsub.f32 0.0, %v747
      %v956 = vmul.f32 %v955, %v820
      %v957 = vand.u32 2147483647, %v956
      %v958 = vmul.f32 %v957, 0.70710677
      %v959 = vmul.f32 %v958, 0.3275911
      %v960 = vadd.f32 %v959, 1.0
      %v961 = vrcp.pop %v960
      %v962 = vmul.f32 %v960, %v961
      %v963 = vsub.f32 2.0, %v962
      %v964 = vmul.f32 %v961, %v963
      %v965 = vmul.f32 %v964, 1.0614054
      %v966 = vadd.f32 %v965, -1.4531521
      %v967 = vmul.f32 %v964, %v966
      %v968 = vadd.f32 %v967, 1.4214138
      %v969 = vmul.f32 %v964, %v968
      %v970 = vadd.f32 %v969, -0.28449672
      %v971 = vmul.f32 %v964, %v970
      %v972 = vadd.f32 %v971, 0.2548296
      %v973 = vmul.f32 %v964, %v972
      %v974 = vsub.f32 0.0, %v958
      %v975 = vmul.f32 %v974, %v958
      %v976 = vmul.f32 %v975, 1.442695
      %v977 = vpow.pop %v976
      %v978 = vmul.f32 %v973, %v977
      %v979 = vsub.f32 1.0, %v978
      %vm980 = vcmp.lt.f32.partialorder %v956, 0.0
      %v981 = vsub.f32 0.0, %v979
      %v982 = vsel %vm980, %v981, %v979
      %v983 = vmul.f32 %v956, 0.5
      %v984 = vadd.f32 %v982, 1.0
      %v985 = vmul.f32 %v983, %v984
      %v986 = vpack.c.bf16 %v952, %v951
      %v987 = vpack.c.bf16 %v954, %v953
      %v988 = vld [vmem:[%s2] sm:$0xf]
      %v989 = vld [vmem:[%s2 + $0x4] sm:$0xf]
      %v990 = vld [vmem:[%s2 + $0x8] sm:$0xf]
      %v991 = vld [vmem:[%s2 + $0xc] sm:$0xf]
      %v992 = vld [vmem:[%s2 + $0x10] sm:$0xf]
      %v993 = vld [vmem:[%s2 + $0x14] sm:$0xf]
      %v994 = vld [vmem:[%s2 + $0x18] sm:$0xf]
      %v995 = vld [vmem:[%s2 + $0x1c] sm:$0xf]
      %v996 = vld [vmem:[%s2 + $0x20] sm:$0xf]
      %v997 = vld [vmem:[%s2 + $0x24] sm:$0xf]
      %v998 = vld [vmem:[%s2 + $0x28] sm:$0xf]
      %v999 = vld [vmem:[%s2 + $0x2c] sm:$0xf]
      %v1000 = vld [vmem:[%s2 + $0x30] sm:$0xf]
      %v1001 = vld [vmem:[%s2 + $0x34] sm:$0xf]
      %v1002 = vld [vmem:[%s2 + $0x38] sm:$0xf]
      %v1003 = vld [vmem:[%s2 + $0x3c] sm:$0xf]
      %v1020 = vunpack.c.l.b16 %v988
      %v1021 = vunpack.c.l.b16 %v989
      %v1022 = vunpack.c.l.b16 %v990
      %v1023 = vunpack.c.l.b16 %v991
      %v1024 = vunpack.c.l.b16 %v992
      %v1025 = vunpack.c.l.b16 %v993
      %v1026 = vunpack.c.l.b16 %v994
      %v1027 = vunpack.c.l.b16 %v995
      %v1028 = vunpack.c.l.b16 %v996
      %v1029 = vunpack.c.l.b16 %v997
      %v1030 = vunpack.c.l.b16 %v998
      %v1031 = vunpack.c.l.b16 %v999
      %v1032 = vunpack.c.l.b16 %v1000
      %v1033 = vunpack.c.l.b16 %v1001
      %v1034 = vunpack.c.l.b16 %v1002
      %v1035 = vunpack.c.l.b16 %v1003
      %v1036 = vpack.c.b16 %v1021, %v1020
      %v1037 = vpack.c.b16 %v1023, %v1022
      %v1038 = vpack.c.b16 %v1025, %v1024
      %v1039 = vpack.c.b16 %v1027, %v1026
      %v1040 = vpack.c.b16 %v1029, %v1028
      %v1041 = vpack.c.b16 %v1031, %v1030
      %v1042 = vpack.c.b16 %v1033, %v1032
      %v1043 = vpack.c.b16 %v1035, %v1034
      %1052 = vmatprep.subr.bf16.mxu0 0
      %1053 = vmatpush1.bf16.msra.mxu0 %v1036
      %1054 = vmatprep.subr.bf16.mxu0 0
      %1055 = vmatpush1.bf16.msra.mxu0 %v1037
      %1056 = vmatprep.subr.bf16.mxu0 0
      %1057 = vmatpush1.bf16.msra.mxu0 %v1038
      %1058 = vmatprep.subr.bf16.mxu0 0
      %1059 = vmatpush1.bf16.msra.mxu0 %v1039
      %1060 = vmatprep.subr.bf16.mxu0 0
      %1061 = vmatpush1.bf16.msra.mxu0 %v1040
      %1062 = vmatprep.subr.bf16.mxu0 0
      %1063 = vmatpush1.bf16.msra.mxu0 %v1041
      %1064 = vmatprep.subr.bf16.mxu0 0
      %1065 = vmatpush1.bf16.msra.mxu0 %v1042
      %1066 = vmatprep.subr.bf16.mxu0 0
      %1067 = vmatpush1.bf16.msra.mxu0 %v1043
      %1068 = vmatprep.subr.bf16.mxu0 0
      %1069 = vmatpush1.bf16.msra.mxu0 0
      %1070 = vmatprep.subr.bf16.mxu0 0
      %1071 = vmatpush1.bf16.msra.mxu0 0
      %1072 = vmatprep.subr.bf16.mxu0 0
      %1073 = vmatpush1.bf16.msra.mxu0 0
      %1074 = vmatprep.subr.bf16.mxu0 0
      %1075 = vmatpush1.bf16.msra.mxu0 0
      %1076 = vmatprep.subr.bf16.mxu0 0
      %1077 = vmatpush1.bf16.msra.mxu0 0
      %1078 = vmatprep.subr.bf16.mxu0 0
      %1079 = vmatpush1.bf16.msra.mxu0 0
      %1080 = vmatprep.subr.bf16.mxu0 0
      %1081 = vmatpush1.bf16.msra.mxu0 0
      %1082 = vmatprep.subr.bf16.mxu0 0
      %1083 = vmatpush1.bf16.msra.mxu0 0
      %1084 = vmatprep.mubr.bf16.mxu0 0
      %1085 = vmatmul.mubr.bf16.gmra.mrb[0].mxu0 %v986
      %v1086 = vpop.f32.mrb[0].mxu0
      %v1087 = vadd.f32 0.0, %v1086
      %v1088 = vpop.f32.mrb[0].mxu0
      %v1089 = vpop.f32.mrb[0].mxu0
      %v1090 = vadd.f32 0.0, %v1089
      %v1091 = vpop.f32.mrb[0].mxu0
      %1092 = vmatprep.mubr.bf16.mxu0 0
      %1093 = vmatmul.mubr.bf16.gmra.mrb[0].mxu0 %v987
      %v1094 = vpop.f32.mrb[0].mxu0
      %v1095 = vadd.f32 0.0, %v1094
      %v1096 = vpop.f32.mrb[0].mxu0
      %v1097 = vpop.f32.mrb[0].mxu0
      %v1098 = vadd.f32 0.0, %v1097
      %v1099 = vpop.f32.mrb[0].mxu0
      %1100 = vdwg.mxu0
      %v1101 = vpack.c.bf16 %v985, %v985
      %1102 = vmatprep.subr.bf16.mxu0 0
      %1103 = vmatpush1.bf16.msra.mxu0 %v1036
      %1104 = vmatprep.subr.bf16.mxu0 0
      %1105 = vmatpush1.bf16.msra.mxu0 %v1037
      %1106 = vmatprep.subr.bf16.mxu0 0
      %1107 = vmatpush1.bf16.msra.mxu0 %v1038
      %1108 = vmatprep.subr.bf16.mxu0 0
      %1109 = vmatpush1.bf16.msra.mxu0 %v1039
      %1110 = vmatprep.subr.bf16.mxu0 0
      %1111 = vmatpush1.bf16.msra.mxu0 %v1040
      %1112 = vmatprep.subr.bf16.mxu0 0
      %1113 = vmatpush1.bf16.msra.mxu0 %v1041
      %1114 = vmatprep.subr.bf16.mxu0 0
      %1115 = vmatpush1.bf16.msra.mxu0 %v1042
      %1116 = vmatprep.subr.bf16.mxu0 0
      %1117 = vmatpush1.bf16.msra.mxu0 %v1043
      %1118 = vmatprep.subr.bf16.mxu0 0
      %1119 = vmatpush1.bf16.msra.mxu0 0
      %1120 = vmatprep.subr.bf16.mxu0 0
      %1121 = vmatpush1.bf16.msra.mxu0 0
      %1122 = vmatprep.subr.bf16.mxu0 0
      %1123 = vmatpush1.bf16.msra.mxu0 0
      %1124 = vmatprep.subr.bf16.mxu0 0
      %1125 = vmatpush1.bf16.msra.mxu0 0
      %1126 = vmatprep.subr.bf16.mxu0 0
      %1127 = vmatpush1.bf16.msra.mxu0 0
      %1128 = vmatprep.subr.bf16.mxu0 0
      %1129 = vmatpush1.bf16.msra.mxu0 0
      %1130 = vmatprep.subr.bf16.mxu0 0
      %1131 = vmatpush1.bf16.msra.mxu0 0
      %1132 = vmatprep.subr.bf16.mxu0 0
      %1133 = vmatpush1.bf16.msra.mxu0 0
      %1134 = vmatprep.mubr.bf16.mxu0 0
      %1135 = vmatmul.mubr.bf16.gmra.mrb[0].mxu0 %v1101
      %v1136 = vpop.f32.mrb[0].mxu0
      %v1137 = vadd.f32 0.0, %v1136
      %v1138 = vpop.f32.mrb[0].mxu0
      %v1139 = vpop.f32.mrb[0].mxu0
      %v1140 = vpop.f32.mrb[0].mxu0
      %1141 = vdwg.mxu0
      %v1142 = vmul.f32 %v1137, 96.0
      %1143 = vmatprep.subr.mxu0 0.0
      %1144 = vmatpush1.msra.mxu0 %v1087
      %1145 = vmatprep.subr.mxu0 0.0
      %1146 = vmatpush1.msra.mxu0 %v1090
      %1147 = vmatprep.subr.mxu0 0.0
      %1148 = vmatpush1.msra.mxu0 %v1095
      %1149 = vmatprep.subr.mxu0 0.0
      %1150 = vmatpush1.msra.mxu0 %v1098
      %1151 = vmatprep.subr.mxu0 0.0
      %1152 = vmatpush1.msra.mxu0 0.0
      %1153 = vmatprep.subr.mxu0 0.0
      %1154 = vmatpush1.msra.mxu0 0.0
      %1155 = vmatprep.subr.mxu0 0.0
      %1156 = vmatpush1.msra.mxu0 0.0
      %1157 = vmatprep.subr.mxu0 0.0
      %1158 = vmatpush1.msra.mxu0 0.0
      %1159 = vmatprep.subr.mxu0 0.0
      %1160 = vmatpush1.msra.mxu0 0.0
      %1161 = vmatprep.subr.mxu0 0.0
      %1162 = vmatpush1.msra.mxu0 0.0
      %1163 = vmatprep.subr.mxu0 0.0
      %1164 = vmatpush1.msra.mxu0 0.0
      %1165 = vmatprep.subr.mxu0 0.0
      %1166 = vmatpush1.msra.mxu0 0.0
      %1167 = vmatprep.subr.mxu0 0.0
      %1168 = vmatpush1.msra.mxu0 0.0
      %1169 = vmatprep.subr.mxu0 0.0
      %1170 = vmatpush1.msra.mxu0 0.0
      %1171 = vmatprep.subr.mxu0 0.0
      %1172 = vmatpush1.msra.mxu0 0.0
      %1173 = vmatprep.subr.mxu0 0.0
      %1174 = vmatpush1.msra.mxu0 0.0
      %1175 = vmatprep.subr.mxu0 0.0
      %1176 = vmatpush1.msra.mxu0 0.0
      %1177 = vmatprep.subr.mxu0 0.0
      %1178 = vmatpush1.msra.mxu0 0.0
      %1179 = vmatprep.subr.mxu0 0.0
      %1180 = vmatpush1.msra.mxu0 0.0
      %1181 = vmatprep.subr.mxu0 0.0
      %1182 = vmatpush1.msra.mxu0 0.0
      %1183 = vmatprep.subr.mxu0 0.0
      %1184 = vmatpush1.msra.mxu0 0.0
      %1185 = vmatprep.subr.mxu0 0.0
      %1186 = vmatpush1.msra.mxu0 0.0
      %1187 = vmatprep.subr.mxu0 0.0
      %1188 = vmatpush1.msra.mxu0 0.0
      %1189 = vmatprep.subr.mxu0 0.0
      %1190 = vmatpush1.msra.mxu0 0.0
      %1191 = vmatprep.subr.mxu0 0.0
      %1192 = vmatpush1.msra.mxu0 0.0
      %1193 = vmatprep.subr.mxu0 0.0
      %1194 = vmatpush1.msra.mxu0 0.0
      %1195 = vmatprep.subr.mxu0 0.0
      %1196 = vmatpush1.msra.mxu0 0.0
      %1197 = vmatprep.subr.mxu0 0.0
      %1198 = vmatpush1.msra.mxu0 0.0
      %1199 = vmatprep.subr.mxu0 0.0
      %1200 = vmatpush1.msra.mxu0 0.0
      %1201 = vmatprep.subr.mxu0 0.0
      %1202 = vmatpush1.msra.mxu0 0.0
      %1203 = vmatprep.subr.mxu0 0.0
      %1204 = vmatpush1.msra.mxu0 0.0
      %1205 = vmatprep.subr.mxu0 0.0
      %1206 = vmatpush1.msra.mxu0 0.0
      %1207 = vmatprep.mubr.f32.mxu0 0.0
      %1208 = vmatmul.mubr.f32.gmra.mrb[0].mxu0 %v383
      %v1209 = vpop.f32.mrb[0].mxu0
      %v1210 = vadd.f32 %v1142, %v1209
      %v1211 = vpop.f32.mrb[0].mxu0
      %1212 = vdwg.mxu0
      %v1213 = vmul.f32 %v1087, %v1087
      %v1214 = vmul.f32 %v1090, %v1090
      %v1215 = vmul.f32 %v1095, %v1095
      %v1216 = vmul.f32 %v1098, %v1098
      %v1217 = vmul.f32 %v1137, %v1137
      %v1218 = vmul.f32 %v1217, 96.0
      %1219 = vmatprep.subr.mxu0 0.0
      %1220 = vmatpush1.msra.mxu0 %v1213
      %1221 = vmatprep.subr.mxu0 0.0
      %1222 = vmatpush1.msra.mxu0 %v1214
      %1223 = vmatprep.subr.mxu0 0.0
      %1224 = vmatpush1.msra.mxu0 %v1215
      %1225 = vmatprep.subr.mxu0 0.0
      %1226 = vmatpush1.msra.mxu0 %v1216
      %1227 = vmatprep.subr.mxu0 0.0
      %1228 = vmatpush1.msra.mxu0 0.0
      %1229 = vmatprep.subr.mxu0 0.0
      %1230 = vmatpush1.msra.mxu0 0.0
      %1231 = vmatprep.subr.mxu0 0.0
      %1232 = vmatpush1.msra.mxu0 0.0
      %1233 = vmatprep.subr.mxu0 0.0
      %1234 = vmatpush1.msra.mxu0 0.0
      %1235 = vmatprep.subr.mxu0 0.0
      %1236 = vmatpush1.msra.mxu0 0.0
      %1237 = vmatprep.subr.mxu0 0.0
      %1238 = vmatpush1.msra.mxu0 0.0
      %1239 = vmatprep.subr.mxu0 0.0
      %1240 = vmatpush1.msra.mxu0 0.0
      %1241 = vmatprep.subr.mxu0 0.0
      %1242 = vmatpush1.msra.mxu0 0.0
      %1243 = vmatprep.subr.mxu0 0.0
      %1244 = vmatpush1.msra.mxu0 0.0
      %1245 = vmatprep.subr.mxu0 0.0
      %1246 = vmatpush1.msra.mxu0 0.0
      %1247 = vmatprep.subr.mxu0 0.0
      %1248 = vmatpush1.msra.mxu0 0.0
      %1249 = vmatprep.subr.mxu0 0.0
      %1250 = vmatpush1.msra.mxu0 0.0
      %1251 = vmatprep.subr.mxu0 0.0
      %1252 = vmatpush1.msra.mxu0 0.0
      %1253 = vmatprep.subr.mxu0 0.0
      %1254 = vmatpush1.msra.mxu0 0.0
      %1255 = vmatprep.subr.mxu0 0.0
      %1256 = vmatpush1.msra.mxu0 0.0
      %1257 = vmatprep.subr.mxu0 0.0
      %1258 = vmatpush1.msra.mxu0 0.0
      %1259 = vmatprep.subr.mxu0 0.0
      %1260 = vmatpush1.msra.mxu0 0.0
      %1261 = vmatprep.subr.mxu0 0.0
      %1262 = vmatpush1.msra.mxu0 0.0
      %1263 = vmatprep.subr.mxu0 0.0
      %1264 = vmatpush1.msra.mxu0 0.0
      %1265 = vmatprep.subr.mxu0 0.0
      %1266 = vmatpush1.msra.mxu0 0.0
      %1267 = vmatprep.subr.mxu0 0.0
      %1268 = vmatpush1.msra.mxu0 0.0
      %1269 = vmatprep.subr.mxu0 0.0
      %1270 = vmatpush1.msra.mxu0 0.0
      %1271 = vmatprep.subr.mxu0 0.0
      %1272 = vmatpush1.msra.mxu0 0.0
      %1273 = vmatprep.subr.mxu0 0.0
      %1274 = vmatpush1.msra.mxu0 0.0
      %1275 = vmatprep.subr.mxu0 0.0
      %1276 = vmatpush1.msra.mxu0 0.0
      %1277 = vmatprep.subr.mxu0 0.0
      %1278 = vmatpush1.msra.mxu0 0.0
      %1279 = vmatprep.subr.mxu0 0.0
      %1280 = vmatpush1.msra.mxu0 0.0
      %1281 = vmatprep.subr.mxu0 0.0
      %1282 = vmatpush1.msra.mxu0 0.0
      %1283 = vmatprep.mubr.f32.mxu0 0.0
      %1284 = vmatmul.mubr.f32.gmra.mrb[0].mxu0 %v383
      %v1285 = vpop.f32.mrb[0].mxu0
      %v1286 = vadd.f32 %v1218, %v1285
      %v1287 = vpop.f32.mrb[0].mxu0
      %1288 = vdwg.mxu0
      %1289 = vmatprep.subr.mxu0 0.0
      %1290 = vmatpush1.msra.mxu0 %v266
      %1291 = vmatprep.subr.mxu0 0.0
      %1292 = vmatpush1.msra.mxu0 %v267
      %1293 = vmatprep.subr.mxu0 0.0
      %1294 = vmatpush1.msra.mxu0 %v268
      %1295 = vmatprep.subr.mxu0 0.0
      %1296 = vmatpush1.msra.mxu0 %v269
      %1297 = vmatprep.subr.mxu0 0.0
      %1298 = vmatpush1.msra.mxu0 %v270
      %1299 = vmatprep.subr.mxu0 0.0
      %1300 = vmatpush1.msra.mxu0 %v271
      %1301 = vmatprep.subr.mxu0 0.0
      %1302 = vmatpush1.msra.mxu0 %v272
      %1303 = vmatprep.subr.mxu0 0.0
      %1304 = vmatpush1.msra.mxu0 %v273
      %1305 = vmatprep.subr.mxu0 0.0
      %1306 = vmatpush1.msra.mxu0 %v274
      %1307 = vmatprep.subr.mxu0 0.0
      %1308 = vmatpush1.msra.mxu0 %v275
      %1309 = vmatprep.subr.mxu0 0.0
      %1310 = vmatpush1.msra.mxu0 %v276
      %1311 = vmatprep.subr.mxu0 0.0
      %1312 = vmatpush1.msra.mxu0 %v277
      %1313 = vmatprep.subr.mxu0 0.0
      %1314 = vmatpush1.msra.mxu0 %v278
      %1315 = vmatprep.subr.mxu0 0.0
      %1316 = vmatpush1.msra.mxu0 %v279
      %1317 = vmatprep.subr.mxu0 0.0
      %1318 = vmatpush1.msra.mxu0 %v280
      %1319 = vmatprep.subr.mxu0 0.0
      %1320 = vmatpush1.msra.mxu0 %v281
      %1321 = vmatprep.subr.mxu0 0.0
      %1322 = vmatpush1.msra.mxu0 0.0
      %1323 = vmatprep.subr.mxu0 0.0
      %1324 = vmatpush1.msra.mxu0 0.0
      %1325 = vmatprep.subr.mxu0 0.0
      %1326 = vmatpush1.msra.mxu0 0.0
      %1327 = vmatprep.subr.mxu0 0.0
      %1328 = vmatpush1.msra.mxu0 0.0
      %1329 = vmatprep.subr.mxu0 0.0
      %1330 = vmatpush1.msra.mxu0 0.0
      %1331 = vmatprep.subr.mxu0 0.0
      %1332 = vmatpush1.msra.mxu0 0.0
      %1333 = vmatprep.subr.mxu0 0.0
      %1334 = vmatpush1.msra.mxu0 0.0
      %1335 = vmatprep.subr.mxu0 0.0
      %1336 = vmatpush1.msra.mxu0 0.0
      %1337 = vmatprep.subr.mxu0 0.0
      %1338 = vmatpush1.msra.mxu0 0.0
      %1339 = vmatprep.subr.mxu0 0.0
      %1340 = vmatpush1.msra.mxu0 0.0
      %1341 = vmatprep.subr.mxu0 0.0
      %1342 = vmatpush1.msra.mxu0 0.0
      %1343 = vmatprep.subr.mxu0 0.0
      %1344 = vmatpush1.msra.mxu0 0.0
      %1345 = vmatprep.subr.mxu0 0.0
      %1346 = vmatpush1.msra.mxu0 0.0
      %1347 = vmatprep.subr.mxu0 0.0
      %1348 = vmatpush1.msra.mxu0 0.0
      %1349 = vmatprep.subr.mxu0 0.0
      %1350 = vmatpush1.msra.mxu0 0.0
      %1351 = vmatprep.subr.mxu0 0.0
      %1352 = vmatpush1.msra.mxu0 0.0
      %1353 = vmatprep.mubr.f32.mxu0 0.0
      %1354 = vmatmul.mubr.f32.gmra.mrb[0].mxu0 %v1210
      %v1355 = vpop.f32.mrb[0].mxu0
      %v1356 = vadd.f32 0.0, %v1355
      %v1357 = vpop.f32.mrb[0].mxu0
      %1358 = vdwg.mxu0
      %v1359 = vmul.f32 %v1356, 0.00048828125
      %1360 = vmatprep.subr.mxu0 0.0
      %1361 = vmatpush1.msra.mxu0 %v266
      %1362 = vmatprep.subr.mxu0 0.0
      %1363 = vmatpush1.msra.mxu0 %v267
      %1364 = vmatprep.subr.mxu0 0.0
      %1365 = vmatpush1.msra.mxu0 %v268
      %1366 = vmatprep.subr.mxu0 0.0
      %1367 = vmatpush1.msra.mxu0 %v269
      %1368 = vmatprep.subr.mxu0 0.0
      %1369 = vmatpush1.msra.mxu0 %v270
      %1370 = vmatprep.subr.mxu0 0.0
      %1371 = vmatpush1.msra.mxu0 %v271
      %1372 = vmatprep.subr.mxu0 0.0
      %1373 = vmatpush1.msra.mxu0 %v272
      %1374 = vmatprep.subr.mxu0 0.0
      %1375 = vmatpush1.msra.mxu0 %v273
      %1376 = vmatprep.subr.mxu0 0.0
      %1377 = vmatpush1.msra.mxu0 %v274
      %1378 = vmatprep.subr.mxu0 0.0
      %1379 = vmatpush1.msra.mxu0 %v275
      %1380 = vmatprep.subr.mxu0 0.0
      %1381 = vmatpush1.msra.mxu0 %v276
      %1382 = vmatprep.subr.mxu0 0.0
      %1383 = vmatpush1.msra.mxu0 %v277
      %1384 = vmatprep.subr.mxu0 0.0
      %1385 = vmatpush1.msra.mxu0 %v278
      %1386 = vmatprep.subr.mxu0 0.0
      %1387 = vmatpush1.msra.mxu0 %v279
      %1388 = vmatprep.subr.mxu0 0.0
      %1389 = vmatpush1.msra.mxu0 %v280
      %1390 = vmatprep.subr.mxu0 0.0
      %1391 = vmatpush1.msra.mxu0 %v281
      %1392 = vmatprep.subr.mxu0 0.0
      %1393 = vmatpush1.msra.mxu0 0.0
      %1394 = vmatprep.subr.mxu0 0.0
      %1395 = vmatpush1.msra.mxu0 0.0
      %1396 = vmatprep.subr.mxu0 0.0
      %1397 = vmatpush1.msra.mxu0 0.0
      %1398 = vmatprep.subr.mxu0 0.0
      %1399 = vmatpush1.msra.mxu0 0.0
      %1400 = vmatprep.subr.mxu0 0.0
      %1401 = vmatpush1.msra.mxu0 0.0
      %1402 = vmatprep.subr.mxu0 0.0
      %1403 = vmatpush1.msra.mxu0 0.0
      %1404 = vmatprep.subr.mxu0 0.0
      %1405 = vmatpush1.msra.mxu0 0.0
      %1406 = vmatprep.subr.mxu0 0.0
      %1407 = vmatpush1.msra.mxu0 0.0
      %1408 = vmatprep.subr.mxu0 0.0
      %1409 = vmatpush1.msra.mxu0 0.0
      %1410 = vmatprep.subr.mxu0 0.0
      %1411 = vmatpush1.msra.mxu0 0.0
      %1412 = vmatprep.subr.mxu0 0.0
      %1413 = vmatpush1.msra.mxu0 0.0
      %1414 = vmatprep.subr.mxu0 0.0
      %1415 = vmatpush1.msra.mxu0 0.0
      %1416 = vmatprep.subr.mxu0 0.0
      %1417 = vmatpush1.msra.mxu0 0.0
      %1418 = vmatprep.subr.mxu0 0.0
      %1419 = vmatpush1.msra.mxu0 0.0
      %1420 = vmatprep.subr.mxu0 0.0
      %1421 = vmatpush1.msra.mxu0 0.0
      %1422 = vmatprep.subr.mxu0 0.0
      %1423 = vmatpush1.msra.mxu0 0.0
      %1424 = vmatprep.mubr.f32.mxu0 0.0
      %1425 = vmatmul.mubr.f32.gmra.mrb[0].mxu0 %v1286
      %v1426 = vpop.f32.mrb[0].mxu0
      %v1427 = vadd.f32 0.0, %v1426
      %v1428 = vpop.f32.mrb[0].mxu0
      %1429 = vdwg.mxu0
      %v1430 = vmul.f32 %v1427, 0.00048828125
      %v1431 = vmul.f32 %v1359, %v1359
      %v1432 = vsub.f32 %v1430, %v1431
      %v1433 = vmax.f32 %v1432, 0.0
      %v1434 = vadd.f32 %v1433, 1e-05
      %v1435 = vrsqrt.pop %v1434
      %v1437 = vsel %vm676, %v1359, 0
      %1439 = vmatprep.subr.mxu0 0.0
      %1440 = vmatpush1.msra.mxu0 %v282
      %1441 = vmatprep.subr.mxu0 0.0
      %1442 = vmatpush1.msra.mxu0 0.0
      %1443 = vmatprep.subr.mxu0 0.0
      %1444 = vmatpush1.msra.mxu0 0.0
      %1445 = vmatprep.subr.mxu0 0.0
      %1446 = vmatpush1.msra.mxu0 0.0
      %1447 = vmatprep.subr.mxu0 0.0
      %1448 = vmatpush1.msra.mxu0 0.0
      %1449 = vmatprep.subr.mxu0 0.0
      %1450 = vmatpush1.msra.mxu0 0.0
      %1451 = vmatprep.subr.mxu0 0.0
      %1452 = vmatpush1.msra.mxu0 0.0
      %1453 = vmatprep.subr.mxu0 0.0
      %1454 = vmatpush1.msra.mxu0 0.0
      %1455 = vmatprep.subr.mxu0 0.0
      %1456 = vmatpush1.msra.mxu0 0.0
      %1457 = vmatprep.subr.mxu0 0.0
      %1458 = vmatpush1.msra.mxu0 0.0
      %1459 = vmatprep.subr.mxu0 0.0
      %1460 = vmatpush1.msra.mxu0 0.0
      %1461 = vmatprep.subr.mxu0 0.0
      %1462 = vmatpush1.msra.mxu0 0.0
      %1463 = vmatprep.subr.mxu0 0.0
      %1464 = vmatpush1.msra.mxu0 0.0
      %1465 = vmatprep.subr.mxu0 0.0
      %1466 = vmatpush1.msra.mxu0 0.0
      %1467 = vmatprep.subr.mxu0 0.0
      %1468 = vmatpush1.msra.mxu0 0.0
      %1469 = vmatprep.subr.mxu0 0.0
      %1470 = vmatpush1.msra.mxu0 0.0
      %1471 = vmatprep.subr.mxu0 0.0
      %1472 = vmatpush1.msra.mxu0 0.0
      %1473 = vmatprep.subr.mxu0 0.0
      %1474 = vmatpush1.msra.mxu0 0.0
      %1475 = vmatprep.subr.mxu0 0.0
      %1476 = vmatpush1.msra.mxu0 0.0
      %1477 = vmatprep.subr.mxu0 0.0
      %1478 = vmatpush1.msra.mxu0 0.0
      %1479 = vmatprep.subr.mxu0 0.0
      %1480 = vmatpush1.msra.mxu0 0.0
      %1481 = vmatprep.subr.mxu0 0.0
      %1482 = vmatpush1.msra.mxu0 0.0
      %1483 = vmatprep.subr.mxu0 0.0
      %1484 = vmatpush1.msra.mxu0 0.0
      %1485 = vmatprep.subr.mxu0 0.0
      %1486 = vmatpush1.msra.mxu0 0.0
      %1487 = vmatprep.subr.mxu0 0.0
      %1488 = vmatpush1.msra.mxu0 0.0
      %1489 = vmatprep.subr.mxu0 0.0
      %1490 = vmatpush1.msra.mxu0 0.0
      %1491 = vmatprep.subr.mxu0 0.0
      %1492 = vmatpush1.msra.mxu0 0.0
      %1493 = vmatprep.subr.mxu0 0.0
      %1494 = vmatpush1.msra.mxu0 0.0
      %1495 = vmatprep.subr.mxu0 0.0
      %1496 = vmatpush1.msra.mxu0 0.0
      %1497 = vmatprep.subr.mxu0 0.0
      %1498 = vmatpush1.msra.mxu0 0.0
      %1499 = vmatprep.subr.mxu0 0.0
      %1500 = vmatpush1.msra.mxu0 0.0
      %1501 = vmatprep.subr.mxu0 0.0
      %1502 = vmatpush1.msra.mxu0 0.0
      %1503 = vmatprep.mubr.f32.mxu0 0.0
      %1504 = vmatmul.mubr.f32.gmra.mrb[0].mxu0 %v1437
      %v1505 = vpop.f32.mrb[0].mxu0
      %v1506 = vadd.f32 0.0, %v1505
      %v1507 = vpop.f32.mrb[0].mxu0
      %1508 = vdwg.mxu0
      %v1510 = vsel %vm676, %v1435, 0
      %1512 = vmatprep.subr.mxu0 0.0
      %1513 = vmatpush1.msra.mxu0 %v282
      %1514 = vmatprep.subr.mxu0 0.0
      %1515 = vmatpush1.msra.mxu0 0.0
      %1516 = vmatprep.subr.mxu0 0.0
      %1517 = vmatpush1.msra.mxu0 0.0
      %1518 = vmatprep.subr.mxu0 0.0
      %1519 = vmatpush1.msra.mxu0 0.0
      %1520 = vmatprep.subr.mxu0 0.0
      %1521 = vmatpush1.msra.mxu0 0.0
      %1522 = vmatprep.subr.mxu0 0.0
      %1523 = vmatpush1.msra.mxu0 0.0
      %1524 = vmatprep.subr.mxu0 0.0
      %1525 = vmatpush1.msra.mxu0 0.0
      %1526 = vmatprep.subr.mxu0 0.0
      %1527 = vmatpush1.msra.mxu0 0.0
      %1528 = vmatprep.subr.mxu0 0.0
      %1529 = vmatpush1.msra.mxu0 0.0
      %1530 = vmatprep.subr.mxu0 0.0
      %1531 = vmatpush1.msra.mxu0 0.0
      %1532 = vmatprep.subr.mxu0 0.0
      %1533 = vmatpush1.msra.mxu0 0.0
      %1534 = vmatprep.subr.mxu0 0.0
      %1535 = vmatpush1.msra.mxu0 0.0
      %1536 = vmatprep.subr.mxu0 0.0
      %1537 = vmatpush1.msra.mxu0 0.0
      %1538 = vmatprep.subr.mxu0 0.0
      %1539 = vmatpush1.msra.mxu0 0.0
      %1540 = vmatprep.subr.mxu0 0.0
      %1541 = vmatpush1.msra.mxu0 0.0
      %1542 = vmatprep.subr.mxu0 0.0
      %1543 = vmatpush1.msra.mxu0 0.0
      %1544 = vmatprep.subr.mxu0 0.0
      %1545 = vmatpush1.msra.mxu0 0.0
      %1546 = vmatprep.subr.mxu0 0.0
      %1547 = vmatpush1.msra.mxu0 0.0
      %1548 = vmatprep.subr.mxu0 0.0
      %1549 = vmatpush1.msra.mxu0 0.0
      %1550 = vmatprep.subr.mxu0 0.0
      %1551 = vmatpush1.msra.mxu0 0.0
      %1552 = vmatprep.subr.mxu0 0.0
      %1553 = vmatpush1.msra.mxu0 0.0
      %1554 = vmatprep.subr.mxu0 0.0
      %1555 = vmatpush1.msra.mxu0 0.0
      %1556 = vmatprep.subr.mxu0 0.0
      %1557 = vmatpush1.msra.mxu0 0.0
      %1558 = vmatprep.subr.mxu0 0.0
      %1559 = vmatpush1.msra.mxu0 0.0
      %1560 = vmatprep.subr.mxu0 0.0
      %1561 = vmatpush1.msra.mxu0 0.0
      %1562 = vmatprep.subr.mxu0 0.0
      %1563 = vmatpush1.msra.mxu0 0.0
      %1564 = vmatprep.subr.mxu0 0.0
      %1565 = vmatpush1.msra.mxu0 0.0
      %1566 = vmatprep.subr.mxu0 0.0
      %1567 = vmatpush1.msra.mxu0 0.0
      %1568 = vmatprep.subr.mxu0 0.0
      %1569 = vmatpush1.msra.mxu0 0.0
      %1570 = vmatprep.subr.mxu0 0.0
      %1571 = vmatpush1.msra.mxu0 0.0
      %1572 = vmatprep.subr.mxu0 0.0
      %1573 = vmatpush1.msra.mxu0 0.0
      %1574 = vmatprep.subr.mxu0 0.0
      %1575 = vmatpush1.msra.mxu0 0.0
      %1576 = vmatprep.mubr.f32.mxu0 0.0
      %1577 = vmatmul.mubr.f32.gmra.mrb[0].mxu0 %v1510
      %v1578 = vpop.f32.mrb[0].mxu0
      %v1579 = vadd.f32 0.0, %v1578
      %v1580 = vpop.f32.mrb[0].mxu0
      %1581 = vdwg.mxu0
      %v1582 = vlaneseq
      %v1583 = vshrl.u32 %v1582, 7
      %v1584 = vsub.s32 0, %v1583
      %v1585 = vrot.slane %v1506, %v1584
      %v1586 = vsub.f32 %v1087, %v1585
      %v1587 = vsub.f32 %v1090, %v1585
      %v1588 = vsub.f32 %v1095, %v1585
      %v1589 = vsub.f32 %v1098, %v1585
      %v1590 = vlaneseq
      %v1591 = vshrl.u32 %v1590, 7
      %v1592 = vsub.s32 0, %v1591
      %v1593 = vrot.slane %v1579, %v1592
      %v1594 = vmul.f32 %v1586, %v1593
      %v1595 = vmul.f32 %v1587, %v1593
      %v1596 = vmul.f32 %v1588, %v1593
      %v1597 = vmul.f32 %v1589, %v1593
      %v1598 = vand.u32 2147483647, %v1594
      %v1599 = vand.u32 2147483647, %v1595
      %v1600 = vand.u32 2147483647, %v1596
      %v1601 = vand.u32 2147483647, %v1597
      %v1602 = vmul.f32 %v1598, 0.70710677
      %v1603 = vmul.f32 %v1599, 0.70710677
      %v1604 = vmul.f32 %v1600, 0.70710677
      %v1605 = vmul.f32 %v1601, 0.70710677
      %v1606 = vmul.f32 %v1602, 0.3275911
      %v1607 = vmul.f32 %v1603, 0.3275911
      %v1608 = vmul.f32 %v1604, 0.3275911
      %v1609 = vmul.f32 %v1605, 0.3275911
      %v1610 = vadd.f32 %v1606, 1.0
      %v1611 = vadd.f32 %v1607, 1.0
      %v1612 = vadd.f32 %v1608, 1.0
      %v1613 = vadd.f32 %v1609, 1.0
      %v1614 = vrcp.pop %v1610
      %v1615 = vrcp.pop %v1611
      %v1616 = vrcp.pop %v1612
      %v1617 = vrcp.pop %v1613
      %v1618 = vmul.f32 %v1610, %v1614
      %v1619 = vmul.f32 %v1611, %v1615
      %v1620 = vmul.f32 %v1612, %v1616
      %v1621 = vmul.f32 %v1613, %v1617
      %v1622 = vsub.f32 2.0, %v1618
      %v1623 = vsub.f32 2.0, %v1619
      %v1624 = vsub.f32 2.0, %v1620
      %v1625 = vsub.f32 2.0, %v1621
      %v1626 = vmul.f32 %v1614, %v1622
      %v1627 = vmul.f32 %v1615, %v1623
      %v1628 = vmul.f32 %v1616, %v1624
      %v1629 = vmul.f32 %v1617, %v1625
      %v1630 = vmul.f32 %v1626, 1.0614054
      %v1631 = vmul.f32 %v1627, 1.0614054
      %v1632 = vmul.f32 %v1628, 1.0614054
      %v1633 = vmul.f32 %v1629, 1.0614054
      %v1634 = vadd.f32 %v1630, -1.4531521
      %v1635 = vadd.f32 %v1631, -1.4531521
      %v1636 = vadd.f32 %v1632, -1.4531521
      %v1637 = vadd.f32 %v1633, -1.4531521
      %v1638 = vmul.f32 %v1626, %v1634
      %v1639 = vmul.f32 %v1627, %v1635
      %v1640 = vmul.f32 %v1628, %v1636
      %v1641 = vmul.f32 %v1629, %v1637
      %v1642 = vadd.f32 %v1638, 1.4214138
      %v1643 = vadd.f32 %v1639, 1.4214138
      %v1644 = vadd.f32 %v1640, 1.4214138
      %v1645 = vadd.f32 %v1641, 1.4214138
      %v1646 = vmul.f32 %v1626, %v1642
      %v1647 = vmul.f32 %v1627, %v1643
      %v1648 = vmul.f32 %v1628, %v1644
      %v1649 = vmul.f32 %v1629, %v1645
      %v1650 = vadd.f32 %v1646, -0.28449672
      %v1651 = vadd.f32 %v1647, -0.28449672
      %v1652 = vadd.f32 %v1648, -0.28449672
      %v1653 = vadd.f32 %v1649, -0.28449672
      %v1654 = vmul.f32 %v1626, %v1650
      %v1655 = vmul.f32 %v1627, %v1651
      %v1656 = vmul.f32 %v1628, %v1652
      %v1657 = vmul.f32 %v1629, %v1653
      %v1658 = vadd.f32 %v1654, 0.2548296
      %v1659 = vadd.f32 %v1655, 0.2548296
      %v1660 = vadd.f32 %v1656, 0.2548296
      %v1661 = vadd.f32 %v1657, 0.2548296
      %v1662 = vmul.f32 %v1626, %v1658
      %v1663 = vmul.f32 %v1627, %v1659
      %v1664 = vmul.f32 %v1628, %v1660
      %v1665 = vmul.f32 %v1629, %v1661
      %v1666 = vsub.f32 0.0, %v1602
      %v1667 = vsub.f32 0.0, %v1603
      %v1668 = vsub.f32 0.0, %v1604
      %v1669 = vsub.f32 0.0, %v1605
      %v1670 = vmul.f32 %v1666, %v1602
      %v1671 = vmul.f32 %v1667, %v1603
      %v1672 = vmul.f32 %v1668, %v1604
      %v1673 = vmul.f32 %v1669, %v1605
      %v1674 = vmul.f32 %v1670, 1.442695
      %v1675 = vpow.pop %v1674
      %v1676 = vmul.f32 %v1671, 1.442695
      %v1677 = vpow.pop %v1676
      %v1678 = vmul.f32 %v1672, 1.442695
      %v1679 = vpow.pop %v1678
      %v1680 = vmul.f32 %v1673, 1.442695
      %v1681 = vpow.pop %v1680
      %v1682 = vmul.f32 %v1662, %v1675
      %v1683 = vmul.f32 %v1663, %v1677
      %v1684 = vmul.f32 %v1664, %v1679
      %v1685 = vmul.f32 %v1665, %v1681
      %v1686 = vsub.f32 1.0, %v1682
      %v1687 = vsub.f32 1.0, %v1683
      %v1688 = vsub.f32 1.0, %v1684
      %v1689 = vsub.f32 1.0, %v1685
      %vm1690 = vcmp.lt.f32.partialorder %v1594, 0.0
      %vm1691 = vcmp.lt.f32.partialorder %v1595, 0.0
      %vm1692 = vcmp.lt.f32.partialorder %v1596, 0.0
      %vm1693 = vcmp.lt.f32.partialorder %v1597, 0.0
      %v1694 = vsub.f32 0.0, %v1686
      %v1695 = vsub.f32 0.0, %v1687
      %v1696 = vsub.f32 0.0, %v1688
      %v1697 = vsub.f32 0.0, %v1689
      %v1698 = vsel %vm1690, %v1694, %v1686
      %v1699 = vsel %vm1691, %v1695, %v1687
      %v1700 = vsel %vm1692, %v1696, %v1688
      %v1701 = vsel %vm1693, %v1697, %v1689
      %v1702 = vmul.f32 %v1594, 0.5
      %v1703 = vmul.f32 %v1595, 0.5
      %v1704 = vmul.f32 %v1596, 0.5
      %v1705 = vmul.f32 %v1597, 0.5
      %v1706 = vadd.f32 %v1698, 1.0
      %v1707 = vadd.f32 %v1699, 1.0
      %v1708 = vadd.f32 %v1700, 1.0
      %v1709 = vadd.f32 %v1701, 1.0
      %v1710 = vmul.f32 %v1702, %v1706
      %v1711 = vmul.f32 %v1703, %v1707
      %v1712 = vmul.f32 %v1704, %v1708
      %v1713 = vmul.f32 %v1705, %v1709
      %v1714 = vadd.f32 %v1710, %v951
      %v1715 = vadd.f32 %v1711, %v952
      %v1716 = vadd.f32 %v1712, %v953
      %v1717 = vadd.f32 %v1713, %v954
      %1718 = vst [vmem:[%s257] sm:$0xff] %v1714
      %1719 = vst [vmem:[%s257 + $0x8] sm:$0xff] %v1715
      %1720 = vst [vmem:[%s257 + $0x10] sm:$0xff] %v1716
      %1721 = vst [vmem:[%s257 + $0x18] sm:$0xff] %v1717
      %v1722 = vsub.f32 %v1137, %v1506
      %v1723 = vmul.f32 %v1722, %v1579
      %v1724 = vand.u32 2147483647, %v1723
      %v1725 = vmul.f32 %v1724, 0.70710677
      %v1726 = vmul.f32 %v1725, 0.3275911
      %v1727 = vadd.f32 %v1726, 1.0
      %v1728 = vrcp.pop %v1727
      %v1729 = vmul.f32 %v1727, %v1728
      %v1730 = vsub.f32 2.0, %v1729
      %v1731 = vmul.f32 %v1728, %v1730
      %v1732 = vmul.f32 %v1731, 1.0614054
      %v1733 = vadd.f32 %v1732, -1.4531521
      %v1734 = vmul.f32 %v1731, %v1733
      %v1735 = vadd.f32 %v1734, 1.4214138
      %v1736 = vmul.f32 %v1731, %v1735
      %v1737 = vadd.f32 %v1736, -0.28449672
      %v1738 = vmul.f32 %v1731, %v1737
      %v1739 = vadd.f32 %v1738, 0.2548296
      %v1740 = vmul.f32 %v1731, %v1739
      %v1741 = vsub.f32 0.0, %v1725
      %v1742 = vmul.f32 %v1741, %v1725
      %v1743 = vmul.f32 %v1742, 1.442695
      %v1744 = vpow.pop %v1743
      %v1745 = vmul.f32 %v1740, %v1744
      %v1746 = vsub.f32 1.0, %v1745
      %vm1747 = vcmp.lt.f32.partialorder %v1723, 0.0
      %v1748 = vsub.f32 0.0, %v1746
      %v1749 = vsel %vm1747, %v1748, %v1746
      %v1750 = vmul.f32 %v1723, 0.5
      %v1751 = vadd.f32 %v1749, 1.0
      %v1752 = vmul.f32 %v1750, %v1751
      %v1753 = vadd.f32 %v1752, %v985
      %1754 = vst [vmem:[%s260] sm:$0x1] %v1753
      %p1755 = scmp.lt.s32.totalorder %s18, 1
      %s1756 = scalar_select %p1755, %s18, 1
      %s1757 = smul.addr %s1756, 4
      %s1758 = smul.addr %s1757, 8
      %s1759 = scalar_lea.vmem %s5, %s1758
      %p1760 = scmp.lt.s32.totalorder %s18, 1
      %s1761 = scalar_select %p1760, %s18, 1
      %s1762 = scalar_lea.vmem %s6, %s1761
      // Predicated region
      $region41: #{conv3d_up_forward.1} parent=39 // pred_check
        %p1763 = pneg %p146
      $region42: #{conv3d_up_forward.1} parent=39 // pred_check_branch
        %1765 = sbr.rel (%p1763) target = $region44
      $region43: #{conv3d_up_forward.1} parent=39 // pred_region
        _
      $region44: #{conv3d_up_forward.1} parent=39 // pred_fallthru
        _
      // Predicated region
      $region45: #{conv3d_up_forward.1} parent=39 // pred_check
        %p1766 = pneg %p172
      $region46: #{conv3d_up_forward.1} parent=39 // pred_check_branch
        %1768 = sbr.rel (%p1766) target = $region48
      $region47: #{conv3d_up_forward.1} parent=39 // pred_region
        _
      $region48: #{conv3d_up_forward.1} parent=39 // pred_fallthru
        _
    $region40: #{conv3d_up_forward.1} parent=5 // pred_fallthru
      _
    %p1769 = scmp.le.s32.totalorder 2, %s13
    // Predicated region
    $region49: #{conv3d_up_forward.1} parent=5 // pred_check
      %p1770 = pneg %p1769
    $region50: #{conv3d_up_forward.1} parent=5 // pred_check_branch
      %1772 = sbr.rel (%p1770) target = $region52
    $region51: #{conv3d_up_forward.1} parent=5 // pred_region
      %s1773 = ssub.s32 %s13, 2
      // Predicated region
      $region53: #{conv3d_up_forward.1} parent=51 // pred_check
        %p1774 = pneg %p152
      $region54: #{conv3d_up_forward.1} parent=51 // pred_check_branch
        %1776 = sbr.rel (%p1774) target = $region56
      $region55: #{conv3d_up_forward.1} parent=51 // pred_region
        %p1777 = scmp.lt.s32.totalorder %s19, 1
        %s1778 = scalar_select %p1777, %s19, 1
        %s1779 = smul.addr %s1778, 4
        %s1780 = smul.addr %s1779, 8
        %s1781 = scalar_lea.vmem %s5, %s1780
      $region56: #{conv3d_up_forward.1} parent=51 // pred_fallthru
        _
      // Predicated region
      $region57: #{conv3d_up_forward.1} parent=51 // pred_check
        %p1782 = pneg %p178
      $region58: #{conv3d_up_forward.1} parent=51 // pred_check_branch
        %1784 = sbr.rel (%p1782) target = $region60
      $region59: #{conv3d_up_forward.1} parent=51 // pred_region
        %p1785 = scmp.lt.s32.totalorder %s19, 1
        %s1786 = scalar_select %p1785, %s19, 1
        %s1787 = scalar_lea.vmem %s6, %s1786
      $region60: #{conv3d_up_forward.1} parent=51 // pred_fallthru
        _
    $region52: #{conv3d_up_forward.1} parent=5 // pred_fallthru
      _
  $region6: #{conv3d_up_forward.1} parent=0 // loop_footer
    %s17 = sadd.s32 1, %s13
  $region7: #{conv3d_up_forward.1} parent=0 // loop_footer_branch
    %12 = sbr.rel target = $region3
  $region8: #{conv3d_up_forward.1} parent=0 // loop_exit
    _

</llo_original>
